<compile_context>
chip_gen: v7x
topology: tpu7x:2x2x1
jax: 0.10.0
libtpu: 0.0.40
codegen_flags: <defaults>
</compile_context>

<pallas_src>
import functools

import jax
import jax.numpy as jnp
from jax.experimental import pallas as pl
from jax.experimental.pallas import tpu as pltpu

K = 7   # conv kernel size
P = 3   # autopad(7) == 3


def _reduce_kernel(x_ref, o_ref, sum_ref, max_ref, *, inv_c):
    """Channel sum/max over a (TN, TC, HW) slab; finalize mean/max maps.

    x_ref  : VMEM (TN, TC, HW) input slab (any float dtype)
    o_ref  : VMEM (TN, 2, HW)  f32 output: [:,0]=mean, [:,1]=max
    sum_ref: VMEM (TN, HW) f32 running-sum accumulator (persists across k)
    max_ref: VMEM (TN, HW) f32 running-max accumulator (persists across k)
    """
    k = pl.program_id(1)

    @pl.when(k == 0)
    def _init():
        sum_ref[...] = jnp.zeros_like(sum_ref)
        max_ref[...] = jnp.full_like(max_ref, -jnp.inf)

    xb = x_ref[...].astype(jnp.float32)                 # (TN, TC, HW)
    sum_ref[...] += jnp.sum(xb, axis=1)
    max_ref[...] = jnp.maximum(max_ref[...], jnp.max(xb, axis=1))

    @pl.when(k == pl.num_programs(1) - 1)
    def _finalize():
        o_ref[:, 0, :] = sum_ref[...] * inv_c
        o_ref[:, 1, :] = max_ref[...]


def _conv_kernel(w_ref, b_ref, m_ref, o_ref, pad_ref, *, H, W):
    """7x7 'same' conv (BN folded into w/b) + SiLU + sigmoid.

    w_ref  : SMEM (2*K*K,) f32 BN-folded conv weights, flat (c, dy, dx)
    b_ref  : SMEM (1,)     f32 BN-folded bias
    m_ref  : VMEM (TN, 2, H, W) mean/max maps
    o_ref  : VMEM (TN, 1, H, W) output
    pad_ref: VMEM (TN, 2, H+2P, W+2P) zero-padded maps (scratch)
    """
    tn = m_ref.shape[0]

    # Build the zero-padded 2-channel maps once per batch tile (tiny tensor).
    pad_ref[...] = jnp.zeros_like(pad_ref)
    pad_ref[:, :, P:P + H, P:P + W] = m_ref[...].astype(jnp.float32)

    acc = jnp.full((tn, H, W), b_ref[0], dtype=jnp.float32)
    for c in range(2):
        for dy in range(K):
            # Load each (c, dy) row strip once; the 7 dx taps reuse it
            # in-register (lane shifts on the XLU, FMAs on the VPU).
            strip = pad_ref[:, c, dy:dy + H, :]         # (TN, H, W+2P)
            for dx in range(K):
                w = w_ref[c * K * K + dy * K + dx]
                acc = acc + w * strip[:, :, dx:dx + W]

    silu = acc * jax.nn.sigmoid(acc)                    # Conv block's SiLU
    o_ref[:, 0, :, :] = jax.nn.sigmoid(silu).astype(o_ref.dtype)


def _pick_tile(dim, cap, align=1):
    """Largest divisor tile of `dim` that is <= cap and either == dim or a
    multiple of `align` (keeps BlockSpec (8,128) rules satisfied)."""
    if dim <= cap:
        return dim
    for t in range(cap, 0, -1):
        if dim % t == 0 and t % align == 0:
            return t
    return dim   # fallback: no tiling (block == full dim is always legal)


def spatial_attention_module(x, conv_w, bn_gamma, bn_beta, bn_mean, bn_var,
                             eps=1e-5):
    """x: (N, C, H, W) float; conv_w: (1, 2, 7, 7). Returns (N, 1, H, W) f32."""
    N, C, H, W = x.shape
    HW = H * W

    # Fold eval-mode BatchNorm into the conv weight / bias (conv has no bias).
    scale = (bn_gamma / jnp.sqrt(bn_var + eps)).astype(jnp.float32)       # (1,)
    w_fold = conv_w.astype(jnp.float32) * scale[:, None, None, None]      # (1,2,7,7)
    b_fold = (bn_beta - bn_mean * scale).astype(jnp.float32)              # (1,)
    w_flat = w_fold.reshape(-1)                                           # (98,)

    # ---------------- kernel 1: lane-dense channel mean/max ----------------
    x_flat = x.reshape(N, C, HW)          # metadata-only reshape (row-major)
    TN = _pick_tile(N, 8)
    budget = 4 * 1024 * 1024              # per-buffer x-block budget (double-buffered)
    tc_cap = max(1, budget // (TN * HW * jnp.dtype(x.dtype).itemsize))
    TC = _pick_tile(C, tc_cap, align=8)   # TC == C or TC % 8 == 0

    maps = pl.pallas_call(
        functools.partial(_reduce_kernel, inv_c=1.0 / C),
        out_shape=jax.ShapeDtypeStruct((N, 2, HW), jnp.float32),
        grid=(N // TN, C // TC),
        in_specs=[pl.BlockSpec((TN, TC, HW), lambda n, k: (n, k, 0))],
        out_specs=pl.BlockSpec((TN, 2, HW), lambda n, k: (n, 0, 0)),
        scratch_shapes=[pltpu.VMEM((TN, HW), jnp.float32),
                        pltpu.VMEM((TN, HW), jnp.float32)],
        compiler_params=pltpu.CompilerParams(
            dimension_semantics=("parallel", "arbitrary"),
            vmem_limit_bytes=32 * 1024 * 1024),
    )(x_flat)

    maps = maps.reshape(N, 2, H, W)       # metadata-only reshape

    # ------- kernel 2: 7x7 conv + folded BN + SiLU + sigmoid (tiny map) -----
    out = pl.pallas_call(
        functools.partial(_conv_kernel, H=H, W=W),
        out_shape=jax.ShapeDtypeStruct((N, 1, H, W), jnp.float32),
        grid=(N // TN,),
        in_specs=[
            pl.BlockSpec(memory_space=pltpu.MemorySpace.SMEM),   # folded weights
            pl.BlockSpec(memory_space=pltpu.MemorySpace.SMEM),   # folded bias
            pl.BlockSpec((TN, 2, H, W), lambda n: (n, 0, 0, 0)),
        ],
        out_specs=pl.BlockSpec((TN, 1, H, W), lambda n: (n, 0, 0, 0)),
        scratch_shapes=[pltpu.VMEM((TN, 2, H + 2 * P, W + 2 * P), jnp.float32)],
        compiler_params=pltpu.CompilerParams(
            dimension_semantics=("parallel",),
            vmem_limit_bytes=32 * 1024 * 1024),
    )(w_flat, b_fold, maps)
    return out


def _reference(x, conv_w, gamma, beta, mean, var, eps=1e-5):
    """Pure-JAX reference mirroring the PyTorch forward (eval-mode BN)."""
    avg = jnp.mean(x, axis=1, keepdims=True)
    mx = jnp.max(x, axis=1, keepdims=True)
    cat = jnp.concatenate([avg, mx], axis=1)                 # (N, 2, H, W)
    conv = jax.lax.conv_general_dilated(
        cat, conv_w, window_strides=(1, 1), padding=[(P, P), (P, P)],
        dimension_numbers=("NCHW", "OIHW", "NCHW"))
    bn = ((conv - mean[None, :, None, None])
          / jnp.sqrt(var[None, :, None, None] + eps)
          * gamma[None, :, None, None] + beta[None, :, None, None])
    silu = bn * jax.nn.sigmoid(bn)
    return jax.nn.sigmoid(silu)


if __name__ == "__main__":
    key = jax.random.PRNGKey(0)
    k_x, k_w = jax.random.split(key)

    # Small deterministic shapes: N=2, C=4, H=W=16.
    x = jax.random.normal(k_x, (2, 4, 16, 16), dtype=jnp.float32)
    conv_w = jax.random.normal(k_w, (1, 2, K, K), dtype=jnp.float32) * 0.1

    # BatchNorm2d(1) parameters at default init, eval mode.
    bn_gamma = jnp.ones((1,), jnp.float32)
    bn_beta = jnp.zeros((1,), jnp.float32)
    bn_mean = jnp.zeros((1,), jnp.float32)
    bn_var = jnp.ones((1,), jnp.float32)

    fn = jax.jit(spatial_attention_module)
    out = jax.block_until_ready(
        fn(x, conv_w, bn_gamma, bn_beta, bn_mean, bn_var))

    ref = _reference(x, conv_w, bn_gamma, bn_beta, bn_mean, bn_var)
    assert out.shape == (2, 1, 16, 16)
    assert jnp.allclose(out, ref, atol=1e-5, rtol=1e-5), (
        float(jnp.max(jnp.abs(out - ref))))

    print("KERNEL_OK")
</pallas_src>

<mosaic_0001>
module attributes {stable_mosaic.version = 11 : i64} {
  func.func @_reduce_kernel(%arg0: i32, %arg1: i32, %arg2: memref<2x4x256xf32, #tpu.memory_space<vmem>>, %arg3: memref<2x2x256xf32, #tpu.memory_space<vmem>>, %arg4: memref<2x256xf32, #tpu.memory_space<vmem>>, %arg5: memref<2x256xf32, #tpu.memory_space<vmem>>) attributes {dimension_semantics = [#tpu.dimension_semantics<parallel>, #tpu.dimension_semantics<arbitrary>], iteration_bounds = array<i64: 1, 1>, scalar_prefetch = 0 : i64, scratch_operands = 2 : i64, tpu.core_type = #tpu.core_type<tc>, window_params = [{transform_indices = @transform_0, window_bounds = array<i64: 2, 4, 256>}, {transform_indices = @transform_1, window_bounds = array<i64: 2, 2, 256>}]} {
    %c0_i32 = arith.constant 0 : i32
    %0 = arith.cmpi eq, %arg1, %c0_i32 : i32
    %1 = arith.extui %0 : i1 to i32
    %c0_i32_0 = arith.constant 0 : i32
    %2 = arith.cmpi ne, %1, %c0_i32_0 : i32
    scf.if %2 {
      %cst_14 = arith.constant 0.000000e+00 : f32
      %15 = vector.broadcast %cst_14 : f32 to vector<2x256xf32>
      %c0_15 = arith.constant 0 : index
      %c0_16 = arith.constant 0 : index
      %16 = vector.load %arg4[%c0_15, %c0_16] : memref<2x256xf32, #tpu.memory_space<vmem>>, vector<2x256xf32>
      tpu.vector_store %arg4[%c0_15, %c0_16], %15 {strides = array<i32>} : memref<2x256xf32, #tpu.memory_space<vmem>>, vector<2x256xf32>,
      %cst_17 = arith.constant 0xFF800000 : f32
      %17 = vector.broadcast %cst_17 : f32 to vector<2x256xf32>
      %c0_18 = arith.constant 0 : index
      %c0_19 = arith.constant 0 : index
      %18 = vector.load %arg5[%c0_18, %c0_19] : memref<2x256xf32, #tpu.memory_space<vmem>>, vector<2x256xf32>
      tpu.vector_store %arg5[%c0_18, %c0_19], %17 {strides = array<i32>} : memref<2x256xf32, #tpu.memory_space<vmem>>, vector<2x256xf32>,
    } else {
    }
    %c0 = arith.constant 0 : index
    %c0_1 = arith.constant 0 : index
    %c0_2 = arith.constant 0 : index
    %3 = vector.load %arg2[%c0, %c0_1, %c0_2] : memref<2x4x256xf32, #tpu.memory_space<vmem>>, vector<2x4x256xf32>
    %c0_3 = arith.constant 0 : index
    %c0_4 = arith.constant 0 : index
    %4 = vector.load %arg4[%c0_3, %c0_4] : memref<2x256xf32, #tpu.memory_space<vmem>>, vector<2x256xf32>
    %cst = arith.constant dense<0.000000e+00> : vector<2x256xf32>
    %5 = vector.multi_reduction <add>, %3, %cst [1] : vector<2x4x256xf32> to vector<2x256xf32>
    %6 = arith.addf %4, %5 : vector<2x256xf32>
    %c0_5 = arith.constant 0 : index
    %c0_6 = arith.constant 0 : index
    %7 = vector.load %arg4[%c0_5, %c0_6] : memref<2x256xf32, #tpu.memory_space<vmem>>, vector<2x256xf32>
    tpu.vector_store %arg4[%c0_5, %c0_6], %6 {strides = array<i32>} : memref<2x256xf32, #tpu.memory_space<vmem>>, vector<2x256xf32>,
    %c0_7 = arith.constant 0 : index
    %c0_8 = arith.constant 0 : index
    %8 = vector.load %arg5[%c0_7, %c0_8] : memref<2x256xf32, #tpu.memory_space<vmem>>, vector<2x256xf32>
    %cst_9 = arith.constant dense<0xFF800000> : vector<2x256xf32>
    %9 = vector.multi_reduction <maximumf>, %3, %cst_9 [1] : vector<2x4x256xf32> to vector<2x256xf32>
    %10 = arith.maximumf %8, %9 : vector<2x256xf32>
    %c0_10 = arith.constant 0 : index
    %c0_11 = arith.constant 0 : index
    %11 = vector.load %arg5[%c0_10, %c0_11] : memref<2x256xf32, #tpu.memory_space<vmem>>, vector<2x256xf32>
    tpu.vector_store %arg5[%c0_10, %c0_11], %10 {strides = array<i32>} : memref<2x256xf32, #tpu.memory_space<vmem>>, vector<2x256xf32>,
    %c0_i32_12 = arith.constant 0 : i32
    %12 = arith.cmpi eq, %arg1, %c0_i32_12 : i32
    %13 = arith.extui %12 : i1 to i32
    %c0_i32_13 = arith.constant 0 : i32
    %14 = arith.cmpi ne, %13, %c0_i32_13 : i32
    scf.if %14 {
      %c0_14 = arith.constant 0 : index
      %c0_15 = arith.constant 0 : index
      %15 = vector.load %arg4[%c0_14, %c0_15] : memref<2x256xf32, #tpu.memory_space<vmem>>, vector<2x256xf32>
      %cst_16 = arith.constant 2.500000e-01 : f32
      %16 = vector.broadcast %cst_16 : f32 to vector<2x256xf32>
      %17 = arith.mulf %15, %16 : vector<2x256xf32>
      %c0_17 = arith.constant 0 : index
      %c0_18 = arith.constant 0 : index
      %c0_19 = arith.constant 0 : index
      %18 = vector.load %arg3[%c0_17, %c0_18, %c0_19] : memref<2x2x256xf32, #tpu.memory_space<vmem>>, vector<2x1x256xf32>
      %19 = vector.shape_cast %18 : vector<2x1x256xf32> to vector<2x256xf32>
      %20 = vector.shape_cast %17 : vector<2x256xf32> to vector<2x1x256xf32>
      tpu.vector_store %arg3[%c0_17, %c0_18, %c0_19], %20 {strides = array<i32>} : memref<2x2x256xf32, #tpu.memory_space<vmem>>, vector<2x1x256xf32>,
      %c0_20 = arith.constant 0 : index
      %c0_21 = arith.constant 0 : index
      %21 = vector.load %arg5[%c0_20, %c0_21] : memref<2x256xf32, #tpu.memory_space<vmem>>, vector<2x256xf32>
      %c0_22 = arith.constant 0 : index
      %c1 = arith.constant 1 : index
      %c0_23 = arith.constant 0 : index
      %22 = vector.load %arg3[%c0_22, %c1, %c0_23] : memref<2x2x256xf32, #tpu.memory_space<vmem>>, vector<2x1x256xf32>
      %23 = vector.shape_cast %22 : vector<2x1x256xf32> to vector<2x256xf32>
      %24 = vector.shape_cast %21 : vector<2x256xf32> to vector<2x1x256xf32>
      tpu.vector_store %arg3[%c0_22, %c1, %c0_23], %24 {strides = array<i32>} : memref<2x2x256xf32, #tpu.memory_space<vmem>>, vector<2x1x256xf32>,
    } else {
    }
    return
  }
  func.func @transform_0(%arg0: i32, %arg1: i32) -> (i32, i32, i32) {
    %c0_i32 = arith.constant 0 : i32
    %c0_i32_0 = arith.constant 0 : i32
    return %arg0, %arg1, %c0_i32 : i32, i32, i32
  }
  func.func @transform_1(%arg0: i32, %arg1: i32) -> (i32, i32, i32) {
    %c0_i32 = arith.constant 0 : i32
    %c0_i32_0 = arith.constant 0 : i32
    %c0_i32_1 = arith.constant 0 : i32
    return %arg0, %c0_i32, %c0_i32_0 : i32, i32, i32
  }
}

module attributes {stable_mosaic.version = 11 : i64} {
  func.func @_conv_kernel(%arg0: i32, %arg1: memref<98xf32, #tpu.memory_space<smem>>, %arg2: memref<1xf32, #tpu.memory_space<smem>>, %arg3: memref<2x2x16x16xf32, #tpu.memory_space<vmem>>, %arg4: memref<2x1x16x16xf32, #tpu.memory_space<vmem>>, %arg5: memref<2x2x22x22xf32, #tpu.memory_space<vmem>>) attributes {dimension_semantics = [#tpu.dimension_semantics<parallel>], iteration_bounds = array<i64: 1>, scalar_prefetch = 0 : i64, scratch_operands = 1 : i64, tpu.core_type = #tpu.core_type<tc>, window_params = [{transform_indices = @transform_0, window_bounds = array<i64: 98>}, {transform_indices = @transform_1, window_bounds = array<i64: 1>}, {transform_indices = @transform_2, window_bounds = array<i64: 2, 2, 16, 16>}, {transform_indices = @transform_3, window_bounds = array<i64: 2, 1, 16, 16>}]} {
    %cst = arith.constant 0.000000e+00 : f32
    %0 = vector.broadcast %cst : f32 to vector<2x2x22x22xf32>
    %c0 = arith.constant 0 : index
    %c0_0 = arith.constant 0 : index
    %c0_1 = arith.constant 0 : index
    %c0_2 = arith.constant 0 : index
    %1 = vector.load %arg5[%c0, %c0_0, %c0_1, %c0_2] : memref<2x2x22x22xf32, #tpu.memory_space<vmem>>, vector<2x2x22x22xf32>
    tpu.vector_store %arg5[%c0, %c0_0, %c0_1, %c0_2], %0 {strides = array<i32>} : memref<2x2x22x22xf32, #tpu.memory_space<vmem>>, vector<2x2x22x22xf32>,
    %c0_3 = arith.constant 0 : index
    %c0_4 = arith.constant 0 : index
    %c0_5 = arith.constant 0 : index
    %c0_6 = arith.constant 0 : index
    %2 = vector.load %arg3[%c0_3, %c0_4, %c0_5, %c0_6] : memref<2x2x16x16xf32, #tpu.memory_space<vmem>>, vector<2x2x16x16xf32>
    %c0_7 = arith.constant 0 : index
    %c0_8 = arith.constant 0 : index
    %c3 = arith.constant 3 : index
    %c3_9 = arith.constant 3 : index
    %3 = vector.load %arg5[%c0_7, %c0_8, %c3, %c3_9] : memref<2x2x22x22xf32, #tpu.memory_space<vmem>>, vector<2x2x16x16xf32>
    tpu.vector_store %arg5[%c0_7, %c0_8, %c3, %c3_9], %2 {strides = array<i32>} : memref<2x2x22x22xf32, #tpu.memory_space<vmem>>, vector<2x2x16x16xf32>,
    %c0_10 = arith.constant 0 : index
    %4 = memref.load %arg2[%c0_10] : memref<1xf32, #tpu.memory_space<smem>>
    %5 = vector.broadcast %4 : f32 to vector<2x16x16xf32>
    %c0_11 = arith.constant 0 : index
    %c0_12 = arith.constant 0 : index
    %c0_13 = arith.constant 0 : index
    %c0_14 = arith.constant 0 : index
    %6 = vector.load %arg5[%c0_11, %c0_12, %c0_13, %c0_14] : memref<2x2x22x22xf32, #tpu.memory_space<vmem>>, vector<2x1x16x22xf32>
    %7 = vector.shape_cast %6 : vector<2x1x16x22xf32> to vector<2x16x22xf32>
    %c0_15 = arith.constant 0 : index
    %8 = memref.load %arg1[%c0_15] : memref<98xf32, #tpu.memory_space<smem>>
    %9 = vector.extract_strided_slice %7 {offsets = [0, 0, 0], sizes = [2, 16, 16], strides = [1, 1, 1]} : vector<2x16x22xf32> to vector<2x16x16xf32>
    %10 = vector.broadcast %8 : f32 to vector<2x16x16xf32>
    %11 = arith.mulf %10, %9 : vector<2x16x16xf32>
    %12 = arith.addf %5, %11 : vector<2x16x16xf32>
    %c1 = arith.constant 1 : index
    %13 = memref.load %arg1[%c1] : memref<98xf32, #tpu.memory_space<smem>>
    %14 = vector.extract_strided_slice %7 {offsets = [0, 0, 1], sizes = [2, 16, 16], strides = [1, 1, 1]} : vector<2x16x22xf32> to vector<2x16x16xf32>
    %15 = vector.broadcast %13 : f32 to vector<2x16x16xf32>
    %16 = arith.mulf %15, %14 : vector<2x16x16xf32>
    %17 = arith.addf %12, %16 : vector<2x16x16xf32>
    %c2 = arith.constant 2 : index
    %18 = memref.load %arg1[%c2] : memref<98xf32, #tpu.memory_space<smem>>
    %19 = vector.extract_strided_slice %7 {offsets = [0, 0, 2], sizes = [2, 16, 16], strides = [1, 1, 1]} : vector<2x16x22xf32> to vector<2x16x16xf32>
    %20 = vector.broadcast %18 : f32 to vector<2x16x16xf32>
    %21 = arith.mulf %20, %19 : vector<2x16x16xf32>
    %22 = arith.addf %17, %21 : vector<2x16x16xf32>
    %c3_16 = arith.constant 3 : index
    %23 = memref.load %arg1[%c3_16] : memref<98xf32, #tpu.memory_space<smem>>
    %24 = vector.extract_strided_slice %7 {offsets = [0, 0, 3], sizes = [2, 16, 16], strides = [1, 1, 1]} : vector<2x16x22xf32> to vector<2x16x16xf32>
    %25 = vector.broadcast %23 : f32 to vector<2x16x16xf32>
    %26 = arith.mulf %25, %24 : vector<2x16x16xf32>
    %27 = arith.addf %22, %26 : vector<2x16x16xf32>
    %c4 = arith.constant 4 : index
    %28 = memref.load %arg1[%c4] : memref<98xf32, #tpu.memory_space<smem>>
    %29 = vector.extract_strided_slice %7 {offsets = [0, 0, 4], sizes = [2, 16, 16], strides = [1, 1, 1]} : vector<2x16x22xf32> to vector<2x16x16xf32>
    %30 = vector.broadcast %28 : f32 to vector<2x16x16xf32>
    %31 = arith.mulf %30, %29 : vector<2x16x16xf32>
    %32 = arith.addf %27, %31 : vector<2x16x16xf32>
    %c5 = arith.constant 5 : index
    %33 = memref.load %arg1[%c5] : memref<98xf32, #tpu.memory_space<smem>>
    %34 = vector.extract_strided_slice %7 {offsets = [0, 0, 5], sizes = [2, 16, 16], strides = [1, 1, 1]} : vector<2x16x22xf32> to vector<2x16x16xf32>
    %35 = vector.broadcast %33 : f32 to vector<2x16x16xf32>
    %36 = arith.mulf %35, %34 : vector<2x16x16xf32>
    %37 = arith.addf %32, %36 : vector<2x16x16xf32>
    %c6 = arith.constant 6 : index
    %38 = memref.load %arg1[%c6] : memref<98xf32, #tpu.memory_space<smem>>
    %39 = vector.extract_strided_slice %7 {offsets = [0, 0, 6], sizes = [2, 16, 16], strides = [1, 1, 1]} : vector<2x16x22xf32> to vector<2x16x16xf32>
    %40 = vector.broadcast %38 : f32 to vector<2x16x16xf32>
    %41 = arith.mulf %40, %39 : vector<2x16x16xf32>
    %42 = arith.addf %37, %41 : vector<2x16x16xf32>
    %c0_17 = arith.constant 0 : index
    %c0_18 = arith.constant 0 : index
    %c1_19 = arith.constant 1 : index
    %c0_20 = arith.constant 0 : index
    %43 = vector.load %arg5[%c0_17, %c0_18, %c1_19, %c0_20] : memref<2x2x22x22xf32, #tpu.memory_space<vmem>>, vector<2x1x16x22xf32>
    %44 = vector.shape_cast %43 : vector<2x1x16x22xf32> to vector<2x16x22xf32>
    %c7 = arith.constant 7 : index
    %45 = memref.load %arg1[%c7] : memref<98xf32, #tpu.memory_space<smem>>
    %46 = vector.extract_strided_slice %44 {offsets = [0, 0, 0], sizes = [2, 16, 16], strides = [1, 1, 1]} : vector<2x16x22xf32> to vector<2x16x16xf32>
    %47 = vector.broadcast %45 : f32 to vector<2x16x16xf32>
    %48 = arith.mulf %47, %46 : vector<2x16x16xf32>
    %49 = arith.addf %42, %48 : vector<2x16x16xf32>
    %c8 = arith.constant 8 : index
    %50 = memref.load %arg1[%c8] : memref<98xf32, #tpu.memory_space<smem>>
    %51 = vector.extract_strided_slice %44 {offsets = [0, 0, 1], sizes = [2, 16, 16], strides = [1, 1, 1]} : vector<2x16x22xf32> to vector<2x16x16xf32>
    %52 = vector.broadcast %50 : f32 to vector<2x16x16xf32>
    %53 = arith.mulf %52, %51 : vector<2x16x16xf32>
    %54 = arith.addf %49, %53 : vector<2x16x16xf32>
    %c9 = arith.constant 9 : index
    %55 = memref.load %arg1[%c9] : memref<98xf32, #tpu.memory_space<smem>>
    %56 = vector.extract_strided_slice %44 {offsets = [0, 0, 2], sizes = [2, 16, 16], strides = [1, 1, 1]} : vector<2x16x22xf32> to vector<2x16x16xf32>
    %57 = vector.broadcast %55 : f32 to vector<2x16x16xf32>
    %58 = arith.mulf %57, %56 : vector<2x16x16xf32>
    %59 = arith.addf %54, %58 : vector<2x16x16xf32>
    %c10 = arith.constant 10 : index
    %60 = memref.load %arg1[%c10] : memref<98xf32, #tpu.memory_space<smem>>
    %61 = vector.extract_strided_slice %44 {offsets = [0, 0, 3], sizes = [2, 16, 16], strides = [1, 1, 1]} : vector<2x16x22xf32> to vector<2x16x16xf32>
    %62 = vector.broadcast %60 : f32 to vector<2x16x16xf32>
    %63 = arith.mulf %62, %61 : vector<2x16x16xf32>
    %64 = arith.addf %59, %63 : vector<2x16x16xf32>
    %c11 = arith.constant 11 : index
    %65 = memref.load %arg1[%c11] : memref<98xf32, #tpu.memory_space<smem>>
    %66 = vector.extract_strided_slice %44 {offsets = [0, 0, 4], sizes = [2, 16, 16], strides = [1, 1, 1]} : vector<2x16x22xf32> to vector<2x16x16xf32>
    %67 = vector.broadcast %65 : f32 to vector<2x16x16xf32>
    %68 = arith.mulf %67, %66 : vector<2x16x16xf32>
    %69 = arith.addf %64, %68 : vector<2x16x16xf32>
    %c12 = arith.constant 12 : index
    %70 = memref.load %arg1[%c12] : memref<98xf32, #tpu.memory_space<smem>>
    %71 = vector.extract_strided_slice %44 {offsets = [0, 0, 5], sizes = [2, 16, 16], strides = [1, 1, 1]} : vector<2x16x22xf32> to vector<2x16x16xf32>
    %72 = vector.broadcast %70 : f32 to vector<2x16x16xf32>
    %73 = arith.mulf %72, %71 : vector<2x16x16xf32>
    %74 = arith.addf %69, %73 : vector<2x16x16xf32>
    %c13 = arith.constant 13 : index
    %75 = memref.load %arg1[%c13] : memref<98xf32, #tpu.memory_space<smem>>
    %76 = vector.extract_strided_slice %44 {offsets = [0, 0, 6], sizes = [2, 16, 16], strides = [1, 1, 1]} : vector<2x16x22xf32> to vector<2x16x16xf32>
    %77 = vector.broadcast %75 : f32 to vector<2x16x16xf32>
    %78 = arith.mulf %77, %76 : vector<2x16x16xf32>
    %79 = arith.addf %74, %78 : vector<2x16x16xf32>
    %c0_21 = arith.constant 0 : index
    %c0_22 = arith.constant 0 : index
    %c2_23 = arith.constant 2 : index
    %c0_24 = arith.constant 0 : index
    %80 = vector.load %arg5[%c0_21, %c0_22, %c2_23, %c0_24] : memref<2x2x22x22xf32, #tpu.memory_space<vmem>>, vector<2x1x16x22xf32>
    %81 = vector.shape_cast %80 : vector<2x1x16x22xf32> to vector<2x16x22xf32>
    %c14 = arith.constant 14 : index
    %82 = memref.load %arg1[%c14] : memref<98xf32, #tpu.memory_space<smem>>
    %83 = vector.extract_strided_slice %81 {offsets = [0, 0, 0], sizes = [2, 16, 16], strides = [1, 1, 1]} : vector<2x16x22xf32> to vector<2x16x16xf32>
    %84 = vector.broadcast %82 : f32 to vector<2x16x16xf32>
    %85 = arith.mulf %84, %83 : vector<2x16x16xf32>
    %86 = arith.addf %79, %85 : vector<2x16x16xf32>
    %c15 = arith.constant 15 : index
    %87 = memref.load %arg1[%c15] : memref<98xf32, #tpu.memory_space<smem>>
    %88 = vector.extract_strided_slice %81 {offsets = [0, 0, 1], sizes = [2, 16, 16], strides = [1, 1, 1]} : vector<2x16x22xf32> to vector<2x16x16xf32>
    %89 = vector.broadcast %87 : f32 to vector<2x16x16xf32>
    %90 = arith.mulf %89, %88 : vector<2x16x16xf32>
    %91 = arith.addf %86, %90 : vector<2x16x16xf32>
    %c16 = arith.constant 16 : index
    %92 = memref.load %arg1[%c16] : memref<98xf32, #tpu.memory_space<smem>>
    %93 = vector.extract_strided_slice %81 {offsets = [0, 0, 2], sizes = [2, 16, 16], strides = [1, 1, 1]} : vector<2x16x22xf32> to vector<2x16x16xf32>
    %94 = vector.broadcast %92 : f32 to vector<2x16x16xf32>
    %95 = arith.mulf %94, %93 : vector<2x16x16xf32>
    %96 = arith.addf %91, %95 : vector<2x16x16xf32>
    %c17 = arith.constant 17 : index
    %97 = memref.load %arg1[%c17] : memref<98xf32, #tpu.memory_space<smem>>
    %98 = vector.extract_strided_slice %81 {offsets = [0, 0, 3], sizes = [2, 16, 16], strides = [1, 1, 1]} : vector<2x16x22xf32> to vector<2x16x16xf32>
    %99 = vector.broadcast %97 : f32 to vector<2x16x16xf32>
    %100 = arith.mulf %99, %98 : vector<2x16x16xf32>
    %101 = arith.addf %96, %100 : vector<2x16x16xf32>
    %c18 = arith.constant 18 : index
    %102 = memref.load %arg1[%c18] : memref<98xf32, #tpu.memory_space<smem>>
    %103 = vector.extract_strided_slice %81 {offsets = [0, 0, 4], sizes = [2, 16, 16], strides = [1, 1, 1]} : vector<2x16x22xf32> to vector<2x16x16xf32>
    %104 = vector.broadcast %102 : f32 to vector<2x16x16xf32>
    %105 = arith.mulf %104, %103 : vector<2x16x16xf32>
    %106 = arith.addf %101, %105 : vector<2x16x16xf32>
    %c19 = arith.constant 19 : index
    %107 = memref.load %arg1[%c19] : memref<98xf32, #tpu.memory_space<smem>>
    %108 = vector.extract_strided_slice %81 {offsets = [0, 0, 5], sizes = [2, 16, 16], strides = [1, 1, 1]} : vector<2x16x22xf32> to vector<2x16x16xf32>
    %109 = vector.broadcast %107 : f32 to vector<2x16x16xf32>
    %110 = arith.mulf %109, %108 : vector<2x16x16xf32>
    %111 = arith.addf %106, %110 : vector<2x16x16xf32>
    %c20 = arith.constant 20 : index
    %112 = memref.load %arg1[%c20] : memref<98xf32, #tpu.memory_space<smem>>
    %113 = vector.extract_strided_slice %81 {offsets = [0, 0, 6], sizes = [2, 16, 16], strides = [1, 1, 1]} : vector<2x16x22xf32> to vector<2x16x16xf32>
    %114 = vector.broadcast %112 : f32 to vector<2x16x16xf32>
    %115 = arith.mulf %114, %113 : vector<2x16x16xf32>
    %116 = arith.addf %111, %115 : vector<2x16x16xf32>
    %c0_25 = arith.constant 0 : index
    %c0_26 = arith.constant 0 : index
    %c3_27 = arith.constant 3 : index
    %c0_28 = arith.constant 0 : index
    %117 = vector.load %arg5[%c0_25, %c0_26, %c3_27, %c0_28] : memref<2x2x22x22xf32, #tpu.memory_space<vmem>>, vector<2x1x16x22xf32>
    %118 = vector.shape_cast %117 : vector<2x1x16x22xf32> to vector<2x16x22xf32>
    %c21 = arith.constant 21 : index
    %119 = memref.load %arg1[%c21] : memref<98xf32, #tpu.memory_space<smem>>
    %120 = vector.extract_strided_slice %118 {offsets = [0, 0, 0], sizes = [2, 16, 16], strides = [1, 1, 1]} : vector<2x16x22xf32> to vector<2x16x16xf32>
    %121 = vector.broadcast %119 : f32 to vector<2x16x16xf32>
    %122 = arith.mulf %121, %120 : vector<2x16x16xf32>
    %123 = arith.addf %116, %122 : vector<2x16x16xf32>
    %c22 = arith.constant 22 : index
    %124 = memref.load %arg1[%c22] : memref<98xf32, #tpu.memory_space<smem>>
    %125 = vector.extract_strided_slice %118 {offsets = [0, 0, 1], sizes = [2, 16, 16], strides = [1, 1, 1]} : vector<2x16x22xf32> to vector<2x16x16xf32>
    %126 = vector.broadcast %124 : f32 to vector<2x16x16xf32>
    %127 = arith.mulf %126, %125 : vector<2x16x16xf32>
    %128 = arith.addf %123, %127 : vector<2x16x16xf32>
    %c23 = arith.constant 23 : index
    %129 = memref.load %arg1[%c23] : memref<98xf32, #tpu.memory_space<smem>>
    %130 = vector.extract_strided_slice %118 {offsets = [0, 0, 2], sizes = [2, 16, 16], strides = [1, 1, 1]} : vector<2x16x22xf32> to vector<2x16x16xf32>
    %131 = vector.broadcast %129 : f32 to vector<2x16x16xf32>
    %132 = arith.mulf %131, %130 : vector<2x16x16xf32>
    %133 = arith.addf %128, %132 : vector<2x16x16xf32>
    %c24 = arith.constant 24 : index
    %134 = memref.load %arg1[%c24] : memref<98xf32, #tpu.memory_space<smem>>
    %135 = vector.extract_strided_slice %118 {offsets = [0, 0, 3], sizes = [2, 16, 16], strides = [1, 1, 1]} : vector<2x16x22xf32> to vector<2x16x16xf32>
    %136 = vector.broadcast %134 : f32 to vector<2x16x16xf32>
    %137 = arith.mulf %136, %135 : vector<2x16x16xf32>
    %138 = arith.addf %133, %137 : vector<2x16x16xf32>
    %c25 = arith.constant 25 : index
    %139 = memref.load %arg1[%c25] : memref<98xf32, #tpu.memory_space<smem>>
    %140 = vector.extract_strided_slice %118 {offsets = [0, 0, 4], sizes = [2, 16, 16], strides = [1, 1, 1]} : vector<2x16x22xf32> to vector<2x16x16xf32>
    %141 = vector.broadcast %139 : f32 to vector<2x16x16xf32>
    %142 = arith.mulf %141, %140 : vector<2x16x16xf32>
    %143 = arith.addf %138, %142 : vector<2x16x16xf32>
    %c26 = arith.constant 26 : index
    %144 = memref.load %arg1[%c26] : memref<98xf32, #tpu.memory_space<smem>>
    %145 = vector.extract_strided_slice %118 {offsets = [0, 0, 5], sizes = [2, 16, 16], strides = [1, 1, 1]} : vector<2x16x22xf32> to vector<2x16x16xf32>
    %146 = vector.broadcast %144 : f32 to vector<2x16x16xf32>
    %147 = arith.mulf %146, %145 : vector<2x16x16xf32>
    %148 = arith.addf %143, %147 : vector<2x16x16xf32>
    %c27 = arith.constant 27 : index
    %149 = memref.load %arg1[%c27] : memref<98xf32, #tpu.memory_space<smem>>
    %150 = vector.extract_strided_slice %118 {offsets = [0, 0, 6], sizes = [2, 16, 16], strides = [1, 1, 1]} : vector<2x16x22xf32> to vector<2x16x16xf32>
    %151 = vector.broadcast %149 : f32 to vector<2x16x16xf32>
    %152 = arith.mulf %151, %150 : vector<2x16x16xf32>
    %153 = arith.addf %148, %152 : vector<2x16x16xf32>
    %c0_29 = arith.constant 0 : index
    %c0_30 = arith.constant 0 : index
    %c4_31 = arith.constant 4 : index
    %c0_32 = arith.constant 0 : index
    %154 = vector.load %arg5[%c0_29, %c0_30, %c4_31, %c0_32] : memref<2x2x22x22xf32, #tpu.memory_space<vmem>>, vector<2x1x16x22xf32>
    %155 = vector.shape_cast %154 : vector<2x1x16x22xf32> to vector<2x16x22xf32>
    %c28 = arith.constant 28 : index
    %156 = memref.load %arg1[%c28] : memref<98xf32, #tpu.memory_space<smem>>
    %157 = vector.extract_strided_slice %155 {offsets = [0, 0, 0], sizes = [2, 16, 16], strides = [1, 1, 1]} : vector<2x16x22xf32> to vector<2x16x16xf32>
    %158 = vector.broadcast %156 : f32 to vector<2x16x16xf32>
    %159 = arith.mulf %158, %157 : vector<2x16x16xf32>
    %160 = arith.addf %153, %159 : vector<2x16x16xf32>
    %c29 = arith.constant 29 : index
    %161 = memref.load %arg1[%c29] : memref<98xf32, #tpu.memory_space<smem>>
    %162 = vector.extract_strided_slice %155 {offsets = [0, 0, 1], sizes = [2, 16, 16], strides = [1, 1, 1]} : vector<2x16x22xf32> to vector<2x16x16xf32>
    %163 = vector.broadcast %161 : f32 to vector<2x16x16xf32>
    %164 = arith.mulf %163, %162 : vector<2x16x16xf32>
    %165 = arith.addf %160, %164 : vector<2x16x16xf32>
    %c30 = arith.constant 30 : index
    %166 = memref.load %arg1[%c30] : memref<98xf32, #tpu.memory_space<smem>>
    %167 = vector.extract_strided_slice %155 {offsets = [0, 0, 2], sizes = [2, 16, 16], strides = [1, 1, 1]} : vector<2x16x22xf32> to vector<2x16x16xf32>
    %168 = vector.broadcast %166 : f32 to vector<2x16x16xf32>
    %169 = arith.mulf %168, %167 : vector<2x16x16xf32>
    %170 = arith.addf %165, %169 : vector<2x16x16xf32>
    %c31 = arith.constant 31 : index
    %171 = memref.load %arg1[%c31] : memref<98xf32, #tpu.memory_space<smem>>
    %172 = vector.extract_strided_slice %155 {offsets = [0, 0, 3], sizes = [2, 16, 16], strides = [1, 1, 1]} : vector<2x16x22xf32> to vector<2x16x16xf32>
    %173 = vector.broadcast %171 : f32 to vector<2x16x16xf32>
    %174 = arith.mulf %173, %172 : vector<2x16x16xf32>
    %175 = arith.addf %170, %174 : vector<2x16x16xf32>
    %c32 = arith.constant 32 : index
    %176 = memref.load %arg1[%c32] : memref<98xf32, #tpu.memory_space<smem>>
    %177 = vector.extract_strided_slice %155 {offsets = [0, 0, 4], sizes = [2, 16, 16], strides = [1, 1, 1]} : vector<2x16x22xf32> to vector<2x16x16xf32>
    %178 = vector.broadcast %176 : f32 to vector<2x16x16xf32>
    %179 = arith.mulf %178, %177 : vector<2x16x16xf32>
    %180 = arith.addf %175, %179 : vector<2x16x16xf32>
    %c33 = arith.constant 33 : index
    %181 = memref.load %arg1[%c33] : memref<98xf32, #tpu.memory_space<smem>>
    %182 = vector.extract_strided_slice %155 {offsets = [0, 0, 5], sizes = [2, 16, 16], strides = [1, 1, 1]} : vector<2x16x22xf32> to vector<2x16x16xf32>
    %183 = vector.broadcast %181 : f32 to vector<2x16x16xf32>
    %184 = arith.mulf %183, %182 : vector<2x16x16xf32>
    %185 = arith.addf %180, %184 : vector<2x16x16xf32>
    %c34 = arith.constant 34 : index
    %186 = memref.load %arg1[%c34] : memref<98xf32, #tpu.memory_space<smem>>
    %187 = vector.extract_strided_slice %155 {offsets = [0, 0, 6], sizes = [2, 16, 16], strides = [1, 1, 1]} : vector<2x16x22xf32> to vector<2x16x16xf32>
    %188 = vector.broadcast %186 : f32 to vector<2x16x16xf32>
    %189 = arith.mulf %188, %187 : vector<2x16x16xf32>
    %190 = arith.addf %185, %189 : vector<2x16x16xf32>
    %c0_33 = arith.constant 0 : index
    %c0_34 = arith.constant 0 : index
    %c5_35 = arith.constant 5 : index
    %c0_36 = arith.constant 0 : index
    %191 = vector.load %arg5[%c0_33, %c0_34, %c5_35, %c0_36] : memref<2x2x22x22xf32, #tpu.memory_space<vmem>>, vector<2x1x16x22xf32>
    %192 = vector.shape_cast %191 : vector<2x1x16x22xf32> to vector<2x16x22xf32>
    %c35 = arith.constant 35 : index
    %193 = memref.load %arg1[%c35] : memref<98xf32, #tpu.memory_space<smem>>
    %194 = vector.extract_strided_slice %192 {offsets = [0, 0, 0], sizes = [2, 16, 16], strides = [1, 1, 1]} : vector<2x16x22xf32> to vector<2x16x16xf32>
    %195 = vector.broadcast %193 : f32 to vector<2x16x16xf32>
    %196 = arith.mulf %195, %194 : vector<2x16x16xf32>
    %197 = arith.addf %190, %196 : vector<2x16x16xf32>
    %c36 = arith.constant 36 : index
    %198 = memref.load %arg1[%c36] : memref<98xf32, #tpu.memory_space<smem>>
    %199 = vector.extract_strided_slice %192 {offsets = [0, 0, 1], sizes = [2, 16, 16], strides = [1, 1, 1]} : vector<2x16x22xf32> to vector<2x16x16xf32>
    %200 = vector.broadcast %198 : f32 to vector<2x16x16xf32>
    %201 = arith.mulf %200, %199 : vector<2x16x16xf32>
    %202 = arith.addf %197, %201 : vector<2x16x16xf32>
    %c37 = arith.constant 37 : index
    %203 = memref.load %arg1[%c37] : memref<98xf32, #tpu.memory_space<smem>>
    %204 = vector.extract_strided_slice %192 {offsets = [0, 0, 2], sizes = [2, 16, 16], strides = [1, 1, 1]} : vector<2x16x22xf32> to vector<2x16x16xf32>
    %205 = vector.broadcast %203 : f32 to vector<2x16x16xf32>
    %206 = arith.mulf %205, %204 : vector<2x16x16xf32>
    %207 = arith.addf %202, %206 : vector<2x16x16xf32>
    %c38 = arith.constant 38 : index
    %208 = memref.load %arg1[%c38] : memref<98xf32, #tpu.memory_space<smem>>
    %209 = vector.extract_strided_slice %192 {offsets = [0, 0, 3], sizes = [2, 16, 16], strides = [1, 1, 1]} : vector<2x16x22xf32> to vector<2x16x16xf32>
    %210 = vector.broadcast %208 : f32 to vector<2x16x16xf32>
    %211 = arith.mulf %210, %209 : vector<2x16x16xf32>
    %212 = arith.addf %207, %211 : vector<2x16x16xf32>
    %c39 = arith.constant 39 : index
    %213 = memref.load %arg1[%c39] : memref<98xf32, #tpu.memory_space<smem>>
    %214 = vector.extract_strided_slice %192 {offsets = [0, 0, 4], sizes = [2, 16, 16], strides = [1, 1, 1]} : vector<2x16x22xf32> to vector<2x16x16xf32>
    %215 = vector.broadcast %213 : f32 to vector<2x16x16xf32>
    %216 = arith.mulf %215, %214 : vector<2x16x16xf32>
    %217 = arith.addf %212, %216 : vector<2x16x16xf32>
    %c40 = arith.constant 40 : index
    %218 = memref.load %arg1[%c40] : memref<98xf32, #tpu.memory_space<smem>>
    %219 = vector.extract_strided_slice %192 {offsets = [0, 0, 5], sizes = [2, 16, 16], strides = [1, 1, 1]} : vector<2x16x22xf32> to vector<2x16x16xf32>
    %220 = vector.broadcast %218 : f32 to vector<2x16x16xf32>
    %221 = arith.mulf %220, %219 : vector<2x16x16xf32>
    %222 = arith.addf %217, %221 : vector<2x16x16xf32>
    %c41 = arith.constant 41 : index
    %223 = memref.load %arg1[%c41] : memref<98xf32, #tpu.memory_space<smem>>
    %224 = vector.extract_strided_slice %192 {offsets = [0, 0, 6], sizes = [2, 16, 16], strides = [1, 1, 1]} : vector<2x16x22xf32> to vector<2x16x16xf32>
    %225 = vector.broadcast %223 : f32 to vector<2x16x16xf32>
    %226 = arith.mulf %225, %224 : vector<2x16x16xf32>
    %227 = arith.addf %222, %226 : vector<2x16x16xf32>
    %c0_37 = arith.constant 0 : index
    %c0_38 = arith.constant 0 : index
    %c6_39 = arith.constant 6 : index
    %c0_40 = arith.constant 0 : index
    %228 = vector.load %arg5[%c0_37, %c0_38, %c6_39, %c0_40] : memref<2x2x22x22xf32, #tpu.memory_space<vmem>>, vector<2x1x16x22xf32>
    %229 = vector.shape_cast %228 : vector<2x1x16x22xf32> to vector<2x16x22xf32>
    %c42 = arith.constant 42 : index
    %230 = memref.load %arg1[%c42] : memref<98xf32, #tpu.memory_space<smem>>
    %231 = vector.extract_strided_slice %229 {offsets = [0, 0, 0], sizes = [2, 16, 16], strides = [1, 1, 1]} : vector<2x16x22xf32> to vector<2x16x16xf32>
    %232 = vector.broadcast %230 : f32 to vector<2x16x16xf32>
    %233 = arith.mulf %232, %231 : vector<2x16x16xf32>
    %234 = arith.addf %227, %233 : vector<2x16x16xf32>
    %c43 = arith.constant 43 : index
    %235 = memref.load %arg1[%c43] : memref<98xf32, #tpu.memory_space<smem>>
    %236 = vector.extract_strided_slice %229 {offsets = [0, 0, 1], sizes = [2, 16, 16], strides = [1, 1, 1]} : vector<2x16x22xf32> to vector<2x16x16xf32>
    %237 = vector.broadcast %235 : f32 to vector<2x16x16xf32>
    %238 = arith.mulf %237, %236 : vector<2x16x16xf32>
    %239 = arith.addf %234, %238 : vector<2x16x16xf32>
    %c44 = arith.constant 44 : index
    %240 = memref.load %arg1[%c44] : memref<98xf32, #tpu.memory_space<smem>>
    %241 = vector.extract_strided_slice %229 {offsets = [0, 0, 2], sizes = [2, 16, 16], strides = [1, 1, 1]} : vector<2x16x22xf32> to vector<2x16x16xf32>
    %242 = vector.broadcast %240 : f32 to vector<2x16x16xf32>
    %243 = arith.mulf %242, %241 : vector<2x16x16xf32>
    %244 = arith.addf %239, %243 : vector<2x16x16xf32>
    %c45 = arith.constant 45 : index
    %245 = memref.load %arg1[%c45] : memref<98xf32, #tpu.memory_space<smem>>
    %246 = vector.extract_strided_slice %229 {offsets = [0, 0, 3], sizes = [2, 16, 16], strides = [1, 1, 1]} : vector<2x16x22xf32> to vector<2x16x16xf32>
    %247 = vector.broadcast %245 : f32 to vector<2x16x16xf32>
    %248 = arith.mulf %247, %246 : vector<2x16x16xf32>
    %249 = arith.addf %244, %248 : vector<2x16x16xf32>
    %c46 = arith.constant 46 : index
    %250 = memref.load %arg1[%c46] : memref<98xf32, #tpu.memory_space<smem>>
    %251 = vector.extract_strided_slice %229 {offsets = [0, 0, 4], sizes = [2, 16, 16], strides = [1, 1, 1]} : vector<2x16x22xf32> to vector<2x16x16xf32>
    %252 = vector.broadcast %250 : f32 to vector<2x16x16xf32>
    %253 = arith.mulf %252, %251 : vector<2x16x16xf32>
    %254 = arith.addf %249, %253 : vector<2x16x16xf32>
    %c47 = arith.constant 47 : index
    %255 = memref.load %arg1[%c47] : memref<98xf32, #tpu.memory_space<smem>>
    %256 = vector.extract_strided_slice %229 {offsets = [0, 0, 5], sizes = [2, 16, 16], strides = [1, 1, 1]} : vector<2x16x22xf32> to vector<2x16x16xf32>
    %257 = vector.broadcast %255 : f32 to vector<2x16x16xf32>
    %258 = arith.mulf %257, %256 : vector<2x16x16xf32>
    %259 = arith.addf %254, %258 : vector<2x16x16xf32>
    %c48 = arith.constant 48 : index
    %260 = memref.load %arg1[%c48] : memref<98xf32, #tpu.memory_space<smem>>
    %261 = vector.extract_strided_slice %229 {offsets = [0, 0, 6], sizes = [2, 16, 16], strides = [1, 1, 1]} : vector<2x16x22xf32> to vector<2x16x16xf32>
    %262 = vector.broadcast %260 : f32 to vector<2x16x16xf32>
    %263 = arith.mulf %262, %261 : vector<2x16x16xf32>
    %264 = arith.addf %259, %263 : vector<2x16x16xf32>
    %c0_41 = arith.constant 0 : index
    %c1_42 = arith.constant 1 : index
    %c0_43 = arith.constant 0 : index
    %c0_44 = arith.constant 0 : index
    %265 = vector.load %arg5[%c0_41, %c1_42, %c0_43, %c0_44] : memref<2x2x22x22xf32, #tpu.memory_space<vmem>>, vector<2x1x16x22xf32>
    %266 = vector.shape_cast %265 : vector<2x1x16x22xf32> to vector<2x16x22xf32>
    %c49 = arith.constant 49 : index
    %267 = memref.load %arg1[%c49] : memref<98xf32, #tpu.memory_space<smem>>
    %268 = vector.extract_strided_slice %266 {offsets = [0, 0, 0], sizes = [2, 16, 16], strides = [1, 1, 1]} : vector<2x16x22xf32> to vector<2x16x16xf32>
    %269 = vector.broadcast %267 : f32 to vector<2x16x16xf32>
    %270 = arith.mulf %269, %268 : vector<2x16x16xf32>
    %271 = arith.addf %264, %270 : vector<2x16x16xf32>
    %c50 = arith.constant 50 : index
    %272 = memref.load %arg1[%c50] : memref<98xf32, #tpu.memory_space<smem>>
    %273 = vector.extract_strided_slice %266 {offsets = [0, 0, 1], sizes = [2, 16, 16], strides = [1, 1, 1]} : vector<2x16x22xf32> to vector<2x16x16xf32>
    %274 = vector.broadcast %272 : f32 to vector<2x16x16xf32>
    %275 = arith.mulf %274, %273 : vector<2x16x16xf32>
    %276 = arith.addf %271, %275 : vector<2x16x16xf32>
    %c51 = arith.constant 51 : index
    %277 = memref.load %arg1[%c51] : memref<98xf32, #tpu.memory_space<smem>>
    %278 = vector.extract_strided_slice %266 {offsets = [0, 0, 2], sizes = [2, 16, 16], strides = [1, 1, 1]} : vector<2x16x22xf32> to vector<2x16x16xf32>
    %279 = vector.broadcast %277 : f32 to vector<2x16x16xf32>
    %280 = arith.mulf %279, %278 : vector<2x16x16xf32>
    %281 = arith.addf %276, %280 : vector<2x16x16xf32>
    %c52 = arith.constant 52 : index
    %282 = memref.load %arg1[%c52] : memref<98xf32, #tpu.memory_space<smem>>
    %283 = vector.extract_strided_slice %266 {offsets = [0, 0, 3], sizes = [2, 16, 16], strides = [1, 1, 1]} : vector<2x16x22xf32> to vector<2x16x16xf32>
    %284 = vector.broadcast %282 : f32 to vector<2x16x16xf32>
    %285 = arith.mulf %284, %283 : vector<2x16x16xf32>
    %286 = arith.addf %281, %285 : vector<2x16x16xf32>
    %c53 = arith.constant 53 : index
    %287 = memref.load %arg1[%c53] : memref<98xf32, #tpu.memory_space<smem>>
    %288 = vector.extract_strided_slice %266 {offsets = [0, 0, 4], sizes = [2, 16, 16], strides = [1, 1, 1]} : vector<2x16x22xf32> to vector<2x16x16xf32>
    %289 = vector.broadcast %287 : f32 to vector<2x16x16xf32>
    %290 = arith.mulf %289, %288 : vector<2x16x16xf32>
    %291 = arith.addf %286, %290 : vector<2x16x16xf32>
    %c54 = arith.constant 54 : index
    %292 = memref.load %arg1[%c54] : memref<98xf32, #tpu.memory_space<smem>>
    %293 = vector.extract_strided_slice %266 {offsets = [0, 0, 5], sizes = [2, 16, 16], strides = [1, 1, 1]} : vector<2x16x22xf32> to vector<2x16x16xf32>
    %294 = vector.broadcast %292 : f32 to vector<2x16x16xf32>
    %295 = arith.mulf %294, %293 : vector<2x16x16xf32>
    %296 = arith.addf %291, %295 : vector<2x16x16xf32>
    %c55 = arith.constant 55 : index
    %297 = memref.load %arg1[%c55] : memref<98xf32, #tpu.memory_space<smem>>
    %298 = vector.extract_strided_slice %266 {offsets = [0, 0, 6], sizes = [2, 16, 16], strides = [1, 1, 1]} : vector<2x16x22xf32> to vector<2x16x16xf32>
    %299 = vector.broadcast %297 : f32 to vector<2x16x16xf32>
    %300 = arith.mulf %299, %298 : vector<2x16x16xf32>
    %301 = arith.addf %296, %300 : vector<2x16x16xf32>
    %c0_45 = arith.constant 0 : index
    %c1_46 = arith.constant 1 : index
    %c1_47 = arith.constant 1 : index
    %c0_48 = arith.constant 0 : index
    %302 = vector.load %arg5[%c0_45, %c1_46, %c1_47, %c0_48] : memref<2x2x22x22xf32, #tpu.memory_space<vmem>>, vector<2x1x16x22xf32>
    %303 = vector.shape_cast %302 : vector<2x1x16x22xf32> to vector<2x16x22xf32>
    %c56 = arith.constant 56 : index
    %304 = memref.load %arg1[%c56] : memref<98xf32, #tpu.memory_space<smem>>
    %305 = vector.extract_strided_slice %303 {offsets = [0, 0, 0], sizes = [2, 16, 16], strides = [1, 1, 1]} : vector<2x16x22xf32> to vector<2x16x16xf32>
    %306 = vector.broadcast %304 : f32 to vector<2x16x16xf32>
    %307 = arith.mulf %306, %305 : vector<2x16x16xf32>
    %308 = arith.addf %301, %307 : vector<2x16x16xf32>
    %c57 = arith.constant 57 : index
    %309 = memref.load %arg1[%c57] : memref<98xf32, #tpu.memory_space<smem>>
    %310 = vector.extract_strided_slice %303 {offsets = [0, 0, 1], sizes = [2, 16, 16], strides = [1, 1, 1]} : vector<2x16x22xf32> to vector<2x16x16xf32>
    %311 = vector.broadcast %309 : f32 to vector<2x16x16xf32>
    %312 = arith.mulf %311, %310 : vector<2x16x16xf32>
    %313 = arith.addf %308, %312 : vector<2x16x16xf32>
    %c58 = arith.constant 58 : index
    %314 = memref.load %arg1[%c58] : memref<98xf32, #tpu.memory_space<smem>>
    %315 = vector.extract_strided_slice %303 {offsets = [0, 0, 2], sizes = [2, 16, 16], strides = [1, 1, 1]} : vector<2x16x22xf32> to vector<2x16x16xf32>
    %316 = vector.broadcast %314 : f32 to vector<2x16x16xf32>
    %317 = arith.mulf %316, %315 : vector<2x16x16xf32>
    %318 = arith.addf %313, %317 : vector<2x16x16xf32>
    %c59 = arith.constant 59 : index
    %319 = memref.load %arg1[%c59] : memref<98xf32, #tpu.memory_space<smem>>
    %320 = vector.extract_strided_slice %303 {offsets = [0, 0, 3], sizes = [2, 16, 16], strides = [1, 1, 1]} : vector<2x16x22xf32> to vector<2x16x16xf32>
    %321 = vector.broadcast %319 : f32 to vector<2x16x16xf32>
    %322 = arith.mulf %321, %320 : vector<2x16x16xf32>
    %323 = arith.addf %318, %322 : vector<2x16x16xf32>
    %c60 = arith.constant 60 : index
    %324 = memref.load %arg1[%c60] : memref<98xf32, #tpu.memory_space<smem>>
    %325 = vector.extract_strided_slice %303 {offsets = [0, 0, 4], sizes = [2, 16, 16], strides = [1, 1, 1]} : vector<2x16x22xf32> to vector<2x16x16xf32>
    %326 = vector.broadcast %324 : f32 to vector<2x16x16xf32>
    %327 = arith.mulf %326, %325 : vector<2x16x16xf32>
    %328 = arith.addf %323, %327 : vector<2x16x16xf32>
    %c61 = arith.constant 61 : index
    %329 = memref.load %arg1[%c61] : memref<98xf32, #tpu.memory_space<smem>>
    %330 = vector.extract_strided_slice %303 {offsets = [0, 0, 5], sizes = [2, 16, 16], strides = [1, 1, 1]} : vector<2x16x22xf32> to vector<2x16x16xf32>
    %331 = vector.broadcast %329 : f32 to vector<2x16x16xf32>
    %332 = arith.mulf %331, %330 : vector<2x16x16xf32>
    %333 = arith.addf %328, %332 : vector<2x16x16xf32>
    %c62 = arith.constant 62 : index
    %334 = memref.load %arg1[%c62] : memref<98xf32, #tpu.memory_space<smem>>
    %335 = vector.extract_strided_slice %303 {offsets = [0, 0, 6], sizes = [2, 16, 16], strides = [1, 1, 1]} : vector<2x16x22xf32> to vector<2x16x16xf32>
    %336 = vector.broadcast %334 : f32 to vector<2x16x16xf32>
    %337 = arith.mulf %336, %335 : vector<2x16x16xf32>
    %338 = arith.addf %333, %337 : vector<2x16x16xf32>
    %c0_49 = arith.constant 0 : index
    %c1_50 = arith.constant 1 : index
    %c2_51 = arith.constant 2 : index
    %c0_52 = arith.constant 0 : index
    %339 = vector.load %arg5[%c0_49, %c1_50, %c2_51, %c0_52] : memref<2x2x22x22xf32, #tpu.memory_space<vmem>>, vector<2x1x16x22xf32>
    %340 = vector.shape_cast %339 : vector<2x1x16x22xf32> to vector<2x16x22xf32>
    %c63 = arith.constant 63 : index
    %341 = memref.load %arg1[%c63] : memref<98xf32, #tpu.memory_space<smem>>
    %342 = vector.extract_strided_slice %340 {offsets = [0, 0, 0], sizes = [2, 16, 16], strides = [1, 1, 1]} : vector<2x16x22xf32> to vector<2x16x16xf32>
    %343 = vector.broadcast %341 : f32 to vector<2x16x16xf32>
    %344 = arith.mulf %343, %342 : vector<2x16x16xf32>
    %345 = arith.addf %338, %344 : vector<2x16x16xf32>
    %c64 = arith.constant 64 : index
    %346 = memref.load %arg1[%c64] : memref<98xf32, #tpu.memory_space<smem>>
    %347 = vector.extract_strided_slice %340 {offsets = [0, 0, 1], sizes = [2, 16, 16], strides = [1, 1, 1]} : vector<2x16x22xf32> to vector<2x16x16xf32>
    %348 = vector.broadcast %346 : f32 to vector<2x16x16xf32>
    %349 = arith.mulf %348, %347 : vector<2x16x16xf32>
    %350 = arith.addf %345, %349 : vector<2x16x16xf32>
    %c65 = arith.constant 65 : index
    %351 = memref.load %arg1[%c65] : memref<98xf32, #tpu.memory_space<smem>>
    %352 = vector.extract_strided_slice %340 {offsets = [0, 0, 2], sizes = [2, 16, 16], strides = [1, 1, 1]} : vector<2x16x22xf32> to vector<2x16x16xf32>
    %353 = vector.broadcast %351 : f32 to vector<2x16x16xf32>
    %354 = arith.mulf %353, %352 : vector<2x16x16xf32>
    %355 = arith.addf %350, %354 : vector<2x16x16xf32>
    %c66 = arith.constant 66 : index
    %356 = memref.load %arg1[%c66] : memref<98xf32, #tpu.memory_space<smem>>
    %357 = vector.extract_strided_slice %340 {offsets = [0, 0, 3], sizes = [2, 16, 16], strides = [1, 1, 1]} : vector<2x16x22xf32> to vector<2x16x16xf32>
    %358 = vector.broadcast %356 : f32 to vector<2x16x16xf32>
    %359 = arith.mulf %358, %357 : vector<2x16x16xf32>
    %360 = arith.addf %355, %359 : vector<2x16x16xf32>
    %c67 = arith.constant 67 : index
    %361 = memref.load %arg1[%c67] : memref<98xf32, #tpu.memory_space<smem>>
    %362 = vector.extract_strided_slice %340 {offsets = [0, 0, 4], sizes = [2, 16, 16], strides = [1, 1, 1]} : vector<2x16x22xf32> to vector<2x16x16xf32>
    %363 = vector.broadcast %361 : f32 to vector<2x16x16xf32>
    %364 = arith.mulf %363, %362 : vector<2x16x16xf32>
    %365 = arith.addf %360, %364 : vector<2x16x16xf32>
    %c68 = arith.constant 68 : index
    %366 = memref.load %arg1[%c68] : memref<98xf32, #tpu.memory_space<smem>>
    %367 = vector.extract_strided_slice %340 {offsets = [0, 0, 5], sizes = [2, 16, 16], strides = [1, 1, 1]} : vector<2x16x22xf32> to vector<2x16x16xf32>
    %368 = vector.broadcast %366 : f32 to vector<2x16x16xf32>
    %369 = arith.mulf %368, %367 : vector<2x16x16xf32>
    %370 = arith.addf %365, %369 : vector<2x16x16xf32>
    %c69 = arith.constant 69 : index
    %371 = memref.load %arg1[%c69] : memref<98xf32, #tpu.memory_space<smem>>
    %372 = vector.extract_strided_slice %340 {offsets = [0, 0, 6], sizes = [2, 16, 16], strides = [1, 1, 1]} : vector<2x16x22xf32> to vector<2x16x16xf32>
    %373 = vector.broadcast %371 : f32 to vector<2x16x16xf32>
    %374 = arith.mulf %373, %372 : vector<2x16x16xf32>
    %375 = arith.addf %370, %374 : vector<2x16x16xf32>
    %c0_53 = arith.constant 0 : index
    %c1_54 = arith.constant 1 : index
    %c3_55 = arith.constant 3 : index
    %c0_56 = arith.constant 0 : index
    %376 = vector.load %arg5[%c0_53, %c1_54, %c3_55, %c0_56] : memref<2x2x22x22xf32, #tpu.memory_space<vmem>>, vector<2x1x16x22xf32>
    %377 = vector.shape_cast %376 : vector<2x1x16x22xf32> to vector<2x16x22xf32>
    %c70 = arith.constant 70 : index
    %378 = memref.load %arg1[%c70] : memref<98xf32, #tpu.memory_space<smem>>
    %379 = vector.extract_strided_slice %377 {offsets = [0, 0, 0], sizes = [2, 16, 16], strides = [1, 1, 1]} : vector<2x16x22xf32> to vector<2x16x16xf32>
    %380 = vector.broadcast %378 : f32 to vector<2x16x16xf32>
    %381 = arith.mulf %380, %379 : vector<2x16x16xf32>
    %382 = arith.addf %375, %381 : vector<2x16x16xf32>
    %c71 = arith.constant 71 : index
    %383 = memref.load %arg1[%c71] : memref<98xf32, #tpu.memory_space<smem>>
    %384 = vector.extract_strided_slice %377 {offsets = [0, 0, 1], sizes = [2, 16, 16], strides = [1, 1, 1]} : vector<2x16x22xf32> to vector<2x16x16xf32>
    %385 = vector.broadcast %383 : f32 to vector<2x16x16xf32>
    %386 = arith.mulf %385, %384 : vector<2x16x16xf32>
    %387 = arith.addf %382, %386 : vector<2x16x16xf32>
    %c72 = arith.constant 72 : index
    %388 = memref.load %arg1[%c72] : memref<98xf32, #tpu.memory_space<smem>>
    %389 = vector.extract_strided_slice %377 {offsets = [0, 0, 2], sizes = [2, 16, 16], strides = [1, 1, 1]} : vector<2x16x22xf32> to vector<2x16x16xf32>
    %390 = vector.broadcast %388 : f32 to vector<2x16x16xf32>
    %391 = arith.mulf %390, %389 : vector<2x16x16xf32>
    %392 = arith.addf %387, %391 : vector<2x16x16xf32>
    %c73 = arith.constant 73 : index
    %393 = memref.load %arg1[%c73] : memref<98xf32, #tpu.memory_space<smem>>
    %394 = vector.extract_strided_slice %377 {offsets = [0, 0, 3], sizes = [2, 16, 16], strides = [1, 1, 1]} : vector<2x16x22xf32> to vector<2x16x16xf32>
    %395 = vector.broadcast %393 : f32 to vector<2x16x16xf32>
    %396 = arith.mulf %395, %394 : vector<2x16x16xf32>
    %397 = arith.addf %392, %396 : vector<2x16x16xf32>
    %c74 = arith.constant 74 : index
    %398 = memref.load %arg1[%c74] : memref<98xf32, #tpu.memory_space<smem>>
    %399 = vector.extract_strided_slice %377 {offsets = [0, 0, 4], sizes = [2, 16, 16], strides = [1, 1, 1]} : vector<2x16x22xf32> to vector<2x16x16xf32>
    %400 = vector.broadcast %398 : f32 to vector<2x16x16xf32>
    %401 = arith.mulf %400, %399 : vector<2x16x16xf32>
    %402 = arith.addf %397, %401 : vector<2x16x16xf32>
    %c75 = arith.constant 75 : index
    %403 = memref.load %arg1[%c75] : memref<98xf32, #tpu.memory_space<smem>>
    %404 = vector.extract_strided_slice %377 {offsets = [0, 0, 5], sizes = [2, 16, 16], strides = [1, 1, 1]} : vector<2x16x22xf32> to vector<2x16x16xf32>
    %405 = vector.broadcast %403 : f32 to vector<2x16x16xf32>
    %406 = arith.mulf %405, %404 : vector<2x16x16xf32>
    %407 = arith.addf %402, %406 : vector<2x16x16xf32>
    %c76 = arith.constant 76 : index
    %408 = memref.load %arg1[%c76] : memref<98xf32, #tpu.memory_space<smem>>
    %409 = vector.extract_strided_slice %377 {offsets = [0, 0, 6], sizes = [2, 16, 16], strides = [1, 1, 1]} : vector<2x16x22xf32> to vector<2x16x16xf32>
    %410 = vector.broadcast %408 : f32 to vector<2x16x16xf32>
    %411 = arith.mulf %410, %409 : vector<2x16x16xf32>
    %412 = arith.addf %407, %411 : vector<2x16x16xf32>
    %c0_57 = arith.constant 0 : index
    %c1_58 = arith.constant 1 : index
    %c4_59 = arith.constant 4 : index
    %c0_60 = arith.constant 0 : index
    %413 = vector.load %arg5[%c0_57, %c1_58, %c4_59, %c0_60] : memref<2x2x22x22xf32, #tpu.memory_space<vmem>>, vector<2x1x16x22xf32>
    %414 = vector.shape_cast %413 : vector<2x1x16x22xf32> to vector<2x16x22xf32>
    %c77 = arith.constant 77 : index
    %415 = memref.load %arg1[%c77] : memref<98xf32, #tpu.memory_space<smem>>
    %416 = vector.extract_strided_slice %414 {offsets = [0, 0, 0], sizes = [2, 16, 16], strides = [1, 1, 1]} : vector<2x16x22xf32> to vector<2x16x16xf32>
    %417 = vector.broadcast %415 : f32 to vector<2x16x16xf32>
    %418 = arith.mulf %417, %416 : vector<2x16x16xf32>
    %419 = arith.addf %412, %418 : vector<2x16x16xf32>
    %c78 = arith.constant 78 : index
    %420 = memref.load %arg1[%c78] : memref<98xf32, #tpu.memory_space<smem>>
    %421 = vector.extract_strided_slice %414 {offsets = [0, 0, 1], sizes = [2, 16, 16], strides = [1, 1, 1]} : vector<2x16x22xf32> to vector<2x16x16xf32>
    %422 = vector.broadcast %420 : f32 to vector<2x16x16xf32>
    %423 = arith.mulf %422, %421 : vector<2x16x16xf32>
    %424 = arith.addf %419, %423 : vector<2x16x16xf32>
    %c79 = arith.constant 79 : index
    %425 = memref.load %arg1[%c79] : memref<98xf32, #tpu.memory_space<smem>>
    %426 = vector.extract_strided_slice %414 {offsets = [0, 0, 2], sizes = [2, 16, 16], strides = [1, 1, 1]} : vector<2x16x22xf32> to vector<2x16x16xf32>
    %427 = vector.broadcast %425 : f32 to vector<2x16x16xf32>
    %428 = arith.mulf %427, %426 : vector<2x16x16xf32>
    %429 = arith.addf %424, %428 : vector<2x16x16xf32>
    %c80 = arith.constant 80 : index
    %430 = memref.load %arg1[%c80] : memref<98xf32, #tpu.memory_space<smem>>
    %431 = vector.extract_strided_slice %414 {offsets = [0, 0, 3], sizes = [2, 16, 16], strides = [1, 1, 1]} : vector<2x16x22xf32> to vector<2x16x16xf32>
    %432 = vector.broadcast %430 : f32 to vector<2x16x16xf32>
    %433 = arith.mulf %432, %431 : vector<2x16x16xf32>
    %434 = arith.addf %429, %433 : vector<2x16x16xf32>
    %c81 = arith.constant 81 : index
    %435 = memref.load %arg1[%c81] : memref<98xf32, #tpu.memory_space<smem>>
    %436 = vector.extract_strided_slice %414 {offsets = [0, 0, 4], sizes = [2, 16, 16], strides = [1, 1, 1]} : vector<2x16x22xf32> to vector<2x16x16xf32>
    %437 = vector.broadcast %435 : f32 to vector<2x16x16xf32>
    %438 = arith.mulf %437, %436 : vector<2x16x16xf32>
    %439 = arith.addf %434, %438 : vector<2x16x16xf32>
    %c82 = arith.constant 82 : index
    %440 = memref.load %arg1[%c82] : memref<98xf32, #tpu.memory_space<smem>>
    %441 = vector.extract_strided_slice %414 {offsets = [0, 0, 5], sizes = [2, 16, 16], strides = [1, 1, 1]} : vector<2x16x22xf32> to vector<2x16x16xf32>
    %442 = vector.broadcast %440 : f32 to vector<2x16x16xf32>
    %443 = arith.mulf %442, %441 : vector<2x16x16xf32>
    %444 = arith.addf %439, %443 : vector<2x16x16xf32>
    %c83 = arith.constant 83 : index
    %445 = memref.load %arg1[%c83] : memref<98xf32, #tpu.memory_space<smem>>
    %446 = vector.extract_strided_slice %414 {offsets = [0, 0, 6], sizes = [2, 16, 16], strides = [1, 1, 1]} : vector<2x16x22xf32> to vector<2x16x16xf32>
    %447 = vector.broadcast %445 : f32 to vector<2x16x16xf32>
    %448 = arith.mulf %447, %446 : vector<2x16x16xf32>
    %449 = arith.addf %444, %448 : vector<2x16x16xf32>
    %c0_61 = arith.constant 0 : index
    %c1_62 = arith.constant 1 : index
    %c5_63 = arith.constant 5 : index
    %c0_64 = arith.constant 0 : index
    %450 = vector.load %arg5[%c0_61, %c1_62, %c5_63, %c0_64] : memref<2x2x22x22xf32, #tpu.memory_space<vmem>>, vector<2x1x16x22xf32>
    %451 = vector.shape_cast %450 : vector<2x1x16x22xf32> to vector<2x16x22xf32>
    %c84 = arith.constant 84 : index
    %452 = memref.load %arg1[%c84] : memref<98xf32, #tpu.memory_space<smem>>
    %453 = vector.extract_strided_slice %451 {offsets = [0, 0, 0], sizes = [2, 16, 16], strides = [1, 1, 1]} : vector<2x16x22xf32> to vector<2x16x16xf32>
    %454 = vector.broadcast %452 : f32 to vector<2x16x16xf32>
    %455 = arith.mulf %454, %453 : vector<2x16x16xf32>
    %456 = arith.addf %449, %455 : vector<2x16x16xf32>
    %c85 = arith.constant 85 : index
    %457 = memref.load %arg1[%c85] : memref<98xf32, #tpu.memory_space<smem>>
    %458 = vector.extract_strided_slice %451 {offsets = [0, 0, 1], sizes = [2, 16, 16], strides = [1, 1, 1]} : vector<2x16x22xf32> to vector<2x16x16xf32>
    %459 = vector.broadcast %457 : f32 to vector<2x16x16xf32>
    %460 = arith.mulf %459, %458 : vector<2x16x16xf32>
    %461 = arith.addf %456, %460 : vector<2x16x16xf32>
    %c86 = arith.constant 86 : index
    %462 = memref.load %arg1[%c86] : memref<98xf32, #tpu.memory_space<smem>>
    %463 = vector.extract_strided_slice %451 {offsets = [0, 0, 2], sizes = [2, 16, 16], strides = [1, 1, 1]} : vector<2x16x22xf32> to vector<2x16x16xf32>
    %464 = vector.broadcast %462 : f32 to vector<2x16x16xf32>
    %465 = arith.mulf %464, %463 : vector<2x16x16xf32>
    %466 = arith.addf %461, %465 : vector<2x16x16xf32>
    %c87 = arith.constant 87 : index
    %467 = memref.load %arg1[%c87] : memref<98xf32, #tpu.memory_space<smem>>
    %468 = vector.extract_strided_slice %451 {offsets = [0, 0, 3], sizes = [2, 16, 16], strides = [1, 1, 1]} : vector<2x16x22xf32> to vector<2x16x16xf32>
    %469 = vector.broadcast %467 : f32 to vector<2x16x16xf32>
    %470 = arith.mulf %469, %468 : vector<2x16x16xf32>
    %471 = arith.addf %466, %470 : vector<2x16x16xf32>
    %c88 = arith.constant 88 : index
    %472 = memref.load %arg1[%c88] : memref<98xf32, #tpu.memory_space<smem>>
    %473 = vector.extract_strided_slice %451 {offsets = [0, 0, 4], sizes = [2, 16, 16], strides = [1, 1, 1]} : vector<2x16x22xf32> to vector<2x16x16xf32>
    %474 = vector.broadcast %472 : f32 to vector<2x16x16xf32>
    %475 = arith.mulf %474, %473 : vector<2x16x16xf32>
    %476 = arith.addf %471, %475 : vector<2x16x16xf32>
    %c89 = arith.constant 89 : index
    %477 = memref.load %arg1[%c89] : memref<98xf32, #tpu.memory_space<smem>>
    %478 = vector.extract_strided_slice %451 {offsets = [0, 0, 5], sizes = [2, 16, 16], strides = [1, 1, 1]} : vector<2x16x22xf32> to vector<2x16x16xf32>
    %479 = vector.broadcast %477 : f32 to vector<2x16x16xf32>
    %480 = arith.mulf %479, %478 : vector<2x16x16xf32>
    %481 = arith.addf %476, %480 : vector<2x16x16xf32>
    %c90 = arith.constant 90 : index
    %482 = memref.load %arg1[%c90] : memref<98xf32, #tpu.memory_space<smem>>
    %483 = vector.extract_strided_slice %451 {offsets = [0, 0, 6], sizes = [2, 16, 16], strides = [1, 1, 1]} : vector<2x16x22xf32> to vector<2x16x16xf32>
    %484 = vector.broadcast %482 : f32 to vector<2x16x16xf32>
    %485 = arith.mulf %484, %483 : vector<2x16x16xf32>
    %486 = arith.addf %481, %485 : vector<2x16x16xf32>
    %c0_65 = arith.constant 0 : index
    %c1_66 = arith.constant 1 : index
    %c6_67 = arith.constant 6 : index
    %c0_68 = arith.constant 0 : index
    %487 = vector.load %arg5[%c0_65, %c1_66, %c6_67, %c0_68] : memref<2x2x22x22xf32, #tpu.memory_space<vmem>>, vector<2x1x16x22xf32>
    %488 = vector.shape_cast %487 : vector<2x1x16x22xf32> to vector<2x16x22xf32>
    %c91 = arith.constant 91 : index
    %489 = memref.load %arg1[%c91] : memref<98xf32, #tpu.memory_space<smem>>
    %490 = vector.extract_strided_slice %488 {offsets = [0, 0, 0], sizes = [2, 16, 16], strides = [1, 1, 1]} : vector<2x16x22xf32> to vector<2x16x16xf32>
    %491 = vector.broadcast %489 : f32 to vector<2x16x16xf32>
    %492 = arith.mulf %491, %490 : vector<2x16x16xf32>
    %493 = arith.addf %486, %492 : vector<2x16x16xf32>
    %c92 = arith.constant 92 : index
    %494 = memref.load %arg1[%c92] : memref<98xf32, #tpu.memory_space<smem>>
    %495 = vector.extract_strided_slice %488 {offsets = [0, 0, 1], sizes = [2, 16, 16], strides = [1, 1, 1]} : vector<2x16x22xf32> to vector<2x16x16xf32>
    %496 = vector.broadcast %494 : f32 to vector<2x16x16xf32>
    %497 = arith.mulf %496, %495 : vector<2x16x16xf32>
    %498 = arith.addf %493, %497 : vector<2x16x16xf32>
    %c93 = arith.constant 93 : index
    %499 = memref.load %arg1[%c93] : memref<98xf32, #tpu.memory_space<smem>>
    %500 = vector.extract_strided_slice %488 {offsets = [0, 0, 2], sizes = [2, 16, 16], strides = [1, 1, 1]} : vector<2x16x22xf32> to vector<2x16x16xf32>
    %501 = vector.broadcast %499 : f32 to vector<2x16x16xf32>
    %502 = arith.mulf %501, %500 : vector<2x16x16xf32>
    %503 = arith.addf %498, %502 : vector<2x16x16xf32>
    %c94 = arith.constant 94 : index
    %504 = memref.load %arg1[%c94] : memref<98xf32, #tpu.memory_space<smem>>
    %505 = vector.extract_strided_slice %488 {offsets = [0, 0, 3], sizes = [2, 16, 16], strides = [1, 1, 1]} : vector<2x16x22xf32> to vector<2x16x16xf32>
    %506 = vector.broadcast %504 : f32 to vector<2x16x16xf32>
    %507 = arith.mulf %506, %505 : vector<2x16x16xf32>
    %508 = arith.addf %503, %507 : vector<2x16x16xf32>
    %c95 = arith.constant 95 : index
    %509 = memref.load %arg1[%c95] : memref<98xf32, #tpu.memory_space<smem>>
    %510 = vector.extract_strided_slice %488 {offsets = [0, 0, 4], sizes = [2, 16, 16], strides = [1, 1, 1]} : vector<2x16x22xf32> to vector<2x16x16xf32>
    %511 = vector.broadcast %509 : f32 to vector<2x16x16xf32>
    %512 = arith.mulf %511, %510 : vector<2x16x16xf32>
    %513 = arith.addf %508, %512 : vector<2x16x16xf32>
    %c96 = arith.constant 96 : index
    %514 = memref.load %arg1[%c96] : memref<98xf32, #tpu.memory_space<smem>>
    %515 = vector.extract_strided_slice %488 {offsets = [0, 0, 5], sizes = [2, 16, 16], strides = [1, 1, 1]} : vector<2x16x22xf32> to vector<2x16x16xf32>
    %516 = vector.broadcast %514 : f32 to vector<2x16x16xf32>
    %517 = arith.mulf %516, %515 : vector<2x16x16xf32>
    %518 = arith.addf %513, %517 : vector<2x16x16xf32>
    %c97 = arith.constant 97 : index
    %519 = memref.load %arg1[%c97] : memref<98xf32, #tpu.memory_space<smem>>
    %520 = vector.extract_strided_slice %488 {offsets = [0, 0, 6], sizes = [2, 16, 16], strides = [1, 1, 1]} : vector<2x16x22xf32> to vector<2x16x16xf32>
    %521 = vector.broadcast %519 : f32 to vector<2x16x16xf32>
    %522 = arith.mulf %521, %520 : vector<2x16x16xf32>
    %523 = arith.addf %518, %522 : vector<2x16x16xf32>
    %524 = arith.negf %523 : vector<2x16x16xf32>
    %525 = math.exp %524 : vector<2x16x16xf32>
    %cst_69 = arith.constant 1.000000e+00 : f32
    %526 = vector.broadcast %cst_69 : f32 to vector<2x16x16xf32>
    %527 = arith.addf %526, %525 : vector<2x16x16xf32>
    %528 = arith.divf %526, %527 : vector<2x16x16xf32>
    %529 = arith.mulf %523, %528 : vector<2x16x16xf32>
    %530 = arith.negf %529 : vector<2x16x16xf32>
    %531 = math.exp %530 : vector<2x16x16xf32>
    %cst_70 = arith.constant 1.000000e+00 : f32
    %532 = vector.broadcast %cst_70 : f32 to vector<2x16x16xf32>
    %533 = arith.addf %532, %531 : vector<2x16x16xf32>
    %534 = arith.divf %532, %533 : vector<2x16x16xf32>
    %c0_71 = arith.constant 0 : index
    %c0_72 = arith.constant 0 : index
    %c0_73 = arith.constant 0 : index
    %c0_74 = arith.constant 0 : index
    %535 = vector.load %arg4[%c0_71, %c0_72, %c0_73, %c0_74] : memref<2x1x16x16xf32, #tpu.memory_space<vmem>>, vector<2x1x16x16xf32>
    %536 = vector.shape_cast %535 : vector<2x1x16x16xf32> to vector<2x16x16xf32>
    %537 = vector.shape_cast %534 : vector<2x16x16xf32> to vector<2x1x16x16xf32>
    tpu.vector_store %arg4[%c0_71, %c0_72, %c0_73, %c0_74], %537 {strides = array<i32>} : memref<2x1x16x16xf32, #tpu.memory_space<vmem>>, vector<2x1x16x16xf32>,
    return
  }
  func.func @transform_0(%arg0: i32) -> i32 {
    %c0_i32 = arith.constant 0 : i32
    %c0_i32_0 = arith.constant 0 : i32
    return %c0_i32 : i32
  }
  func.func @transform_1(%arg0: i32) -> i32 {
    %c0_i32 = arith.constant 0 : i32
    %c0_i32_0 = arith.constant 0 : i32
    return %c0_i32 : i32
  }
  func.func @transform_2(%arg0: i32) -> (i32, i32, i32, i32) {
    %c0_i32 = arith.constant 0 : i32
    %c0_i32_0 = arith.constant 0 : i32
    %c0_i32_1 = arith.constant 0 : i32
    %c0_i32_2 = arith.constant 0 : i32
    return %arg0, %c0_i32, %c0_i32_0, %c0_i32_1 : i32, i32, i32, i32
  }
  func.func @transform_3(%arg0: i32) -> (i32, i32, i32, i32) {
    %c0_i32 = arith.constant 0 : i32
    %c0_i32_0 = arith.constant 0 : i32
    %c0_i32_1 = arith.constant 0 : i32
    %c0_i32_2 = arith.constant 0 : i32
    return %arg0, %c0_i32, %c0_i32_0, %c0_i32_1 : i32, i32, i32, i32
  }
}

</mosaic_0001>

<llo_original>
// kernel: spatial_attention_module.2
$region0: #{spatial_attention_module.2}
  #allocation0 [shape = 'u32[]', space=smem, size = 0x4, offset = 0x4, fixed_abs, tag = 'smem constant byte address 0x4 - core index']
  #allocation1 [shape = 'u32[144,128]{1,0:T(1,128)}', space=vmem, size = 0x12000, scoped, tag = 'internal scratch']
  #allocation2 [shape = 'f32[2,256]{1,0:T(2,128)}', space=vmem, size = 0x800, scoped, tag = 'scratch operand']
  #allocation3 [shape = 'f32[2,256]{1,0:T(2,128)}', space=vmem, size = 0x800, scoped, tag = 'scratch operand']
  %s0 = inlined_call_operand.vmem [shape: f32[2,4,256], index: 0, kind: input, shape index: {}]
  %s1 = inlined_call_operand.vmem [shape: f32[2,2,256], index: 1, kind: output, shape index: {}]
  %s2 = sld [smem:[#allocation0]]
  $region22: #{spatial_attention_module.2} parent=0
    _
  %s4 = ssub.s32 1, %s2
  %s5 = scalar_select 0, %s4, %s2
  // Predicated region
  $region2: #{spatial_attention_module.2} parent=0 // pred_check
    _
  $region3: #{spatial_attention_module.2} parent=0 // pred_check_branch
    %7 = sbr.rel (0) target = $region5
  $region4: #{spatial_attention_module.2} parent=0 // pred_region
    _
  $region5: #{spatial_attention_module.2} parent=0 // pred_fallthru
    _
  %p8 = scmp.eq.s32.totalorder 0, 0
  // Predicated region
  $region6: #{spatial_attention_module.2} parent=0 // pred_check
    %p9 = pneg %p8
  $region7: #{spatial_attention_module.2} parent=0 // pred_check_branch
    %11 = sbr.rel (%p9) target = $region9
  $region8: #{spatial_attention_module.2} parent=0 // pred_region
    %12 = vst [vmem:[#allocation2] sm:$0xf] 0.0
    %13 = vst [vmem:[#allocation3] sm:$0xf] -inf
  $region9: #{spatial_attention_module.2} parent=0 // pred_fallthru
    _
  %v14 = vld [vmem:[%s0] sm:$0xff]
  %v15 = vld [vmem:[%s0 + $0x8] sm:$0xff]
  %v16 = vld [vmem:[#allocation2] sm:$0xf]
  %v19 = vcombine.high %v14, %v14
  %v20 = vcombine.high %v15, %v15
  %vm23 = vcmask 1043456
  %v24 = vsel %vm23, %v14, 0.0
  %v25 = vrot.slane %v24, 4
  %v26 = vadd.f32 %v24, %v25
  %v27 = vrot.slane %v26, 2
  %v28 = vadd.f32 %v26, %v27
  %v29 = vrot.slane %v28, 1
  %v30 = vadd.f32 %v28, %v29
  %v31 = vsel %vm23, %v19, 0.0
  %v32 = vrot.slane %v31, 4
  %v33 = vadd.f32 %v31, %v32
  %v34 = vrot.slane %v33, 2
  %v35 = vadd.f32 %v33, %v34
  %v36 = vrot.slane %v35, 1
  %v37 = vadd.f32 %v35, %v36
  %v38 = vsel %vm23, %v15, 0.0
  %v39 = vrot.slane %v38, 4
  %v40 = vadd.f32 %v38, %v39
  %v41 = vrot.slane %v40, 2
  %v42 = vadd.f32 %v40, %v41
  %v43 = vrot.slane %v42, 1
  %v44 = vadd.f32 %v42, %v43
  %v45 = vsel %vm23, %v20, 0.0
  %v46 = vrot.slane %v45, 4
  %v47 = vadd.f32 %v45, %v46
  %v48 = vrot.slane %v47, 2
  %v49 = vadd.f32 %v47, %v48
  %v50 = vrot.slane %v49, 1
  %v51 = vadd.f32 %v49, %v50
  %v56 = vcombine.low %v30, %v37
  %v58 = vunpack.c.l.s4 1983009808
  %v59 = vunpack.c.0.s8 %v58
  %v60 = vlaneseq
  %v61 = vshrl.u32 %v60, 7
  %v62 = vsub.s32 %v59, %v61
  %v63 = vrot.slane %v56, %v62
  %v64 = vcombine.low %v44, %v51
  %v66 = vunpack.c.l.s4 1983009808
  %v67 = vunpack.c.0.s8 %v66
  %v68 = vlaneseq
  %v69 = vshrl.u32 %v68, 7
  %v70 = vsub.s32 %v67, %v69
  %v71 = vrot.slane %v64, %v70
  %vm72 = vcmask 1044484
  %v73 = vsel %vm72, %v63, %v63
  %vm74 = vcmask 1046534
  %v75 = vsel %vm74, %v63, %v73
  %v76 = vrot.slane %v71, 7
  %vm77 = vcmask 1041409
  %v78 = vsel %vm77, %v76, %v75
  %vm79 = vcmask 1043459
  %v80 = vsel %vm79, %v76, %v78
  %vm81 = vcmask 1045509
  %v82 = vsel %vm81, %v76, %v80
  %vm83 = vcmask 1047559
  %v84 = vsel %vm83, %v76, %v82
  %v86 = vadd.f32 %v16, %v84
  %87 = vst [vmem:[#allocation2] sm:$0xf] %v86
  %v88 = vld [vmem:[#allocation3] sm:$0xf]
  %v89 = vsel %vm23, %v14, -inf
  %v90 = vrot.slane %v89, 4
  %v91 = vmax.f32 %v89, %v90
  %v92 = vrot.slane %v91, 2
  %v93 = vmax.f32 %v91, %v92
  %v94 = vrot.slane %v93, 1
  %v95 = vmax.f32 %v93, %v94
  %v96 = vsel %vm23, %v19, -inf
  %v97 = vrot.slane %v96, 4
  %v98 = vmax.f32 %v96, %v97
  %v99 = vrot.slane %v98, 2
  %v100 = vmax.f32 %v98, %v99
  %v101 = vrot.slane %v100, 1
  %v102 = vmax.f32 %v100, %v101
  %v103 = vsel %vm23, %v15, -inf
  %v104 = vrot.slane %v103, 4
  %v105 = vmax.f32 %v103, %v104
  %v106 = vrot.slane %v105, 2
  %v107 = vmax.f32 %v105, %v106
  %v108 = vrot.slane %v107, 1
  %v109 = vmax.f32 %v107, %v108
  %v110 = vsel %vm23, %v20, -inf
  %v111 = vrot.slane %v110, 4
  %v112 = vmax.f32 %v110, %v111
  %v113 = vrot.slane %v112, 2
  %v114 = vmax.f32 %v112, %v113
  %v115 = vrot.slane %v114, 1
  %v116 = vmax.f32 %v114, %v115
  %v121 = vcombine.low %v95, %v102
  %v123 = vunpack.c.l.s4 1983009808
  %v124 = vunpack.c.0.s8 %v123
  %v125 = vlaneseq
  %v126 = vshrl.u32 %v125, 7
  %v127 = vsub.s32 %v124, %v126
  %v128 = vrot.slane %v121, %v127
  %v129 = vcombine.low %v109, %v116
  %v131 = vunpack.c.l.s4 1983009808
  %v132 = vunpack.c.0.s8 %v131
  %v133 = vlaneseq
  %v134 = vshrl.u32 %v133, 7
  %v135 = vsub.s32 %v132, %v134
  %v136 = vrot.slane %v129, %v135
  %v137 = vsel %vm72, %v128, %v128
  %v138 = vsel %vm74, %v128, %v137
  %v139 = vrot.slane %v136, 7
  %v140 = vsel %vm77, %v139, %v138
  %v141 = vsel %vm79, %v139, %v140
  %v142 = vsel %vm81, %v139, %v141
  %v143 = vsel %vm83, %v139, %v142
  %v145 = vmax.f32 %v88, %v143
  %146 = vst [vmem:[#allocation3] sm:$0xf] %v145
  // Predicated region
  $region10: #{spatial_attention_module.2} parent=0 // pred_check
    %p147 = pneg %p8
  $region11: #{spatial_attention_module.2} parent=0 // pred_check_branch
    %149 = sbr.rel (%p147) target = $region13
  $region12: #{spatial_attention_module.2} parent=0 // pred_region
    %v150 = vld [vmem:[#allocation2] sm:$0xf]
    %v151 = vmul.f32 %v150, 0.25
    %v154 = vunpack.c.l.s4 1966171168
    %v155 = vunpack.c.0.s8 %v154
    %v156 = vlaneseq
    %v157 = vshrl.u32 %v156, 7
    %v158 = vsub.s32 %v155, %v157
    %v159 = vrot.slane %v151, %v158
    %v160 = vcombine.high %v159, %v159
    %v163 = vlaneseq
    %vm164 = vcmp.ge.s32.totalorder %v163, 0
    %vm165 = vcmp.lt.s32.totalorder %v163, 256
    %vm166 = vmand %vm164, %vm165
    %167 = vst.msk [vmem:[%s1] ss:$2 sm:$0x3] %vm166, %v159
    %s168 = scalar_lea.vmem %s1, 4
    %169 = vst.msk [vmem:[%s168] ss:$2 sm:$0x3] %vm166, %v160
    %v170 = vld [vmem:[#allocation3] sm:$0xf]
    %v173 = vunpack.c.l.s4 1966171168
    %v174 = vunpack.c.0.s8 %v173
    %v175 = vlaneseq
    %v176 = vshrl.u32 %v175, 7
    %v177 = vsub.s32 %v174, %v176
    %v178 = vrot.slane %v170, %v177
    %v179 = vcombine.high %v178, %v178
    %s182 = scalar_lea.vmem %s1, 1
    %183 = vst.msk [vmem:[%s182] ss:$2 sm:$0x3] %vm166, %v178
    %s184 = scalar_lea.vmem %s1, 5
    %185 = vst.msk [vmem:[%s184] ss:$2 sm:$0x3] %vm166, %v179
  $region13: #{spatial_attention_module.2} parent=0 // pred_fallthru
    _
  // Predicated region
  $region14: #{spatial_attention_module.2} parent=0 // pred_check
    _
  $region15: #{spatial_attention_module.2} parent=0 // pred_check_branch
    %187 = sbr.rel (0) target = $region17
  $region16: #{spatial_attention_module.2} parent=0 // pred_region
    _
  $region17: #{spatial_attention_module.2} parent=0 // pred_fallthru
    _
  // Predicated region
  $region18: #{spatial_attention_module.2} parent=0 // pred_check
    _
  $region19: #{spatial_attention_module.2} parent=0 // pred_check_branch
    %189 = sbr.rel (0) target = $region21
  $region20: #{spatial_attention_module.2} parent=0 // pred_region
    _
  $region21: #{spatial_attention_module.2} parent=0 // pred_fallthru
    _

// kernel: spatial_attention_module.3
$region0: #{spatial_attention_module.3}
  #allocation0 [shape = 'u32[]', space=smem, size = 0x4, offset = 0x4, fixed_abs, tag = 'smem constant byte address 0x4 - core index']
  #allocation1 [shape = 'u32[144,128]{1,0:T(1,128)}', space=vmem, size = 0x12000, scoped, tag = 'internal scratch']
  #allocation2 [shape = 'f32[2,2,22,22]{3,2,1,0:T(8,128)}', space=vmem, size = 0xc000, scoped, tag = 'scratch operand']
  #allocation3 [shape = 'f32[1]{0:T(128)S(6)}', space=smem, size = 0x200, scoped, tag = 'scoped memory for spatial_attention_module.3']
  %s0 = inlined_call_operand.vmem [shape: f32[98], index: 0, kind: input, shape index: {}]
  %s1 = inlined_call_operand.<no memory space> [shape: f32[1], index: 1, kind: input, shape index: {}]
  %s2 = inlined_call_operand.vmem [shape: f32[2,2,16,16], index: 2, kind: input, shape index: {}]
  %s3 = inlined_call_operand.hbm [shape: f32[2,1,16,16], index: 3, kind: output, shape index: {}]
  %s4 = sld [smem:[#allocation0]]
  $region26: #{spatial_attention_module.3} parent=0
    _
  %s6 = ssub.s32 1, %s4
  %s7 = scalar_select 0, %s6, %s4
  %8 = sst [smem:[#allocation3]] %s1
  $region1: #{spatial_attention_module.3} parent=0
    #allocation4 [shape = 'u8[512]{0}', space=smem, size = 0x200, scoped, tag = 'input window, operand 0, single buffered']
    #allocation5 [shape = 's32[1]{0}', space=sflag, size = 0x4, scoped, tag = 'scoped memory for spatial_attention_module.3']
    #allocation6 [shape = 's32[1]{0}', space=sflag, size = 0x4, scoped, tag = 'scoped memory for spatial_attention_module.3']
    #allocation7 [shape = 'u8[16384]{0}', space=vmem, size = 0x4000, scoped, tag = 'output window, operand 0, single buffered']
    %9 = vsyncpa [#allocation6], 0
    %10 = vsyncpa [#allocation5], 0
    // Predicated region
    $region2: #{spatial_attention_module.3} parent=1 // pred_check
      _
    $region3: #{spatial_attention_module.3} parent=1 // pred_check_branch
      %12 = sbr.rel (0) target = $region5
    $region4: #{spatial_attention_module.3} parent=1 // pred_region
      %s14 = ssub.s32 16, 16
      %15 = vsyncadd [#allocation6], %s14
      %s17 = sshll.u32 %s0, 4
      %s18 = int_to_ptr.vmem [resolvable:$true] %s17
      %20 = dma.vmem_to_smem %s18, 16, [#allocation4], [#allocation6]
    $region5: #{spatial_attention_module.3} parent=1 // pred_fallthru
      _
    // Predicated region
    $region6: #{spatial_attention_module.3} parent=1 // pred_check
      _
    $region7: #{spatial_attention_module.3} parent=1 // pred_check_branch
      %22 = sbr.rel (0) target = $region9
    $region8: #{spatial_attention_module.3} parent=1 // pred_region
      _
    $region9: #{spatial_attention_module.3} parent=1 // pred_fallthru
      _
    // Predicated region
    $region10: #{spatial_attention_module.3} parent=1 // pred_check
      _
    $region11: #{spatial_attention_module.3} parent=1 // pred_check_branch
      %24 = sbr.rel (0) target = $region13
    $region12: #{spatial_attention_module.3} parent=1 // pred_region
      _
    $region13: #{spatial_attention_module.3} parent=1 // pred_fallthru
      _
    // Predicated region
    $region14: #{spatial_attention_module.3} parent=1 // pred_check
      _
    $region15: #{spatial_attention_module.3} parent=1 // pred_check_branch
      %26 = sbr.rel (0) target = $region17
    $region16: #{spatial_attention_module.3} parent=1 // pred_region
      %27 = dma.done [#allocation6], 16
    $region17: #{spatial_attention_module.3} parent=1 // pred_fallthru
      _
    %28 = sfence
    %vm29 = vcmask 179200
    %30 = vst.msk [vmem:[#allocation2] sm:$0xff] %vm29, 0.0
    %31 = vst.msk [vmem:[#allocation2 + $0x8] sm:$0xff] %vm29, 0.0
    %vm32 = vcmask 177152
    %33 = vst.msk [vmem:[#allocation2 + $0x10] sm:$0x3f] %vm32, 0.0
    %34 = vst.msk [vmem:[#allocation2 + $0x18] sm:$0xff] %vm29, 0.0
    %35 = vst.msk [vmem:[#allocation2 + $0x20] sm:$0xff] %vm29, 0.0
    %36 = vst.msk [vmem:[#allocation2 + $0x28] sm:$0x3f] %vm32, 0.0
    %37 = vst.msk [vmem:[#allocation2 + $0x30] sm:$0xff] %vm29, 0.0
    %38 = vst.msk [vmem:[#allocation2 + $0x38] sm:$0xff] %vm29, 0.0
    %39 = vst.msk [vmem:[#allocation2 + $0x40] sm:$0x3f] %vm32, 0.0
    %40 = vst.msk [vmem:[#allocation2 + $0x48] sm:$0xff] %vm29, 0.0
    %41 = vst.msk [vmem:[#allocation2 + $0x50] sm:$0xff] %vm29, 0.0
    %42 = vst.msk [vmem:[#allocation2 + $0x58] sm:$0x3f] %vm32, 0.0
    %v43 = vld [vmem:[%s2] sm:$0xff]
    %v44 = vld [vmem:[%s2 + $0x8] sm:$0xff]
    %v45 = vld [vmem:[%s2 + $0x10] sm:$0xff]
    %v46 = vld [vmem:[%s2 + $0x18] sm:$0xff]
    %v47 = vld [vmem:[%s2 + $0x20] sm:$0xff]
    %v48 = vld [vmem:[%s2 + $0x28] sm:$0xff]
    %v49 = vld [vmem:[%s2 + $0x30] sm:$0xff]
    %v50 = vld [vmem:[%s2 + $0x38] sm:$0xff]
    %59 = vrot.lane.b32.xlu0 %v43, 3
    %v60 = vpop.permute.xlu0 %59
    %61 = vrot.lane.b32.xlu0 %v44, 3
    %v62 = vpop.permute.xlu0 %61
    %63 = vrot.lane.b32.xlu0 %v45, 3
    %v64 = vpop.permute.xlu0 %63
    %65 = vrot.lane.b32.xlu0 %v46, 3
    %v66 = vpop.permute.xlu0 %65
    %67 = vrot.lane.b32.xlu0 %v47, 3
    %v68 = vpop.permute.xlu0 %67
    %69 = vrot.lane.b32.xlu0 %v48, 3
    %v70 = vpop.permute.xlu0 %69
    %71 = vrot.lane.b32.xlu0 %v49, 3
    %v72 = vpop.permute.xlu0 %71
    %73 = vrot.lane.b32.xlu0 %v50, 3
    %v74 = vpop.permute.xlu0 %73
    %vm83 = vcmask 154648
    %84 = vst.msk [vmem:[#allocation2 + $0x3] sm:$0xff] %vm83, %v60
    %85 = vst.msk [vmem:[#allocation2 + $0xb] sm:$0xff] %vm83, %v62
    %86 = vst.msk [vmem:[#allocation2 + $0x1b] sm:$0xff] %vm83, %v64
    %87 = vst.msk [vmem:[#allocation2 + $0x23] sm:$0xff] %vm83, %v66
    %88 = vst.msk [vmem:[#allocation2 + $0x33] sm:$0xff] %vm83, %v68
    %89 = vst.msk [vmem:[#allocation2 + $0x3b] sm:$0xff] %vm83, %v70
    %90 = vst.msk [vmem:[#allocation2 + $0x4b] sm:$0xff] %vm83, %v72
    %91 = vst.msk [vmem:[#allocation2 + $0x53] sm:$0xff] %vm83, %v74
    %s92 = sld [smem:[#allocation3]]
    %v93 = vstv %s92
    %v94 = vld [vmem:[#allocation2] sm:$0xff]
    %v95 = vld [vmem:[#allocation2 + $0x8] sm:$0xff]
    %v96 = vld [vmem:[#allocation2 + $0x30] sm:$0xff]
    %v97 = vld [vmem:[#allocation2 + $0x38] sm:$0xff]
    %s98 = sld [smem:[#allocation4]]
    %v99 = vstv %s98
    %v100 = vmul.f32 %v99, %v94
    %v101 = vmul.f32 %v99, %v95
    %v102 = vmul.f32 %v99, %v96
    %v103 = vmul.f32 %v99, %v97
    %v104 = vadd.f32 %v93, %v100
    %v105 = vadd.f32 %v93, %v101
    %v106 = vadd.f32 %v93, %v102
    %v107 = vadd.f32 %v93, %v103
    %s108 = sld [smem:[#allocation4 + $0x1]]
    %v109 = vstv %s108
    %v110 = vmul.f32 %v109, %v94
    %v111 = vmul.f32 %v109, %v95
    %v112 = vmul.f32 %v109, %v96
    %v113 = vmul.f32 %v109, %v97
    %118 = vrot.lane.b32.xlu0 %v110, 127
    %v119 = vpop.permute.xlu0 %118
    %120 = vrot.lane.b32.xlu0 %v111, 127
    %v121 = vpop.permute.xlu0 %120
    %122 = vrot.lane.b32.xlu0 %v112, 127
    %v123 = vpop.permute.xlu0 %122
    %124 = vrot.lane.b32.xlu0 %v113, 127
    %v125 = vpop.permute.xlu0 %124
    %v130 = vadd.f32 %v104, %v119
    %v131 = vadd.f32 %v105, %v121
    %v132 = vadd.f32 %v106, %v123
    %v133 = vadd.f32 %v107, %v125
    %s134 = sld [smem:[#allocation4 + $0x2]]
    %v135 = vstv %s134
    %v136 = vmul.f32 %v135, %v94
    %v137 = vmul.f32 %v135, %v95
    %v138 = vmul.f32 %v135, %v96
    %v139 = vmul.f32 %v135, %v97
    %144 = vrot.lane.b32.xlu0 %v136, 126
    %v145 = vpop.permute.xlu0 %144
    %146 = vrot.lane.b32.xlu0 %v137, 126
    %v147 = vpop.permute.xlu0 %146
    %148 = vrot.lane.b32.xlu0 %v138, 126
    %v149 = vpop.permute.xlu0 %148
    %150 = vrot.lane.b32.xlu0 %v139, 126
    %v151 = vpop.permute.xlu0 %150
    %v156 = vadd.f32 %v130, %v145
    %v157 = vadd.f32 %v131, %v147
    %v158 = vadd.f32 %v132, %v149
    %v159 = vadd.f32 %v133, %v151
    %s160 = sld [smem:[#allocation4 + $0x3]]
    %v161 = vstv %s160
    %v162 = vmul.f32 %v161, %v94
    %v163 = vmul.f32 %v161, %v95
    %v164 = vmul.f32 %v161, %v96
    %v165 = vmul.f32 %v161, %v97
    %170 = vrot.lane.b32.xlu0 %v162, 125
    %v171 = vpop.permute.xlu0 %170
    %172 = vrot.lane.b32.xlu0 %v163, 125
    %v173 = vpop.permute.xlu0 %172
    %174 = vrot.lane.b32.xlu0 %v164, 125
    %v175 = vpop.permute.xlu0 %174
    %176 = vrot.lane.b32.xlu0 %v165, 125
    %v177 = vpop.permute.xlu0 %176
    %v182 = vadd.f32 %v156, %v171
    %v183 = vadd.f32 %v157, %v173
    %v184 = vadd.f32 %v158, %v175
    %v185 = vadd.f32 %v159, %v177
    %s186 = sld [smem:[#allocation4 + $0x4]]
    %v187 = vstv %s186
    %v188 = vmul.f32 %v187, %v94
    %v189 = vmul.f32 %v187, %v95
    %v190 = vmul.f32 %v187, %v96
    %v191 = vmul.f32 %v187, %v97
    %196 = vrot.lane.b32.xlu0 %v188, 124
    %v197 = vpop.permute.xlu0 %196
    %198 = vrot.lane.b32.xlu0 %v189, 124
    %v199 = vpop.permute.xlu0 %198
    %200 = vrot.lane.b32.xlu0 %v190, 124
    %v201 = vpop.permute.xlu0 %200
    %202 = vrot.lane.b32.xlu0 %v191, 124
    %v203 = vpop.permute.xlu0 %202
    %v208 = vadd.f32 %v182, %v197
    %v209 = vadd.f32 %v183, %v199
    %v210 = vadd.f32 %v184, %v201
    %v211 = vadd.f32 %v185, %v203
    %s212 = sld [smem:[#allocation4 + $0x5]]
    %v213 = vstv %s212
    %v214 = vmul.f32 %v213, %v94
    %v215 = vmul.f32 %v213, %v95
    %v216 = vmul.f32 %v213, %v96
    %v217 = vmul.f32 %v213, %v97
    %222 = vrot.lane.b32.xlu0 %v214, 123
    %v223 = vpop.permute.xlu0 %222
    %224 = vrot.lane.b32.xlu0 %v215, 123
    %v225 = vpop.permute.xlu0 %224
    %226 = vrot.lane.b32.xlu0 %v216, 123
    %v227 = vpop.permute.xlu0 %226
    %228 = vrot.lane.b32.xlu0 %v217, 123
    %v229 = vpop.permute.xlu0 %228
    %v234 = vadd.f32 %v208, %v223
    %v235 = vadd.f32 %v209, %v225
    %v236 = vadd.f32 %v210, %v227
    %v237 = vadd.f32 %v211, %v229
    %s238 = sld [smem:[#allocation4 + $0x6]]
    %v239 = vstv %s238
    %v240 = vmul.f32 %v239, %v94
    %v241 = vmul.f32 %v239, %v95
    %v242 = vmul.f32 %v239, %v96
    %v243 = vmul.f32 %v239, %v97
    %248 = vrot.lane.b32.xlu0 %v240, 122
    %v249 = vpop.permute.xlu0 %248
    %250 = vrot.lane.b32.xlu0 %v241, 122
    %v251 = vpop.permute.xlu0 %250
    %252 = vrot.lane.b32.xlu0 %v242, 122
    %v253 = vpop.permute.xlu0 %252
    %254 = vrot.lane.b32.xlu0 %v243, 122
    %v255 = vpop.permute.xlu0 %254
    %v260 = vadd.f32 %v234, %v249
    %v261 = vadd.f32 %v235, %v251
    %v262 = vadd.f32 %v236, %v253
    %v263 = vadd.f32 %v237, %v255
    %v264 = vld [vmem:[#allocation2 + $0x1] sm:$0xff]
    %v265 = vld [vmem:[#allocation2 + $0x9] sm:$0xff]
    %v266 = vld [vmem:[#allocation2 + $0x31] sm:$0xff]
    %v267 = vld [vmem:[#allocation2 + $0x39] sm:$0xff]
    %s268 = sld [smem:[#allocation4 + $0x7]]
    %v269 = vstv %s268
    %v270 = vmul.f32 %v269, %v264
    %v271 = vmul.f32 %v269, %v265
    %v272 = vmul.f32 %v269, %v266
    %v273 = vmul.f32 %v269, %v267
    %v274 = vadd.f32 %v260, %v270
    %v275 = vadd.f32 %v261, %v271
    %v276 = vadd.f32 %v262, %v272
    %v277 = vadd.f32 %v263, %v273
    %s278 = sld [smem:[#allocation4 + $0x8]]
    %v279 = vstv %s278
    %v280 = vmul.f32 %v279, %v264
    %v281 = vmul.f32 %v279, %v265
    %v282 = vmul.f32 %v279, %v266
    %v283 = vmul.f32 %v279, %v267
    %288 = vrot.lane.b32.xlu0 %v280, 127
    %v289 = vpop.permute.xlu0 %288
    %290 = vrot.lane.b32.xlu0 %v281, 127
    %v291 = vpop.permute.xlu0 %290
    %292 = vrot.lane.b32.xlu0 %v282, 127
    %v293 = vpop.permute.xlu0 %292
    %294 = vrot.lane.b32.xlu0 %v283, 127
    %v295 = vpop.permute.xlu0 %294
    %v300 = vadd.f32 %v274, %v289
    %v301 = vadd.f32 %v275, %v291
    %v302 = vadd.f32 %v276, %v293
    %v303 = vadd.f32 %v277, %v295
    %s304 = sld [smem:[#allocation4 + $0x9]]
    %v305 = vstv %s304
    %v306 = vmul.f32 %v305, %v264
    %v307 = vmul.f32 %v305, %v265
    %v308 = vmul.f32 %v305, %v266
    %v309 = vmul.f32 %v305, %v267
    %314 = vrot.lane.b32.xlu0 %v306, 126
    %v315 = vpop.permute.xlu0 %314
    %316 = vrot.lane.b32.xlu0 %v307, 126
    %v317 = vpop.permute.xlu0 %316
    %318 = vrot.lane.b32.xlu0 %v308, 126
    %v319 = vpop.permute.xlu0 %318
    %320 = vrot.lane.b32.xlu0 %v309, 126
    %v321 = vpop.permute.xlu0 %320
    %v326 = vadd.f32 %v300, %v315
    %v327 = vadd.f32 %v301, %v317
    %v328 = vadd.f32 %v302, %v319
    %v329 = vadd.f32 %v303, %v321
    %s330 = sld [smem:[#allocation4 + $0xa]]
    %v331 = vstv %s330
    %v332 = vmul.f32 %v331, %v264
    %v333 = vmul.f32 %v331, %v265
    %v334 = vmul.f32 %v331, %v266
    %v335 = vmul.f32 %v331, %v267
    %340 = vrot.lane.b32.xlu0 %v332, 125
    %v341 = vpop.permute.xlu0 %340
    %342 = vrot.lane.b32.xlu0 %v333, 125
    %v343 = vpop.permute.xlu0 %342
    %344 = vrot.lane.b32.xlu0 %v334, 125
    %v345 = vpop.permute.xlu0 %344
    %346 = vrot.lane.b32.xlu0 %v335, 125
    %v347 = vpop.permute.xlu0 %346
    %v352 = vadd.f32 %v326, %v341
    %v353 = vadd.f32 %v327, %v343
    %v354 = vadd.f32 %v328, %v345
    %v355 = vadd.f32 %v329, %v347
    %s356 = sld [smem:[#allocation4 + $0xb]]
    %v357 = vstv %s356
    %v358 = vmul.f32 %v357, %v264
    %v359 = vmul.f32 %v357, %v265
    %v360 = vmul.f32 %v357, %v266
    %v361 = vmul.f32 %v357, %v267
    %366 = vrot.lane.b32.xlu0 %v358, 124
    %v367 = vpop.permute.xlu0 %366
    %368 = vrot.lane.b32.xlu0 %v359, 124
    %v369 = vpop.permute.xlu0 %368
    %370 = vrot.lane.b32.xlu0 %v360, 124
    %v371 = vpop.permute.xlu0 %370
    %372 = vrot.lane.b32.xlu0 %v361, 124
    %v373 = vpop.permute.xlu0 %372
    %v378 = vadd.f32 %v352, %v367
    %v379 = vadd.f32 %v353, %v369
    %v380 = vadd.f32 %v354, %v371
    %v381 = vadd.f32 %v355, %v373
    %s382 = sld [smem:[#allocation4 + $0xc]]
    %v383 = vstv %s382
    %v384 = vmul.f32 %v383, %v264
    %v385 = vmul.f32 %v383, %v265
    %v386 = vmul.f32 %v383, %v266
    %v387 = vmul.f32 %v383, %v267
    %392 = vrot.lane.b32.xlu0 %v384, 123
    %v393 = vpop.permute.xlu0 %392
    %394 = vrot.lane.b32.xlu0 %v385, 123
    %v395 = vpop.permute.xlu0 %394
    %396 = vrot.lane.b32.xlu0 %v386, 123
    %v397 = vpop.permute.xlu0 %396
    %398 = vrot.lane.b32.xlu0 %v387, 123
    %v399 = vpop.permute.xlu0 %398
    %v404 = vadd.f32 %v378, %v393
    %v405 = vadd.f32 %v379, %v395
    %v406 = vadd.f32 %v380, %v397
    %v407 = vadd.f32 %v381, %v399
    %s408 = sld [smem:[#allocation4 + $0xd]]
    %v409 = vstv %s408
    %v410 = vmul.f32 %v409, %v264
    %v411 = vmul.f32 %v409, %v265
    %v412 = vmul.f32 %v409, %v266
    %v413 = vmul.f32 %v409, %v267
    %418 = vrot.lane.b32.xlu0 %v410, 122
    %v419 = vpop.permute.xlu0 %418
    %420 = vrot.lane.b32.xlu0 %v411, 122
    %v421 = vpop.permute.xlu0 %420
    %422 = vrot.lane.b32.xlu0 %v412, 122
    %v423 = vpop.permute.xlu0 %422
    %424 = vrot.lane.b32.xlu0 %v413, 122
    %v425 = vpop.permute.xlu0 %424
    %v430 = vadd.f32 %v404, %v419
    %v431 = vadd.f32 %v405, %v421
    %v432 = vadd.f32 %v406, %v423
    %v433 = vadd.f32 %v407, %v425
    %v434 = vld [vmem:[#allocation2 + $0x2] sm:$0xff]
    %v435 = vld [vmem:[#allocation2 + $0xa] sm:$0xff]
    %v436 = vld [vmem:[#allocation2 + $0x32] sm:$0xff]
    %v437 = vld [vmem:[#allocation2 + $0x3a] sm:$0xff]
    %s438 = sld [smem:[#allocation4 + $0xe]]
    %v439 = vstv %s438
    %v440 = vmul.f32 %v439, %v434
    %v441 = vmul.f32 %v439, %v435
    %v442 = vmul.f32 %v439, %v436
    %v443 = vmul.f32 %v439, %v437
    %v444 = vadd.f32 %v430, %v440
    %v445 = vadd.f32 %v431, %v441
    %v446 = vadd.f32 %v432, %v442
    %v447 = vadd.f32 %v433, %v443
    %s448 = sld [smem:[#allocation4 + $0xf]]
    %v449 = vstv %s448
    %v450 = vmul.f32 %v449, %v434
    %v451 = vmul.f32 %v449, %v435
    %v452 = vmul.f32 %v449, %v436
    %v453 = vmul.f32 %v449, %v437
    %458 = vrot.lane.b32.xlu0 %v450, 127
    %v459 = vpop.permute.xlu0 %458
    %460 = vrot.lane.b32.xlu0 %v451, 127
    %v461 = vpop.permute.xlu0 %460
    %462 = vrot.lane.b32.xlu0 %v452, 127
    %v463 = vpop.permute.xlu0 %462
    %464 = vrot.lane.b32.xlu0 %v453, 127
    %v465 = vpop.permute.xlu0 %464
    %v470 = vadd.f32 %v444, %v459
    %v471 = vadd.f32 %v445, %v461
    %v472 = vadd.f32 %v446, %v463
    %v473 = vadd.f32 %v447, %v465
    %s474 = sld [smem:[#allocation4 + $0x10]]
    %v475 = vstv %s474
    %v476 = vmul.f32 %v475, %v434
    %v477 = vmul.f32 %v475, %v435
    %v478 = vmul.f32 %v475, %v436
    %v479 = vmul.f32 %v475, %v437
    %484 = vrot.lane.b32.xlu0 %v476, 126
    %v485 = vpop.permute.xlu0 %484
    %486 = vrot.lane.b32.xlu0 %v477, 126
    %v487 = vpop.permute.xlu0 %486
    %488 = vrot.lane.b32.xlu0 %v478, 126
    %v489 = vpop.permute.xlu0 %488
    %490 = vrot.lane.b32.xlu0 %v479, 126
    %v491 = vpop.permute.xlu0 %490
    %v496 = vadd.f32 %v470, %v485
    %v497 = vadd.f32 %v471, %v487
    %v498 = vadd.f32 %v472, %v489
    %v499 = vadd.f32 %v473, %v491
    %s500 = sld [smem:[#allocation4 + $0x11]]
    %v501 = vstv %s500
    %v502 = vmul.f32 %v501, %v434
    %v503 = vmul.f32 %v501, %v435
    %v504 = vmul.f32 %v501, %v436
    %v505 = vmul.f32 %v501, %v437
    %510 = vrot.lane.b32.xlu0 %v502, 125
    %v511 = vpop.permute.xlu0 %510
    %512 = vrot.lane.b32.xlu0 %v503, 125
    %v513 = vpop.permute.xlu0 %512
    %514 = vrot.lane.b32.xlu0 %v504, 125
    %v515 = vpop.permute.xlu0 %514
    %516 = vrot.lane.b32.xlu0 %v505, 125
    %v517 = vpop.permute.xlu0 %516
    %v522 = vadd.f32 %v496, %v511
    %v523 = vadd.f32 %v497, %v513
    %v524 = vadd.f32 %v498, %v515
    %v525 = vadd.f32 %v499, %v517
    %s526 = sld [smem:[#allocation4 + $0x12]]
    %v527 = vstv %s526
    %v528 = vmul.f32 %v527, %v434
    %v529 = vmul.f32 %v527, %v435
    %v530 = vmul.f32 %v527, %v436
    %v531 = vmul.f32 %v527, %v437
    %536 = vrot.lane.b32.xlu0 %v528, 124
    %v537 = vpop.permute.xlu0 %536
    %538 = vrot.lane.b32.xlu0 %v529, 124
    %v539 = vpop.permute.xlu0 %538
    %540 = vrot.lane.b32.xlu0 %v530, 124
    %v541 = vpop.permute.xlu0 %540
    %542 = vrot.lane.b32.xlu0 %v531, 124
    %v543 = vpop.permute.xlu0 %542
    %v548 = vadd.f32 %v522, %v537
    %v549 = vadd.f32 %v523, %v539
    %v550 = vadd.f32 %v524, %v541
    %v551 = vadd.f32 %v525, %v543
    %s552 = sld [smem:[#allocation4 + $0x13]]
    %v553 = vstv %s552
    %v554 = vmul.f32 %v553, %v434
    %v555 = vmul.f32 %v553, %v435
    %v556 = vmul.f32 %v553, %v436
    %v557 = vmul.f32 %v553, %v437
    %562 = vrot.lane.b32.xlu0 %v554, 123
    %v563 = vpop.permute.xlu0 %562
    %564 = vrot.lane.b32.xlu0 %v555, 123
    %v565 = vpop.permute.xlu0 %564
    %566 = vrot.lane.b32.xlu0 %v556, 123
    %v567 = vpop.permute.xlu0 %566
    %568 = vrot.lane.b32.xlu0 %v557, 123
    %v569 = vpop.permute.xlu0 %568
    %v574 = vadd.f32 %v548, %v563
    %v575 = vadd.f32 %v549, %v565
    %v576 = vadd.f32 %v550, %v567
    %v577 = vadd.f32 %v551, %v569
    %s578 = sld [smem:[#allocation4 + $0x14]]
    %v579 = vstv %s578
    %v580 = vmul.f32 %v579, %v434
    %v581 = vmul.f32 %v579, %v435
    %v582 = vmul.f32 %v579, %v436
    %v583 = vmul.f32 %v579, %v437
    %588 = vrot.lane.b32.xlu0 %v580, 122
    %v589 = vpop.permute.xlu0 %588
    %590 = vrot.lane.b32.xlu0 %v581, 122
    %v591 = vpop.permute.xlu0 %590
    %592 = vrot.lane.b32.xlu0 %v582, 122
    %v593 = vpop.permute.xlu0 %592
    %594 = vrot.lane.b32.xlu0 %v583, 122
    %v595 = vpop.permute.xlu0 %594
    %v600 = vadd.f32 %v574, %v589
    %v601 = vadd.f32 %v575, %v591
    %v602 = vadd.f32 %v576, %v593
    %v603 = vadd.f32 %v577, %v595
    %v604 = vld [vmem:[#allocation2 + $0x3] sm:$0xff]
    %v605 = vld [vmem:[#allocation2 + $0xb] sm:$0xff]
    %v606 = vld [vmem:[#allocation2 + $0x33] sm:$0xff]
    %v607 = vld [vmem:[#allocation2 + $0x3b] sm:$0xff]
    %s608 = sld [smem:[#allocation4 + $0x15]]
    %v609 = vstv %s608
    %v610 = vmul.f32 %v609, %v604
    %v611 = vmul.f32 %v609, %v605
    %v612 = vmul.f32 %v609, %v606
    %v613 = vmul.f32 %v609, %v607
    %v614 = vadd.f32 %v600, %v610
    %v615 = vadd.f32 %v601, %v611
    %v616 = vadd.f32 %v602, %v612
    %v617 = vadd.f32 %v603, %v613
    %s618 = sld [smem:[#allocation4 + $0x16]]
    %v619 = vstv %s618
    %v620 = vmul.f32 %v619, %v604
    %v621 = vmul.f32 %v619, %v605
    %v622 = vmul.f32 %v619, %v606
    %v623 = vmul.f32 %v619, %v607
    %628 = vrot.lane.b32.xlu0 %v620, 127
    %v629 = vpop.permute.xlu0 %628
    %630 = vrot.lane.b32.xlu0 %v621, 127
    %v631 = vpop.permute.xlu0 %630
    %632 = vrot.lane.b32.xlu0 %v622, 127
    %v633 = vpop.permute.xlu0 %632
    %634 = vrot.lane.b32.xlu0 %v623, 127
    %v635 = vpop.permute.xlu0 %634
    %v640 = vadd.f32 %v614, %v629
    %v641 = vadd.f32 %v615, %v631
    %v642 = vadd.f32 %v616, %v633
    %v643 = vadd.f32 %v617, %v635
    %s644 = sld [smem:[#allocation4 + $0x17]]
    %v645 = vstv %s644
    %v646 = vmul.f32 %v645, %v604
    %v647 = vmul.f32 %v645, %v605
    %v648 = vmul.f32 %v645, %v606
    %v649 = vmul.f32 %v645, %v607
    %654 = vrot.lane.b32.xlu0 %v646, 126
    %v655 = vpop.permute.xlu0 %654
    %656 = vrot.lane.b32.xlu0 %v647, 126
    %v657 = vpop.permute.xlu0 %656
    %658 = vrot.lane.b32.xlu0 %v648, 126
    %v659 = vpop.permute.xlu0 %658
    %660 = vrot.lane.b32.xlu0 %v649, 126
    %v661 = vpop.permute.xlu0 %660
    %v666 = vadd.f32 %v640, %v655
    %v667 = vadd.f32 %v641, %v657
    %v668 = vadd.f32 %v642, %v659
    %v669 = vadd.f32 %v643, %v661
    %s670 = sld [smem:[#allocation4 + $0x18]]
    %v671 = vstv %s670
    %v672 = vmul.f32 %v671, %v604
    %v673 = vmul.f32 %v671, %v605
    %v674 = vmul.f32 %v671, %v606
    %v675 = vmul.f32 %v671, %v607
    %680 = vrot.lane.b32.xlu0 %v672, 125
    %v681 = vpop.permute.xlu0 %680
    %682 = vrot.lane.b32.xlu0 %v673, 125
    %v683 = vpop.permute.xlu0 %682
    %684 = vrot.lane.b32.xlu0 %v674, 125
    %v685 = vpop.permute.xlu0 %684
    %686 = vrot.lane.b32.xlu0 %v675, 125
    %v687 = vpop.permute.xlu0 %686
    %v692 = vadd.f32 %v666, %v681
    %v693 = vadd.f32 %v667, %v683
    %v694 = vadd.f32 %v668, %v685
    %v695 = vadd.f32 %v669, %v687
    %s696 = sld [smem:[#allocation4 + $0x19]]
    %v697 = vstv %s696
    %v698 = vmul.f32 %v697, %v604
    %v699 = vmul.f32 %v697, %v605
    %v700 = vmul.f32 %v697, %v606
    %v701 = vmul.f32 %v697, %v607
    %706 = vrot.lane.b32.xlu0 %v698, 124
    %v707 = vpop.permute.xlu0 %706
    %708 = vrot.lane.b32.xlu0 %v699, 124
    %v709 = vpop.permute.xlu0 %708
    %710 = vrot.lane.b32.xlu0 %v700, 124
    %v711 = vpop.permute.xlu0 %710
    %712 = vrot.lane.b32.xlu0 %v701, 124
    %v713 = vpop.permute.xlu0 %712
    %v718 = vadd.f32 %v692, %v707
    %v719 = vadd.f32 %v693, %v709
    %v720 = vadd.f32 %v694, %v711
    %v721 = vadd.f32 %v695, %v713
    %s722 = sld [smem:[#allocation4 + $0x1a]]
    %v723 = vstv %s722
    %v724 = vmul.f32 %v723, %v604
    %v725 = vmul.f32 %v723, %v605
    %v726 = vmul.f32 %v723, %v606
    %v727 = vmul.f32 %v723, %v607
    %732 = vrot.lane.b32.xlu0 %v724, 123
    %v733 = vpop.permute.xlu0 %732
    %734 = vrot.lane.b32.xlu0 %v725, 123
    %v735 = vpop.permute.xlu0 %734
    %736 = vrot.lane.b32.xlu0 %v726, 123
    %v737 = vpop.permute.xlu0 %736
    %738 = vrot.lane.b32.xlu0 %v727, 123
    %v739 = vpop.permute.xlu0 %738
    %v744 = vadd.f32 %v718, %v733
    %v745 = vadd.f32 %v719, %v735
    %v746 = vadd.f32 %v720, %v737
    %v747 = vadd.f32 %v721, %v739
    %s748 = sld [smem:[#allocation4 + $0x1b]]
    %v749 = vstv %s748
    %v750 = vmul.f32 %v749, %v604
    %v751 = vmul.f32 %v749, %v605
    %v752 = vmul.f32 %v749, %v606
    %v753 = vmul.f32 %v749, %v607
    %758 = vrot.lane.b32.xlu0 %v750, 122
    %v759 = vpop.permute.xlu0 %758
    %760 = vrot.lane.b32.xlu0 %v751, 122
    %v761 = vpop.permute.xlu0 %760
    %762 = vrot.lane.b32.xlu0 %v752, 122
    %v763 = vpop.permute.xlu0 %762
    %764 = vrot.lane.b32.xlu0 %v753, 122
    %v765 = vpop.permute.xlu0 %764
    %v770 = vadd.f32 %v744, %v759
    %v771 = vadd.f32 %v745, %v761
    %v772 = vadd.f32 %v746, %v763
    %v773 = vadd.f32 %v747, %v765
    %v774 = vld [vmem:[#allocation2 + $0x4] sm:$0xff]
    %v775 = vld [vmem:[#allocation2 + $0xc] sm:$0xff]
    %v776 = vld [vmem:[#allocation2 + $0x34] sm:$0xff]
    %v777 = vld [vmem:[#allocation2 + $0x3c] sm:$0xff]
    %s778 = sld [smem:[#allocation4 + $0x1c]]
    %v779 = vstv %s778
    %v780 = vmul.f32 %v779, %v774
    %v781 = vmul.f32 %v779, %v775
    %v782 = vmul.f32 %v779, %v776
    %v783 = vmul.f32 %v779, %v777
    %v784 = vadd.f32 %v770, %v780
    %v785 = vadd.f32 %v771, %v781
    %v786 = vadd.f32 %v772, %v782
    %v787 = vadd.f32 %v773, %v783
    %s788 = sld [smem:[#allocation4 + $0x1d]]
    %v789 = vstv %s788
    %v790 = vmul.f32 %v789, %v774
    %v791 = vmul.f32 %v789, %v775
    %v792 = vmul.f32 %v789, %v776
    %v793 = vmul.f32 %v789, %v777
    %798 = vrot.lane.b32.xlu0 %v790, 127
    %v799 = vpop.permute.xlu0 %798
    %800 = vrot.lane.b32.xlu0 %v791, 127
    %v801 = vpop.permute.xlu0 %800
    %802 = vrot.lane.b32.xlu0 %v792, 127
    %v803 = vpop.permute.xlu0 %802
    %804 = vrot.lane.b32.xlu0 %v793, 127
    %v805 = vpop.permute.xlu0 %804
    %v810 = vadd.f32 %v784, %v799
    %v811 = vadd.f32 %v785, %v801
    %v812 = vadd.f32 %v786, %v803
    %v813 = vadd.f32 %v787, %v805
    %s814 = sld [smem:[#allocation4 + $0x1e]]
    %v815 = vstv %s814
    %v816 = vmul.f32 %v815, %v774
    %v817 = vmul.f32 %v815, %v775
    %v818 = vmul.f32 %v815, %v776
    %v819 = vmul.f32 %v815, %v777
    %824 = vrot.lane.b32.xlu0 %v816, 126
    %v825 = vpop.permute.xlu0 %824
    %826 = vrot.lane.b32.xlu0 %v817, 126
    %v827 = vpop.permute.xlu0 %826
    %828 = vrot.lane.b32.xlu0 %v818, 126
    %v829 = vpop.permute.xlu0 %828
    %830 = vrot.lane.b32.xlu0 %v819, 126
    %v831 = vpop.permute.xlu0 %830
    %v836 = vadd.f32 %v810, %v825
    %v837 = vadd.f32 %v811, %v827
    %v838 = vadd.f32 %v812, %v829
    %v839 = vadd.f32 %v813, %v831
    %s840 = sld [smem:[#allocation4 + $0x1f]]
    %v841 = vstv %s840
    %v842 = vmul.f32 %v841, %v774
    %v843 = vmul.f32 %v841, %v775
    %v844 = vmul.f32 %v841, %v776
    %v845 = vmul.f32 %v841, %v777
    %850 = vrot.lane.b32.xlu0 %v842, 125
    %v851 = vpop.permute.xlu0 %850
    %852 = vrot.lane.b32.xlu0 %v843, 125
    %v853 = vpop.permute.xlu0 %852
    %854 = vrot.lane.b32.xlu0 %v844, 125
    %v855 = vpop.permute.xlu0 %854
    %856 = vrot.lane.b32.xlu0 %v845, 125
    %v857 = vpop.permute.xlu0 %856
    %v862 = vadd.f32 %v836, %v851
    %v863 = vadd.f32 %v837, %v853
    %v864 = vadd.f32 %v838, %v855
    %v865 = vadd.f32 %v839, %v857
    %s866 = sld [smem:[#allocation4 + $0x20]]
    %v867 = vstv %s866
    %v868 = vmul.f32 %v867, %v774
    %v869 = vmul.f32 %v867, %v775
    %v870 = vmul.f32 %v867, %v776
    %v871 = vmul.f32 %v867, %v777
    %876 = vrot.lane.b32.xlu0 %v868, 124
    %v877 = vpop.permute.xlu0 %876
    %878 = vrot.lane.b32.xlu0 %v869, 124
    %v879 = vpop.permute.xlu0 %878
    %880 = vrot.lane.b32.xlu0 %v870, 124
    %v881 = vpop.permute.xlu0 %880
    %882 = vrot.lane.b32.xlu0 %v871, 124
    %v883 = vpop.permute.xlu0 %882
    %v888 = vadd.f32 %v862, %v877
    %v889 = vadd.f32 %v863, %v879
    %v890 = vadd.f32 %v864, %v881
    %v891 = vadd.f32 %v865, %v883
    %s892 = sld [smem:[#allocation4 + $0x21]]
    %v893 = vstv %s892
    %v894 = vmul.f32 %v893, %v774
    %v895 = vmul.f32 %v893, %v775
    %v896 = vmul.f32 %v893, %v776
    %v897 = vmul.f32 %v893, %v777
    %902 = vrot.lane.b32.xlu0 %v894, 123
    %v903 = vpop.permute.xlu0 %902
    %904 = vrot.lane.b32.xlu0 %v895, 123
    %v905 = vpop.permute.xlu0 %904
    %906 = vrot.lane.b32.xlu0 %v896, 123
    %v907 = vpop.permute.xlu0 %906
    %908 = vrot.lane.b32.xlu0 %v897, 123
    %v909 = vpop.permute.xlu0 %908
    %v914 = vadd.f32 %v888, %v903
    %v915 = vadd.f32 %v889, %v905
    %v916 = vadd.f32 %v890, %v907
    %v917 = vadd.f32 %v891, %v909
    %s918 = sld [smem:[#allocation4 + $0x22]]
    %v919 = vstv %s918
    %v920 = vmul.f32 %v919, %v774
    %v921 = vmul.f32 %v919, %v775
    %v922 = vmul.f32 %v919, %v776
    %v923 = vmul.f32 %v919, %v777
    %928 = vrot.lane.b32.xlu0 %v920, 122
    %v929 = vpop.permute.xlu0 %928
    %930 = vrot.lane.b32.xlu0 %v921, 122
    %v931 = vpop.permute.xlu0 %930
    %932 = vrot.lane.b32.xlu0 %v922, 122
    %v933 = vpop.permute.xlu0 %932
    %934 = vrot.lane.b32.xlu0 %v923, 122
    %v935 = vpop.permute.xlu0 %934
    %v940 = vadd.f32 %v914, %v929
    %v941 = vadd.f32 %v915, %v931
    %v942 = vadd.f32 %v916, %v933
    %v943 = vadd.f32 %v917, %v935
    %v944 = vld [vmem:[#allocation2 + $0x5] sm:$0xff]
    %v945 = vld [vmem:[#allocation2 + $0xd] sm:$0xff]
    %v946 = vld [vmem:[#allocation2 + $0x35] sm:$0xff]
    %v947 = vld [vmem:[#allocation2 + $0x3d] sm:$0xff]
    %s948 = sld [smem:[#allocation4 + $0x23]]
    %v949 = vstv %s948
    %v950 = vmul.f32 %v949, %v944
    %v951 = vmul.f32 %v949, %v945
    %v952 = vmul.f32 %v949, %v946
    %v953 = vmul.f32 %v949, %v947
    %v954 = vadd.f32 %v940, %v950
    %v955 = vadd.f32 %v941, %v951
    %v956 = vadd.f32 %v942, %v952
    %v957 = vadd.f32 %v943, %v953
    %s958 = sld [smem:[#allocation4 + $0x24]]
    %v959 = vstv %s958
    %v960 = vmul.f32 %v959, %v944
    %v961 = vmul.f32 %v959, %v945
    %v962 = vmul.f32 %v959, %v946
    %v963 = vmul.f32 %v959, %v947
    %968 = vrot.lane.b32.xlu0 %v960, 127
    %v969 = vpop.permute.xlu0 %968
    %970 = vrot.lane.b32.xlu0 %v961, 127
    %v971 = vpop.permute.xlu0 %970
    %972 = vrot.lane.b32.xlu0 %v962, 127
    %v973 = vpop.permute.xlu0 %972
    %974 = vrot.lane.b32.xlu0 %v963, 127
    %v975 = vpop.permute.xlu0 %974
    %v980 = vadd.f32 %v954, %v969
    %v981 = vadd.f32 %v955, %v971
    %v982 = vadd.f32 %v956, %v973
    %v983 = vadd.f32 %v957, %v975
    %s984 = sld [smem:[#allocation4 + $0x25]]
    %v985 = vstv %s984
    %v986 = vmul.f32 %v985, %v944
    %v987 = vmul.f32 %v985, %v945
    %v988 = vmul.f32 %v985, %v946
    %v989 = vmul.f32 %v985, %v947
    %994 = vrot.lane.b32.xlu0 %v986, 126
    %v995 = vpop.permute.xlu0 %994
    %996 = vrot.lane.b32.xlu0 %v987, 126
    %v997 = vpop.permute.xlu0 %996
    %998 = vrot.lane.b32.xlu0 %v988, 126
    %v999 = vpop.permute.xlu0 %998
    %1000 = vrot.lane.b32.xlu0 %v989, 126
    %v1001 = vpop.permute.xlu0 %1000
    %v1006 = vadd.f32 %v980, %v995
    %v1007 = vadd.f32 %v981, %v997
    %v1008 = vadd.f32 %v982, %v999
    %v1009 = vadd.f32 %v983, %v1001
    %s1010 = sld [smem:[#allocation4 + $0x26]]
    %v1011 = vstv %s1010
    %v1012 = vmul.f32 %v1011, %v944
    %v1013 = vmul.f32 %v1011, %v945
    %v1014 = vmul.f32 %v1011, %v946
    %v1015 = vmul.f32 %v1011, %v947
    %1020 = vrot.lane.b32.xlu0 %v1012, 125
    %v1021 = vpop.permute.xlu0 %1020
    %1022 = vrot.lane.b32.xlu0 %v1013, 125
    %v1023 = vpop.permute.xlu0 %1022
    %1024 = vrot.lane.b32.xlu0 %v1014, 125
    %v1025 = vpop.permute.xlu0 %1024
    %1026 = vrot.lane.b32.xlu0 %v1015, 125
    %v1027 = vpop.permute.xlu0 %1026
    %v1032 = vadd.f32 %v1006, %v1021
    %v1033 = vadd.f32 %v1007, %v1023
    %v1034 = vadd.f32 %v1008, %v1025
    %v1035 = vadd.f32 %v1009, %v1027
    %s1036 = sld [smem:[#allocation4 + $0x27]]
    %v1037 = vstv %s1036
    %v1038 = vmul.f32 %v1037, %v944
    %v1039 = vmul.f32 %v1037, %v945
    %v1040 = vmul.f32 %v1037, %v946
    %v1041 = vmul.f32 %v1037, %v947
    %1046 = vrot.lane.b32.xlu0 %v1038, 124
    %v1047 = vpop.permute.xlu0 %1046
    %1048 = vrot.lane.b32.xlu0 %v1039, 124
    %v1049 = vpop.permute.xlu0 %1048
    %1050 = vrot.lane.b32.xlu0 %v1040, 124
    %v1051 = vpop.permute.xlu0 %1050
    %1052 = vrot.lane.b32.xlu0 %v1041, 124
    %v1053 = vpop.permute.xlu0 %1052
    %v1058 = vadd.f32 %v1032, %v1047
    %v1059 = vadd.f32 %v1033, %v1049
    %v1060 = vadd.f32 %v1034, %v1051
    %v1061 = vadd.f32 %v1035, %v1053
    %s1062 = sld [smem:[#allocation4 + $0x28]]
    %v1063 = vstv %s1062
    %v1064 = vmul.f32 %v1063, %v944
    %v1065 = vmul.f32 %v1063, %v945
    %v1066 = vmul.f32 %v1063, %v946
    %v1067 = vmul.f32 %v1063, %v947
    %1072 = vrot.lane.b32.xlu0 %v1064, 123
    %v1073 = vpop.permute.xlu0 %1072
    %1074 = vrot.lane.b32.xlu0 %v1065, 123
    %v1075 = vpop.permute.xlu0 %1074
    %1076 = vrot.lane.b32.xlu0 %v1066, 123
    %v1077 = vpop.permute.xlu0 %1076
    %1078 = vrot.lane.b32.xlu0 %v1067, 123
    %v1079 = vpop.permute.xlu0 %1078
    %v1084 = vadd.f32 %v1058, %v1073
    %v1085 = vadd.f32 %v1059, %v1075
    %v1086 = vadd.f32 %v1060, %v1077
    %v1087 = vadd.f32 %v1061, %v1079
    %s1088 = sld [smem:[#allocation4 + $0x29]]
    %v1089 = vstv %s1088
    %v1090 = vmul.f32 %v1089, %v944
    %v1091 = vmul.f32 %v1089, %v945
    %v1092 = vmul.f32 %v1089, %v946
    %v1093 = vmul.f32 %v1089, %v947
    %1098 = vrot.lane.b32.xlu0 %v1090, 122
    %v1099 = vpop.permute.xlu0 %1098
    %1100 = vrot.lane.b32.xlu0 %v1091, 122
    %v1101 = vpop.permute.xlu0 %1100
    %1102 = vrot.lane.b32.xlu0 %v1092, 122
    %v1103 = vpop.permute.xlu0 %1102
    %1104 = vrot.lane.b32.xlu0 %v1093, 122
    %v1105 = vpop.permute.xlu0 %1104
    %v1110 = vadd.f32 %v1084, %v1099
    %v1111 = vadd.f32 %v1085, %v1101
    %v1112 = vadd.f32 %v1086, %v1103
    %v1113 = vadd.f32 %v1087, %v1105
    %v1114 = vld [vmem:[#allocation2 + $0x6] sm:$0xff]
    %v1115 = vld [vmem:[#allocation2 + $0xe] sm:$0xff]
    %v1116 = vld [vmem:[#allocation2 + $0x36] sm:$0xff]
    %v1117 = vld [vmem:[#allocation2 + $0x3e] sm:$0xff]
    %s1118 = sld [smem:[#allocation4 + $0x2a]]
    %v1119 = vstv %s1118
    %v1120 = vmul.f32 %v1119, %v1114
    %v1121 = vmul.f32 %v1119, %v1115
    %v1122 = vmul.f32 %v1119, %v1116
    %v1123 = vmul.f32 %v1119, %v1117
    %v1124 = vadd.f32 %v1110, %v1120
    %v1125 = vadd.f32 %v1111, %v1121
    %v1126 = vadd.f32 %v1112, %v1122
    %v1127 = vadd.f32 %v1113, %v1123
    %s1128 = sld [smem:[#allocation4 + $0x2b]]
    %v1129 = vstv %s1128
    %v1130 = vmul.f32 %v1129, %v1114
    %v1131 = vmul.f32 %v1129, %v1115
    %v1132 = vmul.f32 %v1129, %v1116
    %v1133 = vmul.f32 %v1129, %v1117
    %1138 = vrot.lane.b32.xlu0 %v1130, 127
    %v1139 = vpop.permute.xlu0 %1138
    %1140 = vrot.lane.b32.xlu0 %v1131, 127
    %v1141 = vpop.permute.xlu0 %1140
    %1142 = vrot.lane.b32.xlu0 %v1132, 127
    %v1143 = vpop.permute.xlu0 %1142
    %1144 = vrot.lane.b32.xlu0 %v1133, 127
    %v1145 = vpop.permute.xlu0 %1144
    %v1150 = vadd.f32 %v1124, %v1139
    %v1151 = vadd.f32 %v1125, %v1141
    %v1152 = vadd.f32 %v1126, %v1143
    %v1153 = vadd.f32 %v1127, %v1145
    %s1154 = sld [smem:[#allocation4 + $0x2c]]
    %v1155 = vstv %s1154
    %v1156 = vmul.f32 %v1155, %v1114
    %v1157 = vmul.f32 %v1155, %v1115
    %v1158 = vmul.f32 %v1155, %v1116
    %v1159 = vmul.f32 %v1155, %v1117
    %1164 = vrot.lane.b32.xlu0 %v1156, 126
    %v1165 = vpop.permute.xlu0 %1164
    %1166 = vrot.lane.b32.xlu0 %v1157, 126
    %v1167 = vpop.permute.xlu0 %1166
    %1168 = vrot.lane.b32.xlu0 %v1158, 126
    %v1169 = vpop.permute.xlu0 %1168
    %1170 = vrot.lane.b32.xlu0 %v1159, 126
    %v1171 = vpop.permute.xlu0 %1170
    %v1176 = vadd.f32 %v1150, %v1165
    %v1177 = vadd.f32 %v1151, %v1167
    %v1178 = vadd.f32 %v1152, %v1169
    %v1179 = vadd.f32 %v1153, %v1171
    %s1180 = sld [smem:[#allocation4 + $0x2d]]
    %v1181 = vstv %s1180
    %v1182 = vmul.f32 %v1181, %v1114
    %v1183 = vmul.f32 %v1181, %v1115
    %v1184 = vmul.f32 %v1181, %v1116
    %v1185 = vmul.f32 %v1181, %v1117
    %1190 = vrot.lane.b32.xlu0 %v1182, 125
    %v1191 = vpop.permute.xlu0 %1190
    %1192 = vrot.lane.b32.xlu0 %v1183, 125
    %v1193 = vpop.permute.xlu0 %1192
    %1194 = vrot.lane.b32.xlu0 %v1184, 125
    %v1195 = vpop.permute.xlu0 %1194
    %1196 = vrot.lane.b32.xlu0 %v1185, 125
    %v1197 = vpop.permute.xlu0 %1196
    %v1202 = vadd.f32 %v1176, %v1191
    %v1203 = vadd.f32 %v1177, %v1193
    %v1204 = vadd.f32 %v1178, %v1195
    %v1205 = vadd.f32 %v1179, %v1197
    %s1206 = sld [smem:[#allocation4 + $0x2e]]
    %v1207 = vstv %s1206
    %v1208 = vmul.f32 %v1207, %v1114
    %v1209 = vmul.f32 %v1207, %v1115
    %v1210 = vmul.f32 %v1207, %v1116
    %v1211 = vmul.f32 %v1207, %v1117
    %1216 = vrot.lane.b32.xlu0 %v1208, 124
    %v1217 = vpop.permute.xlu0 %1216
    %1218 = vrot.lane.b32.xlu0 %v1209, 124
    %v1219 = vpop.permute.xlu0 %1218
    %1220 = vrot.lane.b32.xlu0 %v1210, 124
    %v1221 = vpop.permute.xlu0 %1220
    %1222 = vrot.lane.b32.xlu0 %v1211, 124
    %v1223 = vpop.permute.xlu0 %1222
    %v1228 = vadd.f32 %v1202, %v1217
    %v1229 = vadd.f32 %v1203, %v1219
    %v1230 = vadd.f32 %v1204, %v1221
    %v1231 = vadd.f32 %v1205, %v1223
    %s1232 = sld [smem:[#allocation4 + $0x2f]]
    %v1233 = vstv %s1232
    %v1234 = vmul.f32 %v1233, %v1114
    %v1235 = vmul.f32 %v1233, %v1115
    %v1236 = vmul.f32 %v1233, %v1116
    %v1237 = vmul.f32 %v1233, %v1117
    %1242 = vrot.lane.b32.xlu0 %v1234, 123
    %v1243 = vpop.permute.xlu0 %1242
    %1244 = vrot.lane.b32.xlu0 %v1235, 123
    %v1245 = vpop.permute.xlu0 %1244
    %1246 = vrot.lane.b32.xlu0 %v1236, 123
    %v1247 = vpop.permute.xlu0 %1246
    %1248 = vrot.lane.b32.xlu0 %v1237, 123
    %v1249 = vpop.permute.xlu0 %1248
    %v1254 = vadd.f32 %v1228, %v1243
    %v1255 = vadd.f32 %v1229, %v1245
    %v1256 = vadd.f32 %v1230, %v1247
    %v1257 = vadd.f32 %v1231, %v1249
    %s1258 = sld [smem:[#allocation4 + $0x30]]
    %v1259 = vstv %s1258
    %v1260 = vmul.f32 %v1259, %v1114
    %v1261 = vmul.f32 %v1259, %v1115
    %v1262 = vmul.f32 %v1259, %v1116
    %v1263 = vmul.f32 %v1259, %v1117
    %1268 = vrot.lane.b32.xlu0 %v1260, 122
    %v1269 = vpop.permute.xlu0 %1268
    %1270 = vrot.lane.b32.xlu0 %v1261, 122
    %v1271 = vpop.permute.xlu0 %1270
    %1272 = vrot.lane.b32.xlu0 %v1262, 122
    %v1273 = vpop.permute.xlu0 %1272
    %1274 = vrot.lane.b32.xlu0 %v1263, 122
    %v1275 = vpop.permute.xlu0 %1274
    %v1280 = vadd.f32 %v1254, %v1269
    %v1281 = vadd.f32 %v1255, %v1271
    %v1282 = vadd.f32 %v1256, %v1273
    %v1283 = vadd.f32 %v1257, %v1275
    %s1284 = scalar_lea.vmem [#allocation2], 24
    %v1285 = vld [vmem:[%s1284] sm:$0xff]
    %v1286 = vld [vmem:[%s1284 + $0x8] sm:$0xff]
    %v1287 = vld [vmem:[%s1284 + $0x30] sm:$0xff]
    %v1288 = vld [vmem:[%s1284 + $0x38] sm:$0xff]
    %s1289 = sld [smem:[#allocation4 + $0x31]]
    %v1290 = vstv %s1289
    %v1291 = vmul.f32 %v1290, %v1285
    %v1292 = vmul.f32 %v1290, %v1286
    %v1293 = vmul.f32 %v1290, %v1287
    %v1294 = vmul.f32 %v1290, %v1288
    %v1295 = vadd.f32 %v1280, %v1291
    %v1296 = vadd.f32 %v1281, %v1292
    %v1297 = vadd.f32 %v1282, %v1293
    %v1298 = vadd.f32 %v1283, %v1294
    %s1299 = sld [smem:[#allocation4 + $0x32]]
    %v1300 = vstv %s1299
    %v1301 = vmul.f32 %v1300, %v1285
    %v1302 = vmul.f32 %v1300, %v1286
    %v1303 = vmul.f32 %v1300, %v1287
    %v1304 = vmul.f32 %v1300, %v1288
    %1309 = vrot.lane.b32.xlu0 %v1301, 127
    %v1310 = vpop.permute.xlu0 %1309
    %1311 = vrot.lane.b32.xlu0 %v1302, 127
    %v1312 = vpop.permute.xlu0 %1311
    %1313 = vrot.lane.b32.xlu0 %v1303, 127
    %v1314 = vpop.permute.xlu0 %1313
    %1315 = vrot.lane.b32.xlu0 %v1304, 127
    %v1316 = vpop.permute.xlu0 %1315
    %v1321 = vadd.f32 %v1295, %v1310
    %v1322 = vadd.f32 %v1296, %v1312
    %v1323 = vadd.f32 %v1297, %v1314
    %v1324 = vadd.f32 %v1298, %v1316
    %s1325 = sld [smem:[#allocation4 + $0x33]]
    %v1326 = vstv %s1325
    %v1327 = vmul.f32 %v1326, %v1285
    %v1328 = vmul.f32 %v1326, %v1286
    %v1329 = vmul.f32 %v1326, %v1287
    %v1330 = vmul.f32 %v1326, %v1288
    %1335 = vrot.lane.b32.xlu0 %v1327, 126
    %v1336 = vpop.permute.xlu0 %1335
    %1337 = vrot.lane.b32.xlu0 %v1328, 126
    %v1338 = vpop.permute.xlu0 %1337
    %1339 = vrot.lane.b32.xlu0 %v1329, 126
    %v1340 = vpop.permute.xlu0 %1339
    %1341 = vrot.lane.b32.xlu0 %v1330, 126
    %v1342 = vpop.permute.xlu0 %1341
    %v1347 = vadd.f32 %v1321, %v1336
    %v1348 = vadd.f32 %v1322, %v1338
    %v1349 = vadd.f32 %v1323, %v1340
    %v1350 = vadd.f32 %v1324, %v1342
    %s1351 = sld [smem:[#allocation4 + $0x34]]
    %v1352 = vstv %s1351
    %v1353 = vmul.f32 %v1352, %v1285
    %v1354 = vmul.f32 %v1352, %v1286
    %v1355 = vmul.f32 %v1352, %v1287
    %v1356 = vmul.f32 %v1352, %v1288
    %1361 = vrot.lane.b32.xlu0 %v1353, 125
    %v1362 = vpop.permute.xlu0 %1361
    %1363 = vrot.lane.b32.xlu0 %v1354, 125
    %v1364 = vpop.permute.xlu0 %1363
    %1365 = vrot.lane.b32.xlu0 %v1355, 125
    %v1366 = vpop.permute.xlu0 %1365
    %1367 = vrot.lane.b32.xlu0 %v1356, 125
    %v1368 = vpop.permute.xlu0 %1367
    %v1373 = vadd.f32 %v1347, %v1362
    %v1374 = vadd.f32 %v1348, %v1364
    %v1375 = vadd.f32 %v1349, %v1366
    %v1376 = vadd.f32 %v1350, %v1368
    %s1377 = sld [smem:[#allocation4 + $0x35]]
    %v1378 = vstv %s1377
    %v1379 = vmul.f32 %v1378, %v1285
    %v1380 = vmul.f32 %v1378, %v1286
    %v1381 = vmul.f32 %v1378, %v1287
    %v1382 = vmul.f32 %v1378, %v1288
    %1387 = vrot.lane.b32.xlu0 %v1379, 124
    %v1388 = vpop.permute.xlu0 %1387
    %1389 = vrot.lane.b32.xlu0 %v1380, 124
    %v1390 = vpop.permute.xlu0 %1389
    %1391 = vrot.lane.b32.xlu0 %v1381, 124
    %v1392 = vpop.permute.xlu0 %1391
    %1393 = vrot.lane.b32.xlu0 %v1382, 124
    %v1394 = vpop.permute.xlu0 %1393
    %v1399 = vadd.f32 %v1373, %v1388
    %v1400 = vadd.f32 %v1374, %v1390
    %v1401 = vadd.f32 %v1375, %v1392
    %v1402 = vadd.f32 %v1376, %v1394
    %s1403 = sld [smem:[#allocation4 + $0x36]]
    %v1404 = vstv %s1403
    %v1405 = vmul.f32 %v1404, %v1285
    %v1406 = vmul.f32 %v1404, %v1286
    %v1407 = vmul.f32 %v1404, %v1287
    %v1408 = vmul.f32 %v1404, %v1288
    %1413 = vrot.lane.b32.xlu0 %v1405, 123
    %v1414 = vpop.permute.xlu0 %1413
    %1415 = vrot.lane.b32.xlu0 %v1406, 123
    %v1416 = vpop.permute.xlu0 %1415
    %1417 = vrot.lane.b32.xlu0 %v1407, 123
    %v1418 = vpop.permute.xlu0 %1417
    %1419 = vrot.lane.b32.xlu0 %v1408, 123
    %v1420 = vpop.permute.xlu0 %1419
    %v1425 = vadd.f32 %v1399, %v1414
    %v1426 = vadd.f32 %v1400, %v1416
    %v1427 = vadd.f32 %v1401, %v1418
    %v1428 = vadd.f32 %v1402, %v1420
    %s1429 = sld [smem:[#allocation4 + $0x37]]
    %v1430 = vstv %s1429
    %v1431 = vmul.f32 %v1430, %v1285
    %v1432 = vmul.f32 %v1430, %v1286
    %v1433 = vmul.f32 %v1430, %v1287
    %v1434 = vmul.f32 %v1430, %v1288
    %1439 = vrot.lane.b32.xlu0 %v1431, 122
    %v1440 = vpop.permute.xlu0 %1439
    %1441 = vrot.lane.b32.xlu0 %v1432, 122
    %v1442 = vpop.permute.xlu0 %1441
    %1443 = vrot.lane.b32.xlu0 %v1433, 122
    %v1444 = vpop.permute.xlu0 %1443
    %1445 = vrot.lane.b32.xlu0 %v1434, 122
    %v1446 = vpop.permute.xlu0 %1445
    %v1451 = vadd.f32 %v1425, %v1440
    %v1452 = vadd.f32 %v1426, %v1442
    %v1453 = vadd.f32 %v1427, %v1444
    %v1454 = vadd.f32 %v1428, %v1446
    %v1455 = vld [vmem:[%s1284 + $0x1] sm:$0xff]
    %v1456 = vld [vmem:[%s1284 + $0x9] sm:$0xff]
    %v1457 = vld [vmem:[%s1284 + $0x31] sm:$0xff]
    %v1458 = vld [vmem:[%s1284 + $0x39] sm:$0xff]
    %s1459 = sld [smem:[#allocation4 + $0x38]]
    %v1460 = vstv %s1459
    %v1461 = vmul.f32 %v1460, %v1455
    %v1462 = vmul.f32 %v1460, %v1456
    %v1463 = vmul.f32 %v1460, %v1457
    %v1464 = vmul.f32 %v1460, %v1458
    %v1465 = vadd.f32 %v1451, %v1461
    %v1466 = vadd.f32 %v1452, %v1462
    %v1467 = vadd.f32 %v1453, %v1463
    %v1468 = vadd.f32 %v1454, %v1464
    %s1469 = sld [smem:[#allocation4 + $0x39]]
    %v1470 = vstv %s1469
    %v1471 = vmul.f32 %v1470, %v1455
    %v1472 = vmul.f32 %v1470, %v1456
    %v1473 = vmul.f32 %v1470, %v1457
    %v1474 = vmul.f32 %v1470, %v1458
    %1479 = vrot.lane.b32.xlu0 %v1471, 127
    %v1480 = vpop.permute.xlu0 %1479
    %1481 = vrot.lane.b32.xlu0 %v1472, 127
    %v1482 = vpop.permute.xlu0 %1481
    %1483 = vrot.lane.b32.xlu0 %v1473, 127
    %v1484 = vpop.permute.xlu0 %1483
    %1485 = vrot.lane.b32.xlu0 %v1474, 127
    %v1486 = vpop.permute.xlu0 %1485
    %v1491 = vadd.f32 %v1465, %v1480
    %v1492 = vadd.f32 %v1466, %v1482
    %v1493 = vadd.f32 %v1467, %v1484
    %v1494 = vadd.f32 %v1468, %v1486
    %s1495 = sld [smem:[#allocation4 + $0x3a]]
    %v1496 = vstv %s1495
    %v1497 = vmul.f32 %v1496, %v1455
    %v1498 = vmul.f32 %v1496, %v1456
    %v1499 = vmul.f32 %v1496, %v1457
    %v1500 = vmul.f32 %v1496, %v1458
    %1505 = vrot.lane.b32.xlu0 %v1497, 126
    %v1506 = vpop.permute.xlu0 %1505
    %1507 = vrot.lane.b32.xlu0 %v1498, 126
    %v1508 = vpop.permute.xlu0 %1507
    %1509 = vrot.lane.b32.xlu0 %v1499, 126
    %v1510 = vpop.permute.xlu0 %1509
    %1511 = vrot.lane.b32.xlu0 %v1500, 126
    %v1512 = vpop.permute.xlu0 %1511
    %v1517 = vadd.f32 %v1491, %v1506
    %v1518 = vadd.f32 %v1492, %v1508
    %v1519 = vadd.f32 %v1493, %v1510
    %v1520 = vadd.f32 %v1494, %v1512
    %s1521 = sld [smem:[#allocation4 + $0x3b]]
    %v1522 = vstv %s1521
    %v1523 = vmul.f32 %v1522, %v1455
    %v1524 = vmul.f32 %v1522, %v1456
    %v1525 = vmul.f32 %v1522, %v1457
    %v1526 = vmul.f32 %v1522, %v1458
    %1531 = vrot.lane.b32.xlu0 %v1523, 125
    %v1532 = vpop.permute.xlu0 %1531
    %1533 = vrot.lane.b32.xlu0 %v1524, 125
    %v1534 = vpop.permute.xlu0 %1533
    %1535 = vrot.lane.b32.xlu0 %v1525, 125
    %v1536 = vpop.permute.xlu0 %1535
    %1537 = vrot.lane.b32.xlu0 %v1526, 125
    %v1538 = vpop.permute.xlu0 %1537
    %v1543 = vadd.f32 %v1517, %v1532
    %v1544 = vadd.f32 %v1518, %v1534
    %v1545 = vadd.f32 %v1519, %v1536
    %v1546 = vadd.f32 %v1520, %v1538
    %s1547 = sld [smem:[#allocation4 + $0x3c]]
    %v1548 = vstv %s1547
    %v1549 = vmul.f32 %v1548, %v1455
    %v1550 = vmul.f32 %v1548, %v1456
    %v1551 = vmul.f32 %v1548, %v1457
    %v1552 = vmul.f32 %v1548, %v1458
    %1557 = vrot.lane.b32.xlu0 %v1549, 124
    %v1558 = vpop.permute.xlu0 %1557
    %1559 = vrot.lane.b32.xlu0 %v1550, 124
    %v1560 = vpop.permute.xlu0 %1559
    %1561 = vrot.lane.b32.xlu0 %v1551, 124
    %v1562 = vpop.permute.xlu0 %1561
    %1563 = vrot.lane.b32.xlu0 %v1552, 124
    %v1564 = vpop.permute.xlu0 %1563
    %v1569 = vadd.f32 %v1543, %v1558
    %v1570 = vadd.f32 %v1544, %v1560
    %v1571 = vadd.f32 %v1545, %v1562
    %v1572 = vadd.f32 %v1546, %v1564
    %s1573 = sld [smem:[#allocation4 + $0x3d]]
    %v1574 = vstv %s1573
    %v1575 = vmul.f32 %v1574, %v1455
    %v1576 = vmul.f32 %v1574, %v1456
    %v1577 = vmul.f32 %v1574, %v1457
    %v1578 = vmul.f32 %v1574, %v1458
    %1583 = vrot.lane.b32.xlu0 %v1575, 123
    %v1584 = vpop.permute.xlu0 %1583
    %1585 = vrot.lane.b32.xlu0 %v1576, 123
    %v1586 = vpop.permute.xlu0 %1585
    %1587 = vrot.lane.b32.xlu0 %v1577, 123
    %v1588 = vpop.permute.xlu0 %1587
    %1589 = vrot.lane.b32.xlu0 %v1578, 123
    %v1590 = vpop.permute.xlu0 %1589
    %v1595 = vadd.f32 %v1569, %v1584
    %v1596 = vadd.f32 %v1570, %v1586
    %v1597 = vadd.f32 %v1571, %v1588
    %v1598 = vadd.f32 %v1572, %v1590
    %s1599 = sld [smem:[#allocation4 + $0x3e]]
    %v1600 = vstv %s1599
    %v1601 = vmul.f32 %v1600, %v1455
    %v1602 = vmul.f32 %v1600, %v1456
    %v1603 = vmul.f32 %v1600, %v1457
    %v1604 = vmul.f32 %v1600, %v1458
    %1609 = vrot.lane.b32.xlu0 %v1601, 122
    %v1610 = vpop.permute.xlu0 %1609
    %1611 = vrot.lane.b32.xlu0 %v1602, 122
    %v1612 = vpop.permute.xlu0 %1611
    %1613 = vrot.lane.b32.xlu0 %v1603, 122
    %v1614 = vpop.permute.xlu0 %1613
    %1615 = vrot.lane.b32.xlu0 %v1604, 122
    %v1616 = vpop.permute.xlu0 %1615
    %v1621 = vadd.f32 %v1595, %v1610
    %v1622 = vadd.f32 %v1596, %v1612
    %v1623 = vadd.f32 %v1597, %v1614
    %v1624 = vadd.f32 %v1598, %v1616
    %v1625 = vld [vmem:[%s1284 + $0x2] sm:$0xff]
    %v1626 = vld [vmem:[%s1284 + $0xa] sm:$0xff]
    %v1627 = vld [vmem:[%s1284 + $0x32] sm:$0xff]
    %v1628 = vld [vmem:[%s1284 + $0x3a] sm:$0xff]
    %s1629 = sld [smem:[#allocation4 + $0x3f]]
    %v1630 = vstv %s1629
    %v1631 = vmul.f32 %v1630, %v1625
    %v1632 = vmul.f32 %v1630, %v1626
    %v1633 = vmul.f32 %v1630, %v1627
    %v1634 = vmul.f32 %v1630, %v1628
    %v1635 = vadd.f32 %v1621, %v1631
    %v1636 = vadd.f32 %v1622, %v1632
    %v1637 = vadd.f32 %v1623, %v1633
    %v1638 = vadd.f32 %v1624, %v1634
    %s1639 = sld [smem:[#allocation4 + $0x40]]
    %v1640 = vstv %s1639
    %v1641 = vmul.f32 %v1640, %v1625
    %v1642 = vmul.f32 %v1640, %v1626
    %v1643 = vmul.f32 %v1640, %v1627
    %v1644 = vmul.f32 %v1640, %v1628
    %1649 = vrot.lane.b32.xlu0 %v1641, 127
    %v1650 = vpop.permute.xlu0 %1649
    %1651 = vrot.lane.b32.xlu0 %v1642, 127
    %v1652 = vpop.permute.xlu0 %1651
    %1653 = vrot.lane.b32.xlu0 %v1643, 127
    %v1654 = vpop.permute.xlu0 %1653
    %1655 = vrot.lane.b32.xlu0 %v1644, 127
    %v1656 = vpop.permute.xlu0 %1655
    %v1661 = vadd.f32 %v1635, %v1650
    %v1662 = vadd.f32 %v1636, %v1652
    %v1663 = vadd.f32 %v1637, %v1654
    %v1664 = vadd.f32 %v1638, %v1656
    %s1665 = sld [smem:[#allocation4 + $0x41]]
    %v1666 = vstv %s1665
    %v1667 = vmul.f32 %v1666, %v1625
    %v1668 = vmul.f32 %v1666, %v1626
    %v1669 = vmul.f32 %v1666, %v1627
    %v1670 = vmul.f32 %v1666, %v1628
    %1675 = vrot.lane.b32.xlu0 %v1667, 126
    %v1676 = vpop.permute.xlu0 %1675
    %1677 = vrot.lane.b32.xlu0 %v1668, 126
    %v1678 = vpop.permute.xlu0 %1677
    %1679 = vrot.lane.b32.xlu0 %v1669, 126
    %v1680 = vpop.permute.xlu0 %1679
    %1681 = vrot.lane.b32.xlu0 %v1670, 126
    %v1682 = vpop.permute.xlu0 %1681
    %v1687 = vadd.f32 %v1661, %v1676
    %v1688 = vadd.f32 %v1662, %v1678
    %v1689 = vadd.f32 %v1663, %v1680
    %v1690 = vadd.f32 %v1664, %v1682
    %s1691 = sld [smem:[#allocation4 + $0x42]]
    %v1692 = vstv %s1691
    %v1693 = vmul.f32 %v1692, %v1625
    %v1694 = vmul.f32 %v1692, %v1626
    %v1695 = vmul.f32 %v1692, %v1627
    %v1696 = vmul.f32 %v1692, %v1628
    %1701 = vrot.lane.b32.xlu0 %v1693, 125
    %v1702 = vpop.permute.xlu0 %1701
    %1703 = vrot.lane.b32.xlu0 %v1694, 125
    %v1704 = vpop.permute.xlu0 %1703
    %1705 = vrot.lane.b32.xlu0 %v1695, 125
    %v1706 = vpop.permute.xlu0 %1705
    %1707 = vrot.lane.b32.xlu0 %v1696, 125
    %v1708 = vpop.permute.xlu0 %1707
    %v1713 = vadd.f32 %v1687, %v1702
    %v1714 = vadd.f32 %v1688, %v1704
    %v1715 = vadd.f32 %v1689, %v1706
    %v1716 = vadd.f32 %v1690, %v1708
    %s1717 = sld [smem:[#allocation4 + $0x43]]
    %v1718 = vstv %s1717
    %v1719 = vmul.f32 %v1718, %v1625
    %v1720 = vmul.f32 %v1718, %v1626
    %v1721 = vmul.f32 %v1718, %v1627
    %v1722 = vmul.f32 %v1718, %v1628
    %1727 = vrot.lane.b32.xlu0 %v1719, 124
    %v1728 = vpop.permute.xlu0 %1727
    %1729 = vrot.lane.b32.xlu0 %v1720, 124
    %v1730 = vpop.permute.xlu0 %1729
    %1731 = vrot.lane.b32.xlu0 %v1721, 124
    %v1732 = vpop.permute.xlu0 %1731
    %1733 = vrot.lane.b32.xlu0 %v1722, 124
    %v1734 = vpop.permute.xlu0 %1733
    %v1739 = vadd.f32 %v1713, %v1728
    %v1740 = vadd.f32 %v1714, %v1730
    %v1741 = vadd.f32 %v1715, %v1732
    %v1742 = vadd.f32 %v1716, %v1734
    %s1743 = sld [smem:[#allocation4 + $0x44]]
    %v1744 = vstv %s1743
    %v1745 = vmul.f32 %v1744, %v1625
    %v1746 = vmul.f32 %v1744, %v1626
    %v1747 = vmul.f32 %v1744, %v1627
    %v1748 = vmul.f32 %v1744, %v1628
    %1753 = vrot.lane.b32.xlu0 %v1745, 123
    %v1754 = vpop.permute.xlu0 %1753
    %1755 = vrot.lane.b32.xlu0 %v1746, 123
    %v1756 = vpop.permute.xlu0 %1755
    %1757 = vrot.lane.b32.xlu0 %v1747, 123
    %v1758 = vpop.permute.xlu0 %1757
    %1759 = vrot.lane.b32.xlu0 %v1748, 123
    %v1760 = vpop.permute.xlu0 %1759
    %v1765 = vadd.f32 %v1739, %v1754
    %v1766 = vadd.f32 %v1740, %v1756
    %v1767 = vadd.f32 %v1741, %v1758
    %v1768 = vadd.f32 %v1742, %v1760
    %s1769 = sld [smem:[#allocation4 + $0x45]]
    %v1770 = vstv %s1769
    %v1771 = vmul.f32 %v1770, %v1625
    %v1772 = vmul.f32 %v1770, %v1626
    %v1773 = vmul.f32 %v1770, %v1627
    %v1774 = vmul.f32 %v1770, %v1628
    %1779 = vrot.lane.b32.xlu0 %v1771, 122
    %v1780 = vpop.permute.xlu0 %1779
    %1781 = vrot.lane.b32.xlu0 %v1772, 122
    %v1782 = vpop.permute.xlu0 %1781
    %1783 = vrot.lane.b32.xlu0 %v1773, 122
    %v1784 = vpop.permute.xlu0 %1783
    %1785 = vrot.lane.b32.xlu0 %v1774, 122
    %v1786 = vpop.permute.xlu0 %1785
    %v1791 = vadd.f32 %v1765, %v1780
    %v1792 = vadd.f32 %v1766, %v1782
    %v1793 = vadd.f32 %v1767, %v1784
    %v1794 = vadd.f32 %v1768, %v1786
    %v1795 = vld [vmem:[%s1284 + $0x3] sm:$0xff]
    %v1796 = vld [vmem:[%s1284 + $0xb] sm:$0xff]
    %v1797 = vld [vmem:[%s1284 + $0x33] sm:$0xff]
    %v1798 = vld [vmem:[%s1284 + $0x3b] sm:$0xff]
    %s1799 = sld [smem:[#allocation4 + $0x46]]
    %v1800 = vstv %s1799
    %v1801 = vmul.f32 %v1800, %v1795
    %v1802 = vmul.f32 %v1800, %v1796
    %v1803 = vmul.f32 %v1800, %v1797
    %v1804 = vmul.f32 %v1800, %v1798
    %v1805 = vadd.f32 %v1791, %v1801
    %v1806 = vadd.f32 %v1792, %v1802
    %v1807 = vadd.f32 %v1793, %v1803
    %v1808 = vadd.f32 %v1794, %v1804
    %s1809 = sld [smem:[#allocation4 + $0x47]]
    %v1810 = vstv %s1809
    %v1811 = vmul.f32 %v1810, %v1795
    %v1812 = vmul.f32 %v1810, %v1796
    %v1813 = vmul.f32 %v1810, %v1797
    %v1814 = vmul.f32 %v1810, %v1798
    %1819 = vrot.lane.b32.xlu0 %v1811, 127
    %v1820 = vpop.permute.xlu0 %1819
    %1821 = vrot.lane.b32.xlu0 %v1812, 127
    %v1822 = vpop.permute.xlu0 %1821
    %1823 = vrot.lane.b32.xlu0 %v1813, 127
    %v1824 = vpop.permute.xlu0 %1823
    %1825 = vrot.lane.b32.xlu0 %v1814, 127
    %v1826 = vpop.permute.xlu0 %1825
    %v1831 = vadd.f32 %v1805, %v1820
    %v1832 = vadd.f32 %v1806, %v1822
    %v1833 = vadd.f32 %v1807, %v1824
    %v1834 = vadd.f32 %v1808, %v1826
    %s1835 = sld [smem:[#allocation4 + $0x48]]
    %v1836 = vstv %s1835
    %v1837 = vmul.f32 %v1836, %v1795
    %v1838 = vmul.f32 %v1836, %v1796
    %v1839 = vmul.f32 %v1836, %v1797
    %v1840 = vmul.f32 %v1836, %v1798
    %1845 = vrot.lane.b32.xlu0 %v1837, 126
    %v1846 = vpop.permute.xlu0 %1845
    %1847 = vrot.lane.b32.xlu0 %v1838, 126
    %v1848 = vpop.permute.xlu0 %1847
    %1849 = vrot.lane.b32.xlu0 %v1839, 126
    %v1850 = vpop.permute.xlu0 %1849
    %1851 = vrot.lane.b32.xlu0 %v1840, 126
    %v1852 = vpop.permute.xlu0 %1851
    %v1857 = vadd.f32 %v1831, %v1846
    %v1858 = vadd.f32 %v1832, %v1848
    %v1859 = vadd.f32 %v1833, %v1850
    %v1860 = vadd.f32 %v1834, %v1852
    %s1861 = sld [smem:[#allocation4 + $0x49]]
    %v1862 = vstv %s1861
    %v1863 = vmul.f32 %v1862, %v1795
    %v1864 = vmul.f32 %v1862, %v1796
    %v1865 = vmul.f32 %v1862, %v1797
    %v1866 = vmul.f32 %v1862, %v1798
    %1871 = vrot.lane.b32.xlu0 %v1863, 125
    %v1872 = vpop.permute.xlu0 %1871
    %1873 = vrot.lane.b32.xlu0 %v1864, 125
    %v1874 = vpop.permute.xlu0 %1873
    %1875 = vrot.lane.b32.xlu0 %v1865, 125
    %v1876 = vpop.permute.xlu0 %1875
    %1877 = vrot.lane.b32.xlu0 %v1866, 125
    %v1878 = vpop.permute.xlu0 %1877
    %v1883 = vadd.f32 %v1857, %v1872
    %v1884 = vadd.f32 %v1858, %v1874
    %v1885 = vadd.f32 %v1859, %v1876
    %v1886 = vadd.f32 %v1860, %v1878
    %s1887 = sld [smem:[#allocation4 + $0x4a]]
    %v1888 = vstv %s1887
    %v1889 = vmul.f32 %v1888, %v1795
    %v1890 = vmul.f32 %v1888, %v1796
    %v1891 = vmul.f32 %v1888, %v1797
    %v1892 = vmul.f32 %v1888, %v1798
    %1897 = vrot.lane.b32.xlu0 %v1889, 124
    %v1898 = vpop.permute.xlu0 %1897
    %1899 = vrot.lane.b32.xlu0 %v1890, 124
    %v1900 = vpop.permute.xlu0 %1899
    %1901 = vrot.lane.b32.xlu0 %v1891, 124
    %v1902 = vpop.permute.xlu0 %1901
    %1903 = vrot.lane.b32.xlu0 %v1892, 124
    %v1904 = vpop.permute.xlu0 %1903
    %v1909 = vadd.f32 %v1883, %v1898
    %v1910 = vadd.f32 %v1884, %v1900
    %v1911 = vadd.f32 %v1885, %v1902
    %v1912 = vadd.f32 %v1886, %v1904
    %s1913 = sld [smem:[#allocation4 + $0x4b]]
    %v1914 = vstv %s1913
    %v1915 = vmul.f32 %v1914, %v1795
    %v1916 = vmul.f32 %v1914, %v1796
    %v1917 = vmul.f32 %v1914, %v1797
    %v1918 = vmul.f32 %v1914, %v1798
    %1923 = vrot.lane.b32.xlu0 %v1915, 123
    %v1924 = vpop.permute.xlu0 %1923
    %1925 = vrot.lane.b32.xlu0 %v1916, 123
    %v1926 = vpop.permute.xlu0 %1925
    %1927 = vrot.lane.b32.xlu0 %v1917, 123
    %v1928 = vpop.permute.xlu0 %1927
    %1929 = vrot.lane.b32.xlu0 %v1918, 123
    %v1930 = vpop.permute.xlu0 %1929
    %v1935 = vadd.f32 %v1909, %v1924
    %v1936 = vadd.f32 %v1910, %v1926
    %v1937 = vadd.f32 %v1911, %v1928
    %v1938 = vadd.f32 %v1912, %v1930
    %s1939 = sld [smem:[#allocation4 + $0x4c]]
    %v1940 = vstv %s1939
    %v1941 = vmul.f32 %v1940, %v1795
    %v1942 = vmul.f32 %v1940, %v1796
    %v1943 = vmul.f32 %v1940, %v1797
    %v1944 = vmul.f32 %v1940, %v1798
    %1949 = vrot.lane.b32.xlu0 %v1941, 122
    %v1950 = vpop.permute.xlu0 %1949
    %1951 = vrot.lane.b32.xlu0 %v1942, 122
    %v1952 = vpop.permute.xlu0 %1951
    %1953 = vrot.lane.b32.xlu0 %v1943, 122
    %v1954 = vpop.permute.xlu0 %1953
    %1955 = vrot.lane.b32.xlu0 %v1944, 122
    %v1956 = vpop.permute.xlu0 %1955
    %v1961 = vadd.f32 %v1935, %v1950
    %v1962 = vadd.f32 %v1936, %v1952
    %v1963 = vadd.f32 %v1937, %v1954
    %v1964 = vadd.f32 %v1938, %v1956
    %v1965 = vld [vmem:[%s1284 + $0x4] sm:$0xff]
    %v1966 = vld [vmem:[%s1284 + $0xc] sm:$0xff]
    %v1967 = vld [vmem:[%s1284 + $0x34] sm:$0xff]
    %v1968 = vld [vmem:[%s1284 + $0x3c] sm:$0xff]
    %s1969 = sld [smem:[#allocation4 + $0x4d]]
    %v1970 = vstv %s1969
    %v1971 = vmul.f32 %v1970, %v1965
    %v1972 = vmul.f32 %v1970, %v1966
    %v1973 = vmul.f32 %v1970, %v1967
    %v1974 = vmul.f32 %v1970, %v1968
    %v1975 = vadd.f32 %v1961, %v1971
    %v1976 = vadd.f32 %v1962, %v1972
    %v1977 = vadd.f32 %v1963, %v1973
    %v1978 = vadd.f32 %v1964, %v1974
    %s1979 = sld [smem:[#allocation4 + $0x4e]]
    %v1980 = vstv %s1979
    %v1981 = vmul.f32 %v1980, %v1965
    %v1982 = vmul.f32 %v1980, %v1966
    %v1983 = vmul.f32 %v1980, %v1967
    %v1984 = vmul.f32 %v1980, %v1968
    %1989 = vrot.lane.b32.xlu0 %v1981, 127
    %v1990 = vpop.permute.xlu0 %1989
    %1991 = vrot.lane.b32.xlu0 %v1982, 127
    %v1992 = vpop.permute.xlu0 %1991
    %1993 = vrot.lane.b32.xlu0 %v1983, 127
    %v1994 = vpop.permute.xlu0 %1993
    %1995 = vrot.lane.b32.xlu0 %v1984, 127
    %v1996 = vpop.permute.xlu0 %1995
    %v2001 = vadd.f32 %v1975, %v1990
    %v2002 = vadd.f32 %v1976, %v1992
    %v2003 = vadd.f32 %v1977, %v1994
    %v2004 = vadd.f32 %v1978, %v1996
    %s2005 = sld [smem:[#allocation4 + $0x4f]]
    %v2006 = vstv %s2005
    %v2007 = vmul.f32 %v2006, %v1965
    %v2008 = vmul.f32 %v2006, %v1966
    %v2009 = vmul.f32 %v2006, %v1967
    %v2010 = vmul.f32 %v2006, %v1968
    %2015 = vrot.lane.b32.xlu0 %v2007, 126
    %v2016 = vpop.permute.xlu0 %2015
    %2017 = vrot.lane.b32.xlu0 %v2008, 126
    %v2018 = vpop.permute.xlu0 %2017
    %2019 = vrot.lane.b32.xlu0 %v2009, 126
    %v2020 = vpop.permute.xlu0 %2019
    %2021 = vrot.lane.b32.xlu0 %v2010, 126
    %v2022 = vpop.permute.xlu0 %2021
    %v2027 = vadd.f32 %v2001, %v2016
    %v2028 = vadd.f32 %v2002, %v2018
    %v2029 = vadd.f32 %v2003, %v2020
    %v2030 = vadd.f32 %v2004, %v2022
    %s2031 = sld [smem:[#allocation4 + $0x50]]
    %v2032 = vstv %s2031
    %v2033 = vmul.f32 %v2032, %v1965
    %v2034 = vmul.f32 %v2032, %v1966
    %v2035 = vmul.f32 %v2032, %v1967
    %v2036 = vmul.f32 %v2032, %v1968
    %2041 = vrot.lane.b32.xlu0 %v2033, 125
    %v2042 = vpop.permute.xlu0 %2041
    %2043 = vrot.lane.b32.xlu0 %v2034, 125
    %v2044 = vpop.permute.xlu0 %2043
    %2045 = vrot.lane.b32.xlu0 %v2035, 125
    %v2046 = vpop.permute.xlu0 %2045
    %2047 = vrot.lane.b32.xlu0 %v2036, 125
    %v2048 = vpop.permute.xlu0 %2047
    %v2053 = vadd.f32 %v2027, %v2042
    %v2054 = vadd.f32 %v2028, %v2044
    %v2055 = vadd.f32 %v2029, %v2046
    %v2056 = vadd.f32 %v2030, %v2048
    %s2057 = sld [smem:[#allocation4 + $0x51]]
    %v2058 = vstv %s2057
    %v2059 = vmul.f32 %v2058, %v1965
    %v2060 = vmul.f32 %v2058, %v1966
    %v2061 = vmul.f32 %v2058, %v1967
    %v2062 = vmul.f32 %v2058, %v1968
    %2067 = vrot.lane.b32.xlu0 %v2059, 124
    %v2068 = vpop.permute.xlu0 %2067
    %2069 = vrot.lane.b32.xlu0 %v2060, 124
    %v2070 = vpop.permute.xlu0 %2069
    %2071 = vrot.lane.b32.xlu0 %v2061, 124
    %v2072 = vpop.permute.xlu0 %2071
    %2073 = vrot.lane.b32.xlu0 %v2062, 124
    %v2074 = vpop.permute.xlu0 %2073
    %v2079 = vadd.f32 %v2053, %v2068
    %v2080 = vadd.f32 %v2054, %v2070
    %v2081 = vadd.f32 %v2055, %v2072
    %v2082 = vadd.f32 %v2056, %v2074
    %s2083 = sld [smem:[#allocation4 + $0x52]]
    %v2084 = vstv %s2083
    %v2085 = vmul.f32 %v2084, %v1965
    %v2086 = vmul.f32 %v2084, %v1966
    %v2087 = vmul.f32 %v2084, %v1967
    %v2088 = vmul.f32 %v2084, %v1968
    %2093 = vrot.lane.b32.xlu0 %v2085, 123
    %v2094 = vpop.permute.xlu0 %2093
    %2095 = vrot.lane.b32.xlu0 %v2086, 123
    %v2096 = vpop.permute.xlu0 %2095
    %2097 = vrot.lane.b32.xlu0 %v2087, 123
    %v2098 = vpop.permute.xlu0 %2097
    %2099 = vrot.lane.b32.xlu0 %v2088, 123
    %v2100 = vpop.permute.xlu0 %2099
    %v2105 = vadd.f32 %v2079, %v2094
    %v2106 = vadd.f32 %v2080, %v2096
    %v2107 = vadd.f32 %v2081, %v2098
    %v2108 = vadd.f32 %v2082, %v2100
    %s2109 = sld [smem:[#allocation4 + $0x53]]
    %v2110 = vstv %s2109
    %v2111 = vmul.f32 %v2110, %v1965
    %v2112 = vmul.f32 %v2110, %v1966
    %v2113 = vmul.f32 %v2110, %v1967
    %v2114 = vmul.f32 %v2110, %v1968
    %2119 = vrot.lane.b32.xlu0 %v2111, 122
    %v2120 = vpop.permute.xlu0 %2119
    %2121 = vrot.lane.b32.xlu0 %v2112, 122
    %v2122 = vpop.permute.xlu0 %2121
    %2123 = vrot.lane.b32.xlu0 %v2113, 122
    %v2124 = vpop.permute.xlu0 %2123
    %2125 = vrot.lane.b32.xlu0 %v2114, 122
    %v2126 = vpop.permute.xlu0 %2125
    %v2131 = vadd.f32 %v2105, %v2120
    %v2132 = vadd.f32 %v2106, %v2122
    %v2133 = vadd.f32 %v2107, %v2124
    %v2134 = vadd.f32 %v2108, %v2126
    %v2135 = vld [vmem:[%s1284 + $0x5] sm:$0xff]
    %v2136 = vld [vmem:[%s1284 + $0xd] sm:$0xff]
    %v2137 = vld [vmem:[%s1284 + $0x35] sm:$0xff]
    %v2138 = vld [vmem:[%s1284 + $0x3d] sm:$0xff]
    %s2139 = sld [smem:[#allocation4 + $0x54]]
    %v2140 = vstv %s2139
    %v2141 = vmul.f32 %v2140, %v2135
    %v2142 = vmul.f32 %v2140, %v2136
    %v2143 = vmul.f32 %v2140, %v2137
    %v2144 = vmul.f32 %v2140, %v2138
    %v2145 = vadd.f32 %v2131, %v2141
    %v2146 = vadd.f32 %v2132, %v2142
    %v2147 = vadd.f32 %v2133, %v2143
    %v2148 = vadd.f32 %v2134, %v2144
    %s2149 = sld [smem:[#allocation4 + $0x55]]
    %v2150 = vstv %s2149
    %v2151 = vmul.f32 %v2150, %v2135
    %v2152 = vmul.f32 %v2150, %v2136
    %v2153 = vmul.f32 %v2150, %v2137
    %v2154 = vmul.f32 %v2150, %v2138
    %2159 = vrot.lane.b32.xlu0 %v2151, 127
    %v2160 = vpop.permute.xlu0 %2159
    %2161 = vrot.lane.b32.xlu0 %v2152, 127
    %v2162 = vpop.permute.xlu0 %2161
    %2163 = vrot.lane.b32.xlu0 %v2153, 127
    %v2164 = vpop.permute.xlu0 %2163
    %2165 = vrot.lane.b32.xlu0 %v2154, 127
    %v2166 = vpop.permute.xlu0 %2165
    %v2171 = vadd.f32 %v2145, %v2160
    %v2172 = vadd.f32 %v2146, %v2162
    %v2173 = vadd.f32 %v2147, %v2164
    %v2174 = vadd.f32 %v2148, %v2166
    %s2175 = sld [smem:[#allocation4 + $0x56]]
    %v2176 = vstv %s2175
    %v2177 = vmul.f32 %v2176, %v2135
    %v2178 = vmul.f32 %v2176, %v2136
    %v2179 = vmul.f32 %v2176, %v2137
    %v2180 = vmul.f32 %v2176, %v2138
    %2185 = vrot.lane.b32.xlu0 %v2177, 126
    %v2186 = vpop.permute.xlu0 %2185
    %2187 = vrot.lane.b32.xlu0 %v2178, 126
    %v2188 = vpop.permute.xlu0 %2187
    %2189 = vrot.lane.b32.xlu0 %v2179, 126
    %v2190 = vpop.permute.xlu0 %2189
    %2191 = vrot.lane.b32.xlu0 %v2180, 126
    %v2192 = vpop.permute.xlu0 %2191
    %v2197 = vadd.f32 %v2171, %v2186
    %v2198 = vadd.f32 %v2172, %v2188
    %v2199 = vadd.f32 %v2173, %v2190
    %v2200 = vadd.f32 %v2174, %v2192
    %s2201 = sld [smem:[#allocation4 + $0x57]]
    %v2202 = vstv %s2201
    %v2203 = vmul.f32 %v2202, %v2135
    %v2204 = vmul.f32 %v2202, %v2136
    %v2205 = vmul.f32 %v2202, %v2137
    %v2206 = vmul.f32 %v2202, %v2138
    %2211 = vrot.lane.b32.xlu0 %v2203, 125
    %v2212 = vpop.permute.xlu0 %2211
    %2213 = vrot.lane.b32.xlu0 %v2204, 125
    %v2214 = vpop.permute.xlu0 %2213
    %2215 = vrot.lane.b32.xlu0 %v2205, 125
    %v2216 = vpop.permute.xlu0 %2215
    %2217 = vrot.lane.b32.xlu0 %v2206, 125
    %v2218 = vpop.permute.xlu0 %2217
    %v2223 = vadd.f32 %v2197, %v2212
    %v2224 = vadd.f32 %v2198, %v2214
    %v2225 = vadd.f32 %v2199, %v2216
    %v2226 = vadd.f32 %v2200, %v2218
    %s2227 = sld [smem:[#allocation4 + $0x58]]
    %v2228 = vstv %s2227
    %v2229 = vmul.f32 %v2228, %v2135
    %v2230 = vmul.f32 %v2228, %v2136
    %v2231 = vmul.f32 %v2228, %v2137
    %v2232 = vmul.f32 %v2228, %v2138
    %2237 = vrot.lane.b32.xlu0 %v2229, 124
    %v2238 = vpop.permute.xlu0 %2237
    %2239 = vrot.lane.b32.xlu0 %v2230, 124
    %v2240 = vpop.permute.xlu0 %2239
    %2241 = vrot.lane.b32.xlu0 %v2231, 124
    %v2242 = vpop.permute.xlu0 %2241
    %2243 = vrot.lane.b32.xlu0 %v2232, 124
    %v2244 = vpop.permute.xlu0 %2243
    %v2249 = vadd.f32 %v2223, %v2238
    %v2250 = vadd.f32 %v2224, %v2240
    %v2251 = vadd.f32 %v2225, %v2242
    %v2252 = vadd.f32 %v2226, %v2244
    %s2253 = sld [smem:[#allocation4 + $0x59]]
    %v2254 = vstv %s2253
    %v2255 = vmul.f32 %v2254, %v2135
    %v2256 = vmul.f32 %v2254, %v2136
    %v2257 = vmul.f32 %v2254, %v2137
    %v2258 = vmul.f32 %v2254, %v2138
    %2263 = vrot.lane.b32.xlu0 %v2255, 123
    %v2264 = vpop.permute.xlu0 %2263
    %2265 = vrot.lane.b32.xlu0 %v2256, 123
    %v2266 = vpop.permute.xlu0 %2265
    %2267 = vrot.lane.b32.xlu0 %v2257, 123
    %v2268 = vpop.permute.xlu0 %2267
    %2269 = vrot.lane.b32.xlu0 %v2258, 123
    %v2270 = vpop.permute.xlu0 %2269
    %v2275 = vadd.f32 %v2249, %v2264
    %v2276 = vadd.f32 %v2250, %v2266
    %v2277 = vadd.f32 %v2251, %v2268
    %v2278 = vadd.f32 %v2252, %v2270
    %s2279 = sld [smem:[#allocation4 + $0x5a]]
    %v2280 = vstv %s2279
    %v2281 = vmul.f32 %v2280, %v2135
    %v2282 = vmul.f32 %v2280, %v2136
    %v2283 = vmul.f32 %v2280, %v2137
    %v2284 = vmul.f32 %v2280, %v2138
    %2289 = vrot.lane.b32.xlu0 %v2281, 122
    %v2290 = vpop.permute.xlu0 %2289
    %2291 = vrot.lane.b32.xlu0 %v2282, 122
    %v2292 = vpop.permute.xlu0 %2291
    %2293 = vrot.lane.b32.xlu0 %v2283, 122
    %v2294 = vpop.permute.xlu0 %2293
    %2295 = vrot.lane.b32.xlu0 %v2284, 122
    %v2296 = vpop.permute.xlu0 %2295
    %v2301 = vadd.f32 %v2275, %v2290
    %v2302 = vadd.f32 %v2276, %v2292
    %v2303 = vadd.f32 %v2277, %v2294
    %v2304 = vadd.f32 %v2278, %v2296
    %v2305 = vld [vmem:[%s1284 + $0x6] sm:$0xff]
    %v2306 = vld [vmem:[%s1284 + $0xe] sm:$0xff]
    %v2307 = vld [vmem:[%s1284 + $0x36] sm:$0xff]
    %v2308 = vld [vmem:[%s1284 + $0x3e] sm:$0xff]
    %s2309 = sld [smem:[#allocation4 + $0x5b]]
    %v2310 = vstv %s2309
    %v2311 = vmul.f32 %v2310, %v2305
    %v2312 = vmul.f32 %v2310, %v2306
    %v2313 = vmul.f32 %v2310, %v2307
    %v2314 = vmul.f32 %v2310, %v2308
    %v2315 = vadd.f32 %v2301, %v2311
    %v2316 = vadd.f32 %v2302, %v2312
    %v2317 = vadd.f32 %v2303, %v2313
    %v2318 = vadd.f32 %v2304, %v2314
    %s2319 = sld [smem:[#allocation4 + $0x5c]]
    %v2320 = vstv %s2319
    %v2321 = vmul.f32 %v2320, %v2305
    %v2322 = vmul.f32 %v2320, %v2306
    %v2323 = vmul.f32 %v2320, %v2307
    %v2324 = vmul.f32 %v2320, %v2308
    %2329 = vrot.lane.b32.xlu0 %v2321, 127
    %v2330 = vpop.permute.xlu0 %2329
    %2331 = vrot.lane.b32.xlu0 %v2322, 127
    %v2332 = vpop.permute.xlu0 %2331
    %2333 = vrot.lane.b32.xlu0 %v2323, 127
    %v2334 = vpop.permute.xlu0 %2333
    %2335 = vrot.lane.b32.xlu0 %v2324, 127
    %v2336 = vpop.permute.xlu0 %2335
    %v2341 = vadd.f32 %v2315, %v2330
    %v2342 = vadd.f32 %v2316, %v2332
    %v2343 = vadd.f32 %v2317, %v2334
    %v2344 = vadd.f32 %v2318, %v2336
    %s2345 = sld [smem:[#allocation4 + $0x5d]]
    %v2346 = vstv %s2345
    %v2347 = vmul.f32 %v2346, %v2305
    %v2348 = vmul.f32 %v2346, %v2306
    %v2349 = vmul.f32 %v2346, %v2307
    %v2350 = vmul.f32 %v2346, %v2308
    %2355 = vrot.lane.b32.xlu0 %v2347, 126
    %v2356 = vpop.permute.xlu0 %2355
    %2357 = vrot.lane.b32.xlu0 %v2348, 126
    %v2358 = vpop.permute.xlu0 %2357
    %2359 = vrot.lane.b32.xlu0 %v2349, 126
    %v2360 = vpop.permute.xlu0 %2359
    %2361 = vrot.lane.b32.xlu0 %v2350, 126
    %v2362 = vpop.permute.xlu0 %2361
    %v2367 = vadd.f32 %v2341, %v2356
    %v2368 = vadd.f32 %v2342, %v2358
    %v2369 = vadd.f32 %v2343, %v2360
    %v2370 = vadd.f32 %v2344, %v2362
    %s2371 = sld [smem:[#allocation4 + $0x5e]]
    %v2372 = vstv %s2371
    %v2373 = vmul.f32 %v2372, %v2305
    %v2374 = vmul.f32 %v2372, %v2306
    %v2375 = vmul.f32 %v2372, %v2307
    %v2376 = vmul.f32 %v2372, %v2308
    %2381 = vrot.lane.b32.xlu0 %v2373, 125
    %v2382 = vpop.permute.xlu0 %2381
    %2383 = vrot.lane.b32.xlu0 %v2374, 125
    %v2384 = vpop.permute.xlu0 %2383
    %2385 = vrot.lane.b32.xlu0 %v2375, 125
    %v2386 = vpop.permute.xlu0 %2385
    %2387 = vrot.lane.b32.xlu0 %v2376, 125
    %v2388 = vpop.permute.xlu0 %2387
    %v2393 = vadd.f32 %v2367, %v2382
    %v2394 = vadd.f32 %v2368, %v2384
    %v2395 = vadd.f32 %v2369, %v2386
    %v2396 = vadd.f32 %v2370, %v2388
    %s2397 = sld [smem:[#allocation4 + $0x5f]]
    %v2398 = vstv %s2397
    %v2399 = vmul.f32 %v2398, %v2305
    %v2400 = vmul.f32 %v2398, %v2306
    %v2401 = vmul.f32 %v2398, %v2307
    %v2402 = vmul.f32 %v2398, %v2308
    %2407 = vrot.lane.b32.xlu0 %v2399, 124
    %v2408 = vpop.permute.xlu0 %2407
    %2409 = vrot.lane.b32.xlu0 %v2400, 124
    %v2410 = vpop.permute.xlu0 %2409
    %2411 = vrot.lane.b32.xlu0 %v2401, 124
    %v2412 = vpop.permute.xlu0 %2411
    %2413 = vrot.lane.b32.xlu0 %v2402, 124
    %v2414 = vpop.permute.xlu0 %2413
    %v2419 = vadd.f32 %v2393, %v2408
    %v2420 = vadd.f32 %v2394, %v2410
    %v2421 = vadd.f32 %v2395, %v2412
    %v2422 = vadd.f32 %v2396, %v2414
    %s2423 = sld [smem:[#allocation4 + $0x60]]
    %v2424 = vstv %s2423
    %v2425 = vmul.f32 %v2424, %v2305
    %v2426 = vmul.f32 %v2424, %v2306
    %v2427 = vmul.f32 %v2424, %v2307
    %v2428 = vmul.f32 %v2424, %v2308
    %2433 = vrot.lane.b32.xlu0 %v2425, 123
    %v2434 = vpop.permute.xlu0 %2433
    %2435 = vrot.lane.b32.xlu0 %v2426, 123
    %v2436 = vpop.permute.xlu0 %2435
    %2437 = vrot.lane.b32.xlu0 %v2427, 123
    %v2438 = vpop.permute.xlu0 %2437
    %2439 = vrot.lane.b32.xlu0 %v2428, 123
    %v2440 = vpop.permute.xlu0 %2439
    %v2445 = vadd.f32 %v2419, %v2434
    %v2446 = vadd.f32 %v2420, %v2436
    %v2447 = vadd.f32 %v2421, %v2438
    %v2448 = vadd.f32 %v2422, %v2440
    %s2449 = sld [smem:[#allocation4 + $0x61]]
    %v2450 = vstv %s2449
    %v2451 = vmul.f32 %v2450, %v2305
    %v2452 = vmul.f32 %v2450, %v2306
    %v2453 = vmul.f32 %v2450, %v2307
    %v2454 = vmul.f32 %v2450, %v2308
    %2459 = vrot.lane.b32.xlu0 %v2451, 122
    %v2460 = vpop.permute.xlu0 %2459
    %2461 = vrot.lane.b32.xlu0 %v2452, 122
    %v2462 = vpop.permute.xlu0 %2461
    %2463 = vrot.lane.b32.xlu0 %v2453, 122
    %v2464 = vpop.permute.xlu0 %2463
    %2465 = vrot.lane.b32.xlu0 %v2454, 122
    %v2466 = vpop.permute.xlu0 %2465
    %v2471 = vadd.f32 %v2445, %v2460
    %v2472 = vadd.f32 %v2446, %v2462
    %v2473 = vadd.f32 %v2447, %v2464
    %v2474 = vadd.f32 %v2448, %v2466
    %v2475 = vxor.u32 %v2471, 2147483648
    %v2476 = vxor.u32 %v2472, 2147483648
    %v2477 = vxor.u32 %v2473, 2147483648
    %v2478 = vxor.u32 %v2474, 2147483648
    %v2479 = vmul.f32 %v2475, 1.442695
    %v2480 = vpow.pop %v2479
    %v2481 = vmul.f32 %v2476, 1.442695
    %v2482 = vpow.pop %v2481
    %v2483 = vmul.f32 %v2477, 1.442695
    %v2484 = vpow.pop %v2483
    %v2485 = vmul.f32 %v2478, 1.442695
    %v2486 = vpow.pop %v2485
    %v2487 = vadd.f32 %v2480, 1.0
    %v2488 = vadd.f32 %v2482, 1.0
    %v2489 = vadd.f32 %v2484, 1.0
    %v2490 = vadd.f32 %v2486, 1.0
    %v2491 = vrcp.pop %v2487
    %v2492 = vmul.f32 1.0, %v2491
    %v2493 = vrcp.pop %v2488
    %v2494 = vmul.f32 1.0, %v2493
    %v2495 = vrcp.pop %v2489
    %v2496 = vmul.f32 1.0, %v2495
    %v2497 = vrcp.pop %v2490
    %v2498 = vmul.f32 1.0, %v2497
    %v2499 = vmul.f32 %v2471, %v2492
    %v2500 = vmul.f32 %v2472, %v2494
    %v2501 = vmul.f32 %v2473, %v2496
    %v2502 = vmul.f32 %v2474, %v2498
    %v2503 = vxor.u32 %v2499, 2147483648
    %v2504 = vxor.u32 %v2500, 2147483648
    %v2505 = vxor.u32 %v2501, 2147483648
    %v2506 = vxor.u32 %v2502, 2147483648
    %v2507 = vmul.f32 %v2503, 1.442695
    %v2508 = vpow.pop %v2507
    %v2509 = vmul.f32 %v2504, 1.442695
    %v2510 = vpow.pop %v2509
    %v2511 = vmul.f32 %v2505, 1.442695
    %v2512 = vpow.pop %v2511
    %v2513 = vmul.f32 %v2506, 1.442695
    %v2514 = vpow.pop %v2513
    %v2515 = vadd.f32 %v2508, 1.0
    %v2516 = vadd.f32 %v2510, 1.0
    %v2517 = vadd.f32 %v2512, 1.0
    %v2518 = vadd.f32 %v2514, 1.0
    %v2519 = vrcp.pop %v2515
    %v2520 = vmul.f32 1.0, %v2519
    %v2521 = vrcp.pop %v2516
    %v2522 = vmul.f32 1.0, %v2521
    %v2523 = vrcp.pop %v2517
    %v2524 = vmul.f32 1.0, %v2523
    %v2525 = vrcp.pop %v2518
    %v2526 = vmul.f32 1.0, %v2525
    %vm2527 = vcmask 130048
    %2528 = vst.msk [vmem:[#allocation7] sm:$0xff] %vm2527, %v2520
    %2529 = vst.msk [vmem:[#allocation7 + $0x8] sm:$0xff] %vm2527, %v2522
    %2530 = vst.msk [vmem:[#allocation7 + $0x10] sm:$0xff] %vm2527, %v2524
    %2531 = vst.msk [vmem:[#allocation7 + $0x18] sm:$0xff] %vm2527, %v2526
    // Predicated region
    $region18: #{spatial_attention_module.3} parent=1 // pred_check
      _
    $region19: #{spatial_attention_module.3} parent=1 // pred_check_branch
      %2533 = sbr.rel (0) target = $region21
    $region20: #{spatial_attention_module.3} parent=1 // pred_region
      %s2535 = ssub.s32 512, 512
      %2536 = vsyncadd [#allocation5], %s2535
      %s2537 = sshll.u32 [#allocation7], 4
      %s2538 = int_to_ptr.vmem [resolvable:$true] %s2537
      %2543 = dma.vmem_to_hbm [thread:$0]  %s2538, 512, %s3, [#allocation5], 128, 128, 8
    $region21: #{spatial_attention_module.3} parent=1 // pred_fallthru
      _
    // Predicated region
    $region22: #{spatial_attention_module.3} parent=1 // pred_check
      _
    $region23: #{spatial_attention_module.3} parent=1 // pred_check_branch
      %2545 = sbr.rel (0) target = $region25
    $region24: #{spatial_attention_module.3} parent=1 // pred_region
      %2546 = dma.done [#allocation5], 512
    $region25: #{spatial_attention_module.3} parent=1 // pred_fallthru
      _
    %2547 = vsyncpa [#allocation5], 1
    %2548 = vsyncpa [#allocation6], 1

</llo_original>
